<compile_context>
chip_gen: v6e
topology: v6e:2x2x1
jax: 0.10.0
libtpu: 0.0.40
codegen_flags: <defaults>
</compile_context>

<pallas_src>
import functools

import jax
import jax.numpy as jnp
from jax import lax
from jax.experimental import pallas as pl
from jax.experimental.pallas import tpu as pltpu


# ----------------------------------------------------------------------------
# helpers
# ----------------------------------------------------------------------------
def _round_up(n, m):
    return ((n + m - 1) // m) * m


def _is_big_vmem_chip():
    # v5e / v6e have 128 MiB VMEM -> larger scoped limit + bigger row tiles.
    # v7x (64 MiB) and unrecognized chips keep the conservative defaults.
    try:
        kind = jax.devices()[0].device_kind.lower()
    except Exception:
        kind = ""
    return ("v5" in kind) or ("v6" in kind)


_BIG_VMEM = _is_big_vmem_chip()
_VMEM_LIMIT = (64 if _BIG_VMEM else 32) * 1024 * 1024
_ROW_TILE_CAP = 1024 if _BIG_VMEM else 512


def _row_tile(n, cap):
    # multiple of 8 (sublane granularity), capped to bound the VMEM block
    return min(cap, _round_up(n, 8))


def _cp(n_axes):
    return pltpu.CompilerParams(
        dimension_semantics=("parallel",) * n_axes,
        vmem_limit_bytes=_VMEM_LIMIT,
    )


def _bf16(x):
    return x.astype(jnp.bfloat16)


def _wspec(shape):
    # resident weight: constant index map + single buffer (no double buffering)
    nd = len(shape)
    return pl.BlockSpec(shape, lambda *_: (0,) * nd,
                        pipeline_mode=pl.Buffered(1))


# ----------------------------------------------------------------------------
# char CNN: width-wise conv (valid) + relu + max-pool over positions
# ----------------------------------------------------------------------------
def _char_conv_kernel(x_ref, w_ref, b_ref, o_ref, *, p_out, dco):
    # One MXU matmul against a block-diagonal weight covers every conv
    # position; max-pool over positions is a lane-slice max (relu + bias are
    # monotone / constant across positions, so they commute with the max).
    y = jnp.dot(_bf16(x_ref[...]), w_ref[...],
                preferred_element_type=jnp.float32)          # (tile, P*dco)
    m = y[:, 0:dco]
    for p in range(1, p_out):
        m = jnp.maximum(m, y[:, p * dco:(p + 1) * dco])
    o_ref[...] = jnp.maximum(m + b_ref[...], 0.0)


def char_conv(x, w, b):
    # x: (N, W, dc), w: (kw, dc, dco), b: (1, dco)
    n, width, dc = x.shape
    kw, _, dco = w.shape
    p_out = width - kw + 1
    x2 = x.reshape(n, width * dc)                            # free reshape
    # block-diagonal weight: one weight push per tile instead of p_out pushes
    w_flat = w.reshape(kw * dc, dco)
    wbig = jnp.zeros((width * dc, p_out * dco), w.dtype)
    for p in range(p_out):
        wbig = wbig.at[p * dc:p * dc + kw * dc,
                       p * dco:(p + 1) * dco].set(w_flat)
    wbig = _bf16(wbig)

    tile = _row_tile(n, _ROW_TILE_CAP)
    n_pad = _round_up(n, tile)
    if n_pad != n:
        x2 = jnp.pad(x2, ((0, n_pad - n), (0, 0)))

    out = pl.pallas_call(
        functools.partial(_char_conv_kernel, p_out=p_out, dco=dco),
        out_shape=jax.ShapeDtypeStruct((n_pad, dco), jnp.float32),
        grid=(n_pad // tile,),
        in_specs=[
            pl.BlockSpec((tile, width * dc), lambda i: (i, 0)),
            _wspec((width * dc, p_out * dco)),
            _wspec((1, dco)),
        ],
        out_specs=pl.BlockSpec((tile, dco), lambda i: (i, 0)),
        compiler_params=_cp(1),
    )(x2, wbig, b)
    return out[:n]


# ----------------------------------------------------------------------------
# fused highway net + pre-encoder projection (tanh)
# ----------------------------------------------------------------------------
def _highway_pre_kernel(co_ref, we_ref, whg_ref, bhg_ref, pw_ref, pb_ref,
                        o_ref, *, n_layers, dhw):
    # lane-concat char-CNN features with word embeddings inside VMEM
    # (the concatenated activation never round-trips HBM)
    x = jnp.concatenate([co_ref[...], we_ref[...]], axis=-1)   # (tile, dhw)
    for l in range(n_layers):
        # single fused [Wh | Wg] matmul per layer
        z = jnp.dot(_bf16(x), whg_ref[l],
                    preferred_element_type=jnp.float32) + bhg_ref[l]
        h = jnp.maximum(z[:, :dhw], 0.0)
        g = jax.nn.sigmoid(z[:, dhw:])
        x = g * h + (1.0 - g) * x
    # TODO(synk): reference `pre_encoder` is an undefined (presumably BiLSTM)
    # attribute of the module; substituted by a dense+tanh projection.
    y = jnp.dot(_bf16(x), pw_ref[...], preferred_element_type=jnp.float32)
    o_ref[...] = jnp.tanh(y + pb_ref[...])


def highway_pre(co, we, wh, bh, wg, bg, pw, pb):
    n, dco = co.shape
    de = we.shape[1]
    dhw = dco + de
    nl = wh.shape[0]
    d2 = pw.shape[1]
    whg = _bf16(jnp.concatenate([wh, wg], axis=-1))          # (nl, dhw, 2*dhw)
    bhg = jnp.concatenate([bh, bg], axis=-1)                 # (nl, 1, 2*dhw)

    tile = _row_tile(n, _ROW_TILE_CAP)
    n_pad = _round_up(n, tile)
    if n_pad != n:
        pad = ((0, n_pad - n), (0, 0))
        co = jnp.pad(co, pad)
        we = jnp.pad(we, pad)

    out = pl.pallas_call(
        functools.partial(_highway_pre_kernel, n_layers=nl, dhw=dhw),
        out_shape=jax.ShapeDtypeStruct((n_pad, d2), jnp.float32),
        grid=(n_pad // tile,),
        in_specs=[
            pl.BlockSpec((tile, dco), lambda i: (i, 0)),
            pl.BlockSpec((tile, de), lambda i: (i, 0)),
            _wspec((nl, dhw, 2 * dhw)),
            _wspec((nl, 1, 2 * dhw)),
            _wspec((dhw, d2)),
            _wspec((1, d2)),
        ],
        out_specs=pl.BlockSpec((tile, d2), lambda i: (i, 0)),
        compiler_params=_cp(1),
    )(co, we, whg, bhg, _bf16(pw), pb)
    return out[:n]


# ----------------------------------------------------------------------------
# fully fused per-batch kernel:
#   BiDAF attention -> start encoder -> start logits/softmax3d/softsel ->
#   end encoder -> end logits/softmax3d
# ----------------------------------------------------------------------------
def _attend_encode_kernel(h_ref, u_ref, tm_ref, qm_ref, su_ref,
                          w1_ref, w3_ref, ab_ref,
                          se0w_ref, se0b_ref, se1w_ref, se1b_ref,
                          lsw_ref, lsb_ref,
                          eew_ref, eeb_ref, lew_ref, leb_ref,
                          start_ref, end_ref):
    f32 = jnp.float32
    h = h_ref[0]                    # (T, d2)
    u = u_ref[0]                    # (JQ, d2)
    tm = tm_ref[0]                  # (T, 1)
    qm = qm_ref[0]                  # (1, JQ)
    su = su_ref[0]                  # (1, JQ)  precomputed <w2, u>

    # --- trilinear similarity s = <w1,h> + <w2,u> + <w3, h*u> + b ---
    s_hu = lax.dot_general(_bf16(h * w3_ref[...]), _bf16(u),
                           (((1,), (1,)), ((), ())),
                           preferred_element_type=f32)                 # (T,JQ)
    s_h = jnp.sum(h * w1_ref[...], axis=-1, keepdims=True)             # (T,1)
    s = s_hu + s_h + su + ab_ref[...]

    # --- context -> query attention (approx recip: internal softmax only) ---
    s_q = s + (qm - 1.0) * 1e9
    mx = jnp.max(s_q, axis=-1, keepdims=True)
    e = jnp.exp(s_q - mx)
    p_j = e * pl.reciprocal(jnp.sum(e, axis=-1, keepdims=True), approx=True)
    ut = jnp.dot(_bf16(p_j), _bf16(u), preferred_element_type=f32)     # (T,d2)

    # --- query -> context attention (reuse row max) ---
    m_t = mx + (tm - 1.0) * 1e9
    mx_t = jnp.max(m_t, axis=0, keepdims=True)
    e_t = jnp.exp(m_t - mx_t)
    p_t = e_t * pl.reciprocal(jnp.sum(e_t, axis=0, keepdims=True), approx=True)
    hh = h * jnp.sum(h * p_t, axis=0, keepdims=True)                   # (T,d2)

    # --- G = [h, u~, h*u~, h*h_att]; start encoder as ONE stacked matmul ---
    # TODO(synk): start_encoder0/1 are undefined BiLSTMs in the reference
    # __init__; substituted by two fused dense+tanh projections.
    g4 = jnp.concatenate([h, ut, h * ut, hh], axis=-1)                 # (T,4d2)
    e0 = jnp.tanh(jnp.dot(_bf16(g4), se0w_ref[...],
                          preferred_element_type=f32) + se0b_ref[...])
    enc_s = jnp.tanh(jnp.dot(_bf16(e0), se1w_ref[...],
                             preferred_element_type=f32) + se1b_ref[...])

    # --- start logits (TFLinear over [enc, G]) + softmax3d + softsel ---
    g5s = jnp.concatenate([enc_s, g4], axis=-1)                        # (T,5d2)
    ls = jnp.sum(g5s * lsw_ref[...], axis=-1, keepdims=True) + lsb_ref[...]
    ls = ls + (tm - 1.0) * 1e9
    es = jnp.exp(ls - jnp.max(ls, axis=0, keepdims=True))
    ps = es / jnp.sum(es, axis=0, keepdims=True)           # exact softmax (T,1)
    a1 = jnp.sum(enc_s * ps, axis=0, keepdims=True)        # softsel (1, d2)
    start_ref[0] = jnp.transpose(ps)                       # lane-dense (1, T)

    # --- end encoder over span [G, enc_s, a1, enc_s*a1] (one stacked matmul;
    #     span / broadcast-a1 never leave VMEM) ---
    # TODO(synk): end_encoder is an undefined BiLSTM in the reference __init__;
    # substituted by a dense+tanh projection over the span features.
    a1b = jnp.broadcast_to(a1, enc_s.shape)
    span = jnp.concatenate([g4, enc_s, a1b, enc_s * a1], axis=-1)      # (T,7d2)
    enc_e = jnp.tanh(jnp.dot(_bf16(span), eew_ref[...],
                             preferred_element_type=f32) + eeb_ref[...])

    # --- end logits + softmax3d ---
    g5e = jnp.concatenate([enc_e, g4], axis=-1)
    le = jnp.sum(g5e * lew_ref[...], axis=-1, keepdims=True) + leb_ref[...]
    le = le + (tm - 1.0) * 1e9
    ex = jnp.exp(le - jnp.max(le, axis=0, keepdims=True))
    pe = ex / jnp.sum(ex, axis=0, keepdims=True)
    end_ref[0] = jnp.transpose(pe)                         # lane-dense (1, T)


def attend_encode(h, u, tmask, qmask, p):
    bsz, t, d2 = h.shape
    jq = u.shape[1]
    # precompute <w2, u> per batch in the wrapper (avoids a 1-row MXU matmul)
    s_u = jnp.einsum("bjd,d->bj", u, p["att_w2"][0]).reshape(bsz, 1, jq)

    se0w = _bf16(p["se0_w"])
    se1w = _bf16(p["se1_w"])
    eew = _bf16(p["ee_w"])
    lsw = jnp.transpose(p["lin_s_w"])        # (1, 5*d2)
    lew = jnp.transpose(p["lin_e_w"])        # (1, 5*d2)

    data_specs = [
        pl.BlockSpec((1, t, d2), lambda i: (i, 0, 0)),
        pl.BlockSpec((1, jq, d2), lambda i: (i, 0, 0)),
        pl.BlockSpec((1, t, 1), lambda i: (i, 0, 0)),
        pl.BlockSpec((1, 1, jq), lambda i: (i, 0, 0)),
        pl.BlockSpec((1, 1, jq), lambda i: (i, 0, 0)),
    ]
    w_specs = [
        _wspec((1, d2)), _wspec((1, d2)), _wspec((1, 1)),
        _wspec((4 * d2, d2)), _wspec((1, d2)),
        _wspec((d2, d2)), _wspec((1, d2)),
        _wspec((1, 5 * d2)), _wspec((1, 1)),
        _wspec((7 * d2, d2)), _wspec((1, d2)),
        _wspec((1, 5 * d2)), _wspec((1, 1)),
    ]
    start_p, end_p = pl.pallas_call(
        _attend_encode_kernel,
        out_shape=(jax.ShapeDtypeStruct((bsz, 1, t), jnp.float32),
                   jax.ShapeDtypeStruct((bsz, 1, t), jnp.float32)),
        grid=(bsz,),
        in_specs=data_specs + w_specs,
        out_specs=(pl.BlockSpec((1, 1, t), lambda i: (i, 0, 0)),
                   pl.BlockSpec((1, 1, t), lambda i: (i, 0, 0))),
        compiler_params=_cp(1),
    )(h, u, tmask, qmask, s_u,
      p["att_w1"], p["att_w3"], p["att_b"],
      se0w, p["se0_b"], se1w, p["se1_b"],
      lsw, p["lin_s_b"],
      eew, p["ee_b"], lew, p["lin_e_b"])
    return start_p, end_p


# ----------------------------------------------------------------------------
# model glue (plain JAX: embedding gathers, reshapes, row concats)
# ----------------------------------------------------------------------------
def bidaf_forward(p, ctext, text, text_mask, cquery, query, query_mask, cfg):
    B = cfg["batch_size"]; M = cfg["max_num_sents"]; JX = cfg["max_sent_size"]
    JQ = cfg["max_ques_size"]; W = cfg["max_word_size"]
    T = M * JX
    d2 = 2 * cfg["d_hidden"]
    dc = cfg["d_char_embed"]

    # fixed embeddings (gather = plain-JAX glue)
    ce_t = jnp.take(p["char_table"], ctext, axis=0).reshape(B * T, W, dc)
    ce_q = jnp.take(p["char_table"], cquery, axis=0).reshape(B * JQ, W, dc)
    we_t = jnp.take(p["word_table"], text, axis=0).reshape(B * T, -1)
    we_q = jnp.take(p["word_table"], query, axis=0).reshape(B * JQ, -1)

    # shared char-CNN over text + query rows in ONE call
    co = char_conv(jnp.concatenate([ce_t, ce_q], axis=0),
                   p["conv_w"], p["conv_b"])                 # (B*T+B*JQ, dco)
    we = jnp.concatenate([we_t, we_q], axis=0)               # (rows, de)

    # shared highway net fused with pre-encoder projection in ONE call;
    # char / word features are lane-concatenated inside the kernel.
    hu = highway_pre(co, we, p["hw_wh"], p["hw_bh"], p["hw_wg"], p["hw_bg"],
                     p["pre_w"], p["pre_b"])                 # (rows, d2)
    h = hu[:B * T].reshape(B, T, d2)
    u = hu[B * T:].reshape(B, JQ, d2)

    tmask_f = text_mask.reshape(B, T, 1).astype(jnp.float32)
    qmask_f = query_mask.reshape(B, 1, JQ).astype(jnp.float32)

    # single fused per-batch kernel: attention -> start enc -> start
    # logits/softmax/softsel -> end enc -> end logits/softmax
    start_p, end_p = attend_encode(h, u, tmask_f, qmask_f, p)
    return start_p.reshape(B, M, JX), end_p.reshape(B, M, JX)


def init_params(key, cfg):
    dc, de = cfg["d_char_embed"], cfg["d_embed"]
    dco, kw = cfg["d_char_out"], cfg["char_kernel_width"]
    dhw = dco + de
    d2 = 2 * cfg["d_hidden"]
    nl = cfg["n_hway_layers"]
    ks = jax.random.split(key, 16)

    def rnd(k, shape):
        return (0.1 * jax.random.normal(k, shape)).astype(jnp.float32)

    return dict(
        char_table=rnd(ks[0], (cfg["char_vocab_size"], dc)),
        word_table=rnd(ks[1], (cfg["word_vocab_size"], de)),
        conv_w=rnd(ks[2], (kw, dc, dco)),
        conv_b=jnp.zeros((1, dco), jnp.float32),
        hw_wh=rnd(ks[3], (nl, dhw, dhw)),
        hw_bh=jnp.zeros((nl, 1, dhw), jnp.float32),
        hw_wg=rnd(ks[4], (nl, dhw, dhw)),
        hw_bg=jnp.zeros((nl, 1, dhw), jnp.float32),
        pre_w=rnd(ks[5], (dhw, d2)),
        pre_b=jnp.zeros((1, d2), jnp.float32),
        att_w1=rnd(ks[6], (1, d2)),
        att_w2=rnd(ks[7], (1, d2)),
        att_w3=rnd(ks[8], (1, d2)),
        att_b=jnp.zeros((1, 1), jnp.float32),
        se0_w=rnd(ks[9], (4 * d2, d2)),
        se0_b=jnp.zeros((1, d2), jnp.float32),
        se1_w=rnd(ks[10], (d2, d2)),
        se1_b=jnp.zeros((1, d2), jnp.float32),
        lin_s_w=rnd(ks[11], (5 * d2, 1)),
        lin_s_b=jnp.zeros((1, 1), jnp.float32),
        ee_w=rnd(ks[12], (7 * d2, d2)),
        ee_b=jnp.zeros((1, d2), jnp.float32),
        lin_e_w=rnd(ks[13], (5 * d2, 1)),
        lin_e_b=jnp.zeros((1, 1), jnp.float32),
    )


if __name__ == "__main__":
    # lane-aligned small config (d2 = dco = de = 128, dhw = 256) so lane
    # concats / slices hit aligned offsets on the VPU.
    cfg = dict(batch_size=2, d_hidden=64, max_num_sents=2, max_sent_size=8,
               max_ques_size=8, max_word_size=4, word_vocab_size=50,
               char_vocab_size=30, d_char_embed=8, d_embed=128, d_char_out=128,
               n_hway_layers=2, char_kernel_width=3)
    B, M, JX = cfg["batch_size"], cfg["max_num_sents"], cfg["max_sent_size"]
    JQ, W = cfg["max_ques_size"], cfg["max_word_size"]

    key = jax.random.PRNGKey(0)
    k0, k1, k2, k3, kp = jax.random.split(key, 5)

    ctext = jax.random.randint(k0, (B, M, JX, W), 0, cfg["char_vocab_size"], jnp.int32)
    text = jax.random.randint(k1, (B, M, JX), 0, cfg["word_vocab_size"], jnp.int32)
    cquery = jax.random.randint(k2, (B, JQ, W), 0, cfg["char_vocab_size"], jnp.int32)
    query = jax.random.randint(k3, (B, JQ), 0, cfg["word_vocab_size"], jnp.int32)

    text_lens = jnp.array([[8, 5], [6, 3]], jnp.int32)                 # (B, M)
    text_mask = (jnp.arange(JX)[None, None, :] < text_lens[:, :, None])
    query_lens = jnp.array([8, 4], jnp.int32)                          # (B,)
    query_mask = (jnp.arange(JQ)[None, :] < query_lens[:, None])

    params = init_params(kp, cfg)

    fwd = jax.jit(lambda p, a, b, c, d, e, f: bidaf_forward(p, a, b, c, d, e, f, cfg))
    start, end = fwd(params, ctext, text, text_mask, cquery, query, query_mask)
    jax.block_until_ready((start, end))

    assert start.shape == (B, M, JX) and end.shape == (B, M, JX)
    assert bool(jnp.all(jnp.isfinite(start))) and bool(jnp.all(jnp.isfinite(end)))
    # softmax3d: probabilities over flattened (M*JX) sum to 1 per batch
    assert bool(jnp.allclose(start.reshape(B, -1).sum(-1), 1.0, atol=1e-4))
    assert bool(jnp.allclose(end.reshape(B, -1).sum(-1), 1.0, atol=1e-4))
    print("KERNEL_OK")
</pallas_src>

<mosaic_0001>
module attributes {stable_mosaic.version = 11 : i64} {
  func.func @_char_conv_kernel(%arg0: i32, %arg1: memref<48x32xf32, #tpu.memory_space<vmem>>, %arg2: memref<32x256xbf16, #tpu.memory_space<vmem>>, %arg3: memref<1x128xf32, #tpu.memory_space<vmem>>, %arg4: memref<48x128xf32, #tpu.memory_space<vmem>>) attributes {dimension_semantics = [#tpu.dimension_semantics<parallel>], iteration_bounds = array<i64: 1>, scalar_prefetch = 0 : i64, scratch_operands = 0 : i64, tpu.core_type = #tpu.core_type<tc>, window_params = [{transform_indices = @transform_0, window_bounds = array<i64: 48, 32>}, {pipeline_mode = #tpu.pipeline_mode<synchronous>, transform_indices = @transform_1, window_bounds = array<i64: 32, 256>}, {pipeline_mode = #tpu.pipeline_mode<synchronous>, transform_indices = @transform_2, window_bounds = array<i64: 1, 128>}, {transform_indices = @transform_3, window_bounds = array<i64: 48, 128>}]} {
    %c0 = arith.constant 0 : index
    %c0_0 = arith.constant 0 : index
    %0 = vector.load %arg1[%c0, %c0_0] : memref<48x32xf32, #tpu.memory_space<vmem>>, vector<48x32xf32>
    %1 = arith.truncf %0 : vector<48x32xf32> to vector<48x32xbf16>
    %c0_1 = arith.constant 0 : index
    %c0_2 = arith.constant 0 : index
    %2 = vector.load %arg2[%c0_1, %c0_2] : memref<32x256xbf16, #tpu.memory_space<vmem>>, vector<32x256xbf16>
    %cst = arith.constant dense<0.000000e+00> : vector<48x256xf32>
    %3 = tpu.matmul %1, %2, %cst {dimension_numbers = #tpu.dot_dimension_numbers<[1], [0], [0], [1], [0, 0, 1, 1], [], []>} : vector<48x32xbf16>, vector<32x256xbf16>, vector<48x256xf32> -> vector<48x256xf32>
    %4 = vector.extract_strided_slice %3 {offsets = [0, 0], sizes = [48, 128], strides = [1, 1]} : vector<48x256xf32> to vector<48x128xf32>
    %5 = vector.extract_strided_slice %3 {offsets = [0, 128], sizes = [48, 128], strides = [1, 1]} : vector<48x256xf32> to vector<48x128xf32>
    %6 = arith.maximumf %4, %5 : vector<48x128xf32>
    %c0_3 = arith.constant 0 : index
    %c0_4 = arith.constant 0 : index
    %7 = vector.load %arg3[%c0_3, %c0_4] : memref<1x128xf32, #tpu.memory_space<vmem>>, vector<1x128xf32>
    %8 = vector.broadcast %7 : vector<1x128xf32> to vector<48x128xf32>
    %9 = arith.addf %6, %8 : vector<48x128xf32>
    %cst_5 = arith.constant 0.000000e+00 : f32
    %10 = vector.broadcast %cst_5 : f32 to vector<48x128xf32>
    %11 = arith.maximumf %9, %10 : vector<48x128xf32>
    %c0_6 = arith.constant 0 : index
    %c0_7 = arith.constant 0 : index
    %12 = vector.load %arg4[%c0_6, %c0_7] : memref<48x128xf32, #tpu.memory_space<vmem>>, vector<48x128xf32>
    tpu.vector_store %arg4[%c0_6, %c0_7], %11 {strides = array<i32>} : memref<48x128xf32, #tpu.memory_space<vmem>>, vector<48x128xf32>,
    return
  }
  func.func @transform_0(%arg0: i32) -> (i32, i32) {
    %c0_i32 = arith.constant 0 : i32
    %c0_i32_0 = arith.constant 0 : i32
    return %arg0, %c0_i32 : i32, i32
  }
  func.func @transform_1(%arg0: i32) -> (i32, i32) {
    %c0_i32 = arith.constant 0 : i32
    %c0_i32_0 = arith.constant 0 : i32
    %c0_i32_1 = arith.constant 0 : i32
    return %c0_i32, %c0_i32_0 : i32, i32
  }
  func.func @transform_2(%arg0: i32) -> (i32, i32) {
    %c0_i32 = arith.constant 0 : i32
    %c0_i32_0 = arith.constant 0 : i32
    %c0_i32_1 = arith.constant 0 : i32
    return %c0_i32, %c0_i32_0 : i32, i32
  }
  func.func @transform_3(%arg0: i32) -> (i32, i32) {
    %c0_i32 = arith.constant 0 : i32
    %c0_i32_0 = arith.constant 0 : i32
    return %arg0, %c0_i32 : i32, i32
  }
}

module attributes {stable_mosaic.version = 11 : i64} {
  func.func @_highway_pre_kernel(%arg0: i32, %arg1: memref<48x128xf32, #tpu.memory_space<vmem>>, %arg2: memref<48x128xf32, #tpu.memory_space<vmem>>, %arg3: memref<2x256x512xbf16, #tpu.memory_space<vmem>>, %arg4: memref<2x1x512xf32, #tpu.memory_space<vmem>>, %arg5: memref<256x128xbf16, #tpu.memory_space<vmem>>, %arg6: memref<1x128xf32, #tpu.memory_space<vmem>>, %arg7: memref<48x128xf32, #tpu.memory_space<vmem>>) attributes {dimension_semantics = [#tpu.dimension_semantics<parallel>], iteration_bounds = array<i64: 1>, scalar_prefetch = 0 : i64, scratch_operands = 0 : i64, tpu.core_type = #tpu.core_type<tc>, window_params = [{transform_indices = @transform_0, window_bounds = array<i64: 48, 128>}, {transform_indices = @transform_1, window_bounds = array<i64: 48, 128>}, {pipeline_mode = #tpu.pipeline_mode<synchronous>, transform_indices = @transform_2, window_bounds = array<i64: 2, 256, 512>}, {pipeline_mode = #tpu.pipeline_mode<synchronous>, transform_indices = @transform_3, window_bounds = array<i64: 2, 1, 512>}, {pipeline_mode = #tpu.pipeline_mode<synchronous>, transform_indices = @transform_4, window_bounds = array<i64: 256, 128>}, {pipeline_mode = #tpu.pipeline_mode<synchronous>, transform_indices = @transform_5, window_bounds = array<i64: 1, 128>}, {transform_indices = @transform_6, window_bounds = array<i64: 48, 128>}]} {
    %c0 = arith.constant 0 : index
    %c0_0 = arith.constant 0 : index
    %0 = vector.load %arg1[%c0, %c0_0] : memref<48x128xf32, #tpu.memory_space<vmem>>, vector<48x128xf32>
    %c0_1 = arith.constant 0 : index
    %c0_2 = arith.constant 0 : index
    %1 = vector.load %arg2[%c0_1, %c0_2] : memref<48x128xf32, #tpu.memory_space<vmem>>, vector<48x128xf32>
    %2 = tpu.concatenate %0, %1 in 1 : vector<48x128xf32>, vector<48x128xf32> -> vector<48x256xf32>
    %3 = arith.truncf %2 : vector<48x256xf32> to vector<48x256xbf16>
    %c0_3 = arith.constant 0 : index
    %c0_4 = arith.constant 0 : index
    %c0_5 = arith.constant 0 : index
    %4 = vector.load %arg3[%c0_3, %c0_4, %c0_5] : memref<2x256x512xbf16, #tpu.memory_space<vmem>>, vector<1x256x512xbf16>
    %5 = vector.shape_cast %4 : vector<1x256x512xbf16> to vector<256x512xbf16>
    %cst = arith.constant dense<0.000000e+00> : vector<48x512xf32>
    %6 = tpu.matmul %3, %5, %cst {dimension_numbers = #tpu.dot_dimension_numbers<[1], [0], [0], [1], [0, 0, 1, 1], [], []>} : vector<48x256xbf16>, vector<256x512xbf16>, vector<48x512xf32> -> vector<48x512xf32>
    %c0_6 = arith.constant 0 : index
    %c0_7 = arith.constant 0 : index
    %c0_8 = arith.constant 0 : index
    %7 = vector.load %arg4[%c0_6, %c0_7, %c0_8] : memref<2x1x512xf32, #tpu.memory_space<vmem>>, vector<1x1x512xf32>
    %8 = vector.shape_cast %7 : vector<1x1x512xf32> to vector<1x512xf32>
    %9 = vector.broadcast %8 : vector<1x512xf32> to vector<48x512xf32>
    %10 = arith.addf %6, %9 : vector<48x512xf32>
    %11 = vector.extract_strided_slice %10 {offsets = [0, 0], sizes = [48, 256], strides = [1, 1]} : vector<48x512xf32> to vector<48x256xf32>
    %cst_9 = arith.constant 0.000000e+00 : f32
    %12 = vector.broadcast %cst_9 : f32 to vector<48x256xf32>
    %13 = arith.maximumf %11, %12 : vector<48x256xf32>
    %14 = vector.extract_strided_slice %10 {offsets = [0, 256], sizes = [48, 256], strides = [1, 1]} : vector<48x512xf32> to vector<48x256xf32>
    %15 = arith.negf %14 : vector<48x256xf32>
    %16 = math.exp %15 : vector<48x256xf32>
    %cst_10 = arith.constant 1.000000e+00 : f32
    %17 = vector.broadcast %cst_10 : f32 to vector<48x256xf32>
    %18 = arith.addf %17, %16 : vector<48x256xf32>
    %19 = arith.divf %17, %18 : vector<48x256xf32>
    %20 = arith.mulf %19, %13 : vector<48x256xf32>
    %cst_11 = arith.constant 1.000000e+00 : f32
    %21 = vector.broadcast %cst_11 : f32 to vector<48x256xf32>
    %22 = arith.subf %21, %19 : vector<48x256xf32>
    %23 = arith.mulf %22, %2 : vector<48x256xf32>
    %24 = arith.addf %20, %23 : vector<48x256xf32>
    %25 = arith.truncf %24 : vector<48x256xf32> to vector<48x256xbf16>
    %c1 = arith.constant 1 : index
    %c0_12 = arith.constant 0 : index
    %c0_13 = arith.constant 0 : index
    %26 = vector.load %arg3[%c1, %c0_12, %c0_13] : memref<2x256x512xbf16, #tpu.memory_space<vmem>>, vector<1x256x512xbf16>
    %27 = vector.shape_cast %26 : vector<1x256x512xbf16> to vector<256x512xbf16>
    %cst_14 = arith.constant dense<0.000000e+00> : vector<48x512xf32>
    %28 = tpu.matmul %25, %27, %cst_14 {dimension_numbers = #tpu.dot_dimension_numbers<[1], [0], [0], [1], [0, 0, 1, 1], [], []>} : vector<48x256xbf16>, vector<256x512xbf16>, vector<48x512xf32> -> vector<48x512xf32>
    %c1_15 = arith.constant 1 : index
    %c0_16 = arith.constant 0 : index
    %c0_17 = arith.constant 0 : index
    %29 = vector.load %arg4[%c1_15, %c0_16, %c0_17] : memref<2x1x512xf32, #tpu.memory_space<vmem>>, vector<1x1x512xf32>
    %30 = vector.shape_cast %29 : vector<1x1x512xf32> to vector<1x512xf32>
    %31 = vector.broadcast %30 : vector<1x512xf32> to vector<48x512xf32>
    %32 = arith.addf %28, %31 : vector<48x512xf32>
    %33 = vector.extract_strided_slice %32 {offsets = [0, 0], sizes = [48, 256], strides = [1, 1]} : vector<48x512xf32> to vector<48x256xf32>
    %cst_18 = arith.constant 0.000000e+00 : f32
    %34 = vector.broadcast %cst_18 : f32 to vector<48x256xf32>
    %35 = arith.maximumf %33, %34 : vector<48x256xf32>
    %36 = vector.extract_strided_slice %32 {offsets = [0, 256], sizes = [48, 256], strides = [1, 1]} : vector<48x512xf32> to vector<48x256xf32>
    %37 = arith.negf %36 : vector<48x256xf32>
    %38 = math.exp %37 : vector<48x256xf32>
    %cst_19 = arith.constant 1.000000e+00 : f32
    %39 = vector.broadcast %cst_19 : f32 to vector<48x256xf32>
    %40 = arith.addf %39, %38 : vector<48x256xf32>
    %41 = arith.divf %39, %40 : vector<48x256xf32>
    %42 = arith.mulf %41, %35 : vector<48x256xf32>
    %cst_20 = arith.constant 1.000000e+00 : f32
    %43 = vector.broadcast %cst_20 : f32 to vector<48x256xf32>
    %44 = arith.subf %43, %41 : vector<48x256xf32>
    %45 = arith.mulf %44, %24 : vector<48x256xf32>
    %46 = arith.addf %42, %45 : vector<48x256xf32>
    %47 = arith.truncf %46 : vector<48x256xf32> to vector<48x256xbf16>
    %c0_21 = arith.constant 0 : index
    %c0_22 = arith.constant 0 : index
    %48 = vector.load %arg5[%c0_21, %c0_22] : memref<256x128xbf16, #tpu.memory_space<vmem>>, vector<256x128xbf16>
    %cst_23 = arith.constant dense<0.000000e+00> : vector<48x128xf32>
    %49 = tpu.matmul %47, %48, %cst_23 {dimension_numbers = #tpu.dot_dimension_numbers<[1], [0], [0], [1], [0, 0, 1, 1], [], []>} : vector<48x256xbf16>, vector<256x128xbf16>, vector<48x128xf32> -> vector<48x128xf32>
    %c0_24 = arith.constant 0 : index
    %c0_25 = arith.constant 0 : index
    %50 = vector.load %arg6[%c0_24, %c0_25] : memref<1x128xf32, #tpu.memory_space<vmem>>, vector<1x128xf32>
    %51 = vector.broadcast %50 : vector<1x128xf32> to vector<48x128xf32>
    %52 = arith.addf %49, %51 : vector<48x128xf32>
    %53 = math.tanh %52 : vector<48x128xf32>
    %c0_26 = arith.constant 0 : index
    %c0_27 = arith.constant 0 : index
    %54 = vector.load %arg7[%c0_26, %c0_27] : memref<48x128xf32, #tpu.memory_space<vmem>>, vector<48x128xf32>
    tpu.vector_store %arg7[%c0_26, %c0_27], %53 {strides = array<i32>} : memref<48x128xf32, #tpu.memory_space<vmem>>, vector<48x128xf32>,
    return
  }
  func.func @transform_0(%arg0: i32) -> (i32, i32) {
    %c0_i32 = arith.constant 0 : i32
    %c0_i32_0 = arith.constant 0 : i32
    return %arg0, %c0_i32 : i32, i32
  }
  func.func @transform_1(%arg0: i32) -> (i32, i32) {
    %c0_i32 = arith.constant 0 : i32
    %c0_i32_0 = arith.constant 0 : i32
    return %arg0, %c0_i32 : i32, i32
  }
  func.func @transform_2(%arg0: i32) -> (i32, i32, i32) {
    %c0_i32 = arith.constant 0 : i32
    %c0_i32_0 = arith.constant 0 : i32
    %c0_i32_1 = arith.constant 0 : i32
    %c0_i32_2 = arith.constant 0 : i32
    return %c0_i32, %c0_i32_0, %c0_i32_1 : i32, i32, i32
  }
  func.func @transform_3(%arg0: i32) -> (i32, i32, i32) {
    %c0_i32 = arith.constant 0 : i32
    %c0_i32_0 = arith.constant 0 : i32
    %c0_i32_1 = arith.constant 0 : i32
    %c0_i32_2 = arith.constant 0 : i32
    return %c0_i32, %c0_i32_0, %c0_i32_1 : i32, i32, i32
  }
  func.func @transform_4(%arg0: i32) -> (i32, i32) {
    %c0_i32 = arith.constant 0 : i32
    %c0_i32_0 = arith.constant 0 : i32
    %c0_i32_1 = arith.constant 0 : i32
    return %c0_i32, %c0_i32_0 : i32, i32
  }
  func.func @transform_5(%arg0: i32) -> (i32, i32) {
    %c0_i32 = arith.constant 0 : i32
    %c0_i32_0 = arith.constant 0 : i32
    %c0_i32_1 = arith.constant 0 : i32
    return %c0_i32, %c0_i32_0 : i32, i32
  }
  func.func @transform_6(%arg0: i32) -> (i32, i32) {
    %c0_i32 = arith.constant 0 : i32
    %c0_i32_0 = arith.constant 0 : i32
    return %arg0, %c0_i32 : i32, i32
  }
}

module attributes {stable_mosaic.version = 11 : i64} {
  func.func @_attend_encode_kernel(%arg0: i32, %arg1: memref<1x16x128xf32, #tpu.memory_space<vmem>>, %arg2: memref<1x8x128xf32, #tpu.memory_space<vmem>>, %arg3: memref<1x16x1xf32, #tpu.memory_space<vmem>>, %arg4: memref<1x1x8xf32, #tpu.memory_space<vmem>>, %arg5: memref<1x1x8xf32, #tpu.memory_space<vmem>>, %arg6: memref<1x128xf32, #tpu.memory_space<vmem>>, %arg7: memref<1x128xf32, #tpu.memory_space<vmem>>, %arg8: memref<1x1xf32, #tpu.memory_space<vmem>>, %arg9: memref<512x128xbf16, #tpu.memory_space<vmem>>, %arg10: memref<1x128xf32, #tpu.memory_space<vmem>>, %arg11: memref<128x128xbf16, #tpu.memory_space<vmem>>, %arg12: memref<1x128xf32, #tpu.memory_space<vmem>>, %arg13: memref<1x640xf32, #tpu.memory_space<vmem>>, %arg14: memref<1x1xf32, #tpu.memory_space<vmem>>, %arg15: memref<896x128xbf16, #tpu.memory_space<vmem>>, %arg16: memref<1x128xf32, #tpu.memory_space<vmem>>, %arg17: memref<1x640xf32, #tpu.memory_space<vmem>>, %arg18: memref<1x1xf32, #tpu.memory_space<vmem>>, %arg19: memref<1x1x16xf32, #tpu.memory_space<vmem>>, %arg20: memref<1x1x16xf32, #tpu.memory_space<vmem>>) attributes {dimension_semantics = [#tpu.dimension_semantics<parallel>], iteration_bounds = array<i64: 2>, scalar_prefetch = 0 : i64, scratch_operands = 0 : i64, tpu.core_type = #tpu.core_type<tc>, window_params = [{transform_indices = @transform_0, window_bounds = array<i64: 1, 16, 128>}, {transform_indices = @transform_1, window_bounds = array<i64: 1, 8, 128>}, {transform_indices = @transform_2, window_bounds = array<i64: 1, 16, 1>}, {transform_indices = @transform_3, window_bounds = array<i64: 1, 1, 8>}, {transform_indices = @transform_4, window_bounds = array<i64: 1, 1, 8>}, {pipeline_mode = #tpu.pipeline_mode<synchronous>, transform_indices = @transform_5, window_bounds = array<i64: 1, 128>}, {pipeline_mode = #tpu.pipeline_mode<synchronous>, transform_indices = @transform_6, window_bounds = array<i64: 1, 128>}, {pipeline_mode = #tpu.pipeline_mode<synchronous>, transform_indices = @transform_7, window_bounds = array<i64: 1, 1>}, {pipeline_mode = #tpu.pipeline_mode<synchronous>, transform_indices = @transform_8, window_bounds = array<i64: 512, 128>}, {pipeline_mode = #tpu.pipeline_mode<synchronous>, transform_indices = @transform_9, window_bounds = array<i64: 1, 128>}, {pipeline_mode = #tpu.pipeline_mode<synchronous>, transform_indices = @transform_10, window_bounds = array<i64: 128, 128>}, {pipeline_mode = #tpu.pipeline_mode<synchronous>, transform_indices = @transform_11, window_bounds = array<i64: 1, 128>}, {pipeline_mode = #tpu.pipeline_mode<synchronous>, transform_indices = @transform_12, window_bounds = array<i64: 1, 640>}, {pipeline_mode = #tpu.pipeline_mode<synchronous>, transform_indices = @transform_13, window_bounds = array<i64: 1, 1>}, {pipeline_mode = #tpu.pipeline_mode<synchronous>, transform_indices = @transform_14, window_bounds = array<i64: 896, 128>}, {pipeline_mode = #tpu.pipeline_mode<synchronous>, transform_indices = @transform_15, window_bounds = array<i64: 1, 128>}, {pipeline_mode = #tpu.pipeline_mode<synchronous>, transform_indices = @transform_16, window_bounds = array<i64: 1, 640>}, {pipeline_mode = #tpu.pipeline_mode<synchronous>, transform_indices = @transform_17, window_bounds = array<i64: 1, 1>}, {transform_indices = @transform_18, window_bounds = array<i64: 1, 1, 16>}, {transform_indices = @transform_19, window_bounds = array<i64: 1, 1, 16>}]} {
    %c0 = arith.constant 0 : index
    %c0_0 = arith.constant 0 : index
    %c0_1 = arith.constant 0 : index
    %0 = vector.load %arg1[%c0, %c0_0, %c0_1] : memref<1x16x128xf32, #tpu.memory_space<vmem>>, vector<1x16x128xf32>
    %1 = vector.shape_cast %0 : vector<1x16x128xf32> to vector<16x128xf32>
    %c0_2 = arith.constant 0 : index
    %c0_3 = arith.constant 0 : index
    %c0_4 = arith.constant 0 : index
    %2 = vector.load %arg2[%c0_2, %c0_3, %c0_4] : memref<1x8x128xf32, #tpu.memory_space<vmem>>, vector<1x8x128xf32>
    %3 = vector.shape_cast %2 : vector<1x8x128xf32> to vector<8x128xf32>
    %c0_5 = arith.constant 0 : index
    %c0_6 = arith.constant 0 : index
    %c0_7 = arith.constant 0 : index
    %4 = vector.load %arg3[%c0_5, %c0_6, %c0_7] : memref<1x16x1xf32, #tpu.memory_space<vmem>>, vector<1x16x1xf32>
    %5 = vector.shape_cast %4 : vector<1x16x1xf32> to vector<16x1xf32>
    %c0_8 = arith.constant 0 : index
    %c0_9 = arith.constant 0 : index
    %c0_10 = arith.constant 0 : index
    %6 = vector.load %arg4[%c0_8, %c0_9, %c0_10] : memref<1x1x8xf32, #tpu.memory_space<vmem>>, vector<1x1x8xf32>
    %7 = vector.shape_cast %6 : vector<1x1x8xf32> to vector<1x8xf32>
    %c0_11 = arith.constant 0 : index
    %c0_12 = arith.constant 0 : index
    %c0_13 = arith.constant 0 : index
    %8 = vector.load %arg5[%c0_11, %c0_12, %c0_13] : memref<1x1x8xf32, #tpu.memory_space<vmem>>, vector<1x1x8xf32>
    %9 = vector.shape_cast %8 : vector<1x1x8xf32> to vector<1x8xf32>
    %c0_14 = arith.constant 0 : index
    %c0_15 = arith.constant 0 : index
    %10 = vector.load %arg7[%c0_14, %c0_15] : memref<1x128xf32, #tpu.memory_space<vmem>>, vector<1x128xf32>
    %11 = vector.broadcast %10 : vector<1x128xf32> to vector<16x128xf32>
    %12 = arith.mulf %1, %11 : vector<16x128xf32>
    %13 = arith.truncf %12 : vector<16x128xf32> to vector<16x128xbf16>
    %14 = arith.truncf %3 : vector<8x128xf32> to vector<8x128xbf16>
    %cst = arith.constant dense<0.000000e+00> : vector<16x8xf32>
    %15 = tpu.matmul %13, %14, %cst {dimension_numbers = #tpu.dot_dimension_numbers<[1], [1], [0], [0], [0, 0, 1, 0], [], []>} : vector<16x128xbf16>, vector<8x128xbf16>, vector<16x8xf32> -> vector<16x8xf32>
    %c0_16 = arith.constant 0 : index
    %c0_17 = arith.constant 0 : index
    %16 = vector.load %arg6[%c0_16, %c0_17] : memref<1x128xf32, #tpu.memory_space<vmem>>, vector<1x128xf32>
    %17 = vector.broadcast %16 : vector<1x128xf32> to vector<16x128xf32>
    %18 = arith.mulf %1, %17 : vector<16x128xf32>
    %cst_18 = arith.constant dense<0.000000e+00> : vector<16xf32>
    %19 = vector.multi_reduction <add>, %18, %cst_18 [1] : vector<16x128xf32> to vector<16xf32>
    %20 = vector.shape_cast %19 : vector<16xf32> to vector<16x1xf32>
    %21 = vector.broadcast %20 : vector<16x1xf32> to vector<16x8xf32>
    %22 = arith.addf %15, %21 : vector<16x8xf32>
    %23 = vector.broadcast %9 : vector<1x8xf32> to vector<16x8xf32>
    %24 = arith.addf %22, %23 : vector<16x8xf32>
    %c0_19 = arith.constant 0 : index
    %c0_20 = arith.constant 0 : index
    %25 = vector.load %arg8[%c0_19, %c0_20] : memref<1x1xf32, #tpu.memory_space<vmem>>, vector<1x1xf32>
    %26 = vector.broadcast %25 : vector<1x1xf32> to vector<16x8xf32>
    %27 = arith.addf %24, %26 : vector<16x8xf32>
    %cst_21 = arith.constant 1.000000e+00 : f32
    %28 = vector.broadcast %cst_21 : f32 to vector<1x8xf32>
    %29 = arith.subf %7, %28 : vector<1x8xf32>
    %cst_22 = arith.constant 1.000000e+09 : f32
    %30 = vector.broadcast %cst_22 : f32 to vector<1x8xf32>
    %31 = arith.mulf %29, %30 : vector<1x8xf32>
    %32 = vector.broadcast %31 : vector<1x8xf32> to vector<16x8xf32>
    %33 = arith.addf %27, %32 : vector<16x8xf32>
    %cst_23 = arith.constant dense<0xFF800000> : vector<16xf32>
    %34 = vector.multi_reduction <maximumf>, %33, %cst_23 [1] : vector<16x8xf32> to vector<16xf32>
    %35 = vector.shape_cast %34 : vector<16xf32> to vector<16x1xf32>
    %36 = vector.broadcast %35 : vector<16x1xf32> to vector<16x8xf32>
    %37 = arith.subf %33, %36 : vector<16x8xf32>
    %38 = math.exp %37 : vector<16x8xf32>
    %cst_24 = arith.constant dense<0.000000e+00> : vector<16xf32>
    %39 = vector.multi_reduction <add>, %38, %cst_24 [1] : vector<16x8xf32> to vector<16xf32>
    %40 = vector.shape_cast %39 : vector<16xf32> to vector<16x1xf32>
    %41 = tpu.reciprocal %40 {approx = true} : vector<16x1xf32> -> vector<16x1xf32>
    %42 = vector.broadcast %41 : vector<16x1xf32> to vector<16x8xf32>
    %43 = arith.mulf %38, %42 : vector<16x8xf32>
    %44 = arith.truncf %43 : vector<16x8xf32> to vector<16x8xbf16>
    %45 = arith.truncf %3 : vector<8x128xf32> to vector<8x128xbf16>
    %cst_25 = arith.constant dense<0.000000e+00> : vector<16x128xf32>
    %46 = tpu.matmul %44, %45, %cst_25 {dimension_numbers = #tpu.dot_dimension_numbers<[1], [0], [0], [1], [0, 0, 1, 1], [], []>} : vector<16x8xbf16>, vector<8x128xbf16>, vector<16x128xf32> -> vector<16x128xf32>
    %cst_26 = arith.constant 1.000000e+00 : f32
    %47 = vector.broadcast %cst_26 : f32 to vector<16x1xf32>
    %48 = arith.subf %5, %47 : vector<16x1xf32>
    %cst_27 = arith.constant 1.000000e+09 : f32
    %49 = vector.broadcast %cst_27 : f32 to vector<16x1xf32>
    %50 = arith.mulf %48, %49 : vector<16x1xf32>
    %51 = arith.addf %35, %50 : vector<16x1xf32>
    %cst_28 = arith.constant dense<0xFF800000> : vector<1xf32>
    %52 = vector.multi_reduction <maximumf>, %51, %cst_28 [0] : vector<16x1xf32> to vector<1xf32>
    %53 = vector.shape_cast %52 : vector<1xf32> to vector<1x1xf32>
    %54 = vector.broadcast %53 : vector<1x1xf32> to vector<16x1xf32>
    %55 = arith.subf %51, %54 : vector<16x1xf32>
    %56 = math.exp %55 : vector<16x1xf32>
    %cst_29 = arith.constant dense<0.000000e+00> : vector<1xf32>
    %57 = vector.multi_reduction <add>, %56, %cst_29 [0] : vector<16x1xf32> to vector<1xf32>
    %58 = vector.shape_cast %57 : vector<1xf32> to vector<1x1xf32>
    %59 = tpu.reciprocal %58 {approx = true} : vector<1x1xf32> -> vector<1x1xf32>
    %60 = vector.broadcast %59 : vector<1x1xf32> to vector<16x1xf32>
    %61 = arith.mulf %56, %60 : vector<16x1xf32>
    %62 = vector.broadcast %61 : vector<16x1xf32> to vector<16x128xf32>
    %63 = arith.mulf %1, %62 : vector<16x128xf32>
    %cst_30 = arith.constant dense<0.000000e+00> : vector<128xf32>
    %64 = vector.multi_reduction <add>, %63, %cst_30 [0] : vector<16x128xf32> to vector<128xf32>
    %65 = vector.shape_cast %64 : vector<128xf32> to vector<1x128xf32>
    %66 = vector.broadcast %65 : vector<1x128xf32> to vector<16x128xf32>
    %67 = arith.mulf %1, %66 : vector<16x128xf32>
    %68 = arith.mulf %1, %46 : vector<16x128xf32>
    %69 = tpu.concatenate %1, %46, %68, %67 in 1 : vector<16x128xf32>, vector<16x128xf32>, vector<16x128xf32>, vector<16x128xf32> -> vector<16x512xf32>
    %70 = arith.truncf %69 : vector<16x512xf32> to vector<16x512xbf16>
    %c0_31 = arith.constant 0 : index
    %c0_32 = arith.constant 0 : index
    %71 = vector.load %arg9[%c0_31, %c0_32] : memref<512x128xbf16, #tpu.memory_space<vmem>>, vector<512x128xbf16>
    %cst_33 = arith.constant dense<0.000000e+00> : vector<16x128xf32>
    %72 = tpu.matmul %70, %71, %cst_33 {dimension_numbers = #tpu.dot_dimension_numbers<[1], [0], [0], [1], [0, 0, 1, 1], [], []>} : vector<16x512xbf16>, vector<512x128xbf16>, vector<16x128xf32> -> vector<16x128xf32>
    %c0_34 = arith.constant 0 : index
    %c0_35 = arith.constant 0 : index
    %73 = vector.load %arg10[%c0_34, %c0_35] : memref<1x128xf32, #tpu.memory_space<vmem>>, vector<1x128xf32>
    %74 = vector.broadcast %73 : vector<1x128xf32> to vector<16x128xf32>
    %75 = arith.addf %72, %74 : vector<16x128xf32>
    %76 = math.tanh %75 : vector<16x128xf32>
    %77 = arith.truncf %76 : vector<16x128xf32> to vector<16x128xbf16>
    %c0_36 = arith.constant 0 : index
    %c0_37 = arith.constant 0 : index
    %78 = vector.load %arg11[%c0_36, %c0_37] : memref<128x128xbf16, #tpu.memory_space<vmem>>, vector<128x128xbf16>
    %cst_38 = arith.constant dense<0.000000e+00> : vector<16x128xf32>
    %79 = tpu.matmul %77, %78, %cst_38 {dimension_numbers = #tpu.dot_dimension_numbers<[1], [0], [0], [1], [0, 0, 1, 1], [], []>} : vector<16x128xbf16>, vector<128x128xbf16>, vector<16x128xf32> -> vector<16x128xf32>
    %c0_39 = arith.constant 0 : index
    %c0_40 = arith.constant 0 : index
    %80 = vector.load %arg12[%c0_39, %c0_40] : memref<1x128xf32, #tpu.memory_space<vmem>>, vector<1x128xf32>
    %81 = vector.broadcast %80 : vector<1x128xf32> to vector<16x128xf32>
    %82 = arith.addf %79, %81 : vector<16x128xf32>
    %83 = math.tanh %82 : vector<16x128xf32>
    %84 = tpu.concatenate %83, %69 in 1 : vector<16x128xf32>, vector<16x512xf32> -> vector<16x640xf32>
    %c0_41 = arith.constant 0 : index
    %c0_42 = arith.constant 0 : index
    %85 = vector.load %arg13[%c0_41, %c0_42] : memref<1x640xf32, #tpu.memory_space<vmem>>, vector<1x640xf32>
    %86 = vector.broadcast %85 : vector<1x640xf32> to vector<16x640xf32>
    %87 = arith.mulf %84, %86 : vector<16x640xf32>
    %cst_43 = arith.constant dense<0.000000e+00> : vector<16xf32>
    %88 = vector.multi_reduction <add>, %87, %cst_43 [1] : vector<16x640xf32> to vector<16xf32>
    %89 = vector.shape_cast %88 : vector<16xf32> to vector<16x1xf32>
    %c0_44 = arith.constant 0 : index
    %c0_45 = arith.constant 0 : index
    %90 = vector.load %arg14[%c0_44, %c0_45] : memref<1x1xf32, #tpu.memory_space<vmem>>, vector<1x1xf32>
    %91 = vector.broadcast %90 : vector<1x1xf32> to vector<16x1xf32>
    %92 = arith.addf %89, %91 : vector<16x1xf32>
    %cst_46 = arith.constant 1.000000e+00 : f32
    %93 = vector.broadcast %cst_46 : f32 to vector<16x1xf32>
    %94 = arith.subf %5, %93 : vector<16x1xf32>
    %cst_47 = arith.constant 1.000000e+09 : f32
    %95 = vector.broadcast %cst_47 : f32 to vector<16x1xf32>
    %96 = arith.mulf %94, %95 : vector<16x1xf32>
    %97 = arith.addf %92, %96 : vector<16x1xf32>
    %cst_48 = arith.constant dense<0xFF800000> : vector<1xf32>
    %98 = vector.multi_reduction <maximumf>, %97, %cst_48 [0] : vector<16x1xf32> to vector<1xf32>
    %99 = vector.shape_cast %98 : vector<1xf32> to vector<1x1xf32>
    %100 = vector.broadcast %99 : vector<1x1xf32> to vector<16x1xf32>
    %101 = arith.subf %97, %100 : vector<16x1xf32>
    %102 = math.exp %101 : vector<16x1xf32>
    %cst_49 = arith.constant dense<0.000000e+00> : vector<1xf32>
    %103 = vector.multi_reduction <add>, %102, %cst_49 [0] : vector<16x1xf32> to vector<1xf32>
    %104 = vector.shape_cast %103 : vector<1xf32> to vector<1x1xf32>
    %105 = vector.broadcast %104 : vector<1x1xf32> to vector<16x1xf32>
    %106 = arith.divf %102, %105 : vector<16x1xf32>
    %107 = vector.broadcast %106 : vector<16x1xf32> to vector<16x128xf32>
    %108 = arith.mulf %83, %107 : vector<16x128xf32>
    %cst_50 = arith.constant dense<0.000000e+00> : vector<128xf32>
    %109 = vector.multi_reduction <add>, %108, %cst_50 [0] : vector<16x128xf32> to vector<128xf32>
    %110 = vector.shape_cast %109 : vector<128xf32> to vector<1x128xf32>
    %111 = tpu.transpose %106, [1, 0] : vector<16x1xf32> -> vector<1x16xf32>
    %c0_51 = arith.constant 0 : index
    %c0_52 = arith.constant 0 : index
    %c0_53 = arith.constant 0 : index
    %112 = vector.load %arg19[%c0_51, %c0_52, %c0_53] : memref<1x1x16xf32, #tpu.memory_space<vmem>>, vector<1x1x16xf32>
    %113 = vector.shape_cast %112 : vector<1x1x16xf32> to vector<1x16xf32>
    %114 = vector.shape_cast %111 : vector<1x16xf32> to vector<1x1x16xf32>
    tpu.vector_store %arg19[%c0_51, %c0_52, %c0_53], %114 {strides = array<i32>} : memref<1x1x16xf32, #tpu.memory_space<vmem>>, vector<1x1x16xf32>,
    %115 = vector.shape_cast %110 : vector<1x128xf32> to vector<1x128xf32>
    %116 = vector.broadcast %115 : vector<1x128xf32> to vector<16x128xf32>
    %117 = vector.broadcast %110 : vector<1x128xf32> to vector<16x128xf32>
    %118 = arith.mulf %83, %117 : vector<16x128xf32>
    %119 = tpu.concatenate %69, %83, %116, %118 in 1 : vector<16x512xf32>, vector<16x128xf32>, vector<16x128xf32>, vector<16x128xf32> -> vector<16x896xf32>
    %120 = arith.truncf %119 : vector<16x896xf32> to vector<16x896xbf16>
    %c0_54 = arith.constant 0 : index
    %c0_55 = arith.constant 0 : index
    %121 = vector.load %arg15[%c0_54, %c0_55] : memref<896x128xbf16, #tpu.memory_space<vmem>>, vector<896x128xbf16>
    %cst_56 = arith.constant dense<0.000000e+00> : vector<16x128xf32>
    %122 = tpu.matmul %120, %121, %cst_56 {dimension_numbers = #tpu.dot_dimension_numbers<[1], [0], [0], [1], [0, 0, 1, 1], [], []>} : vector<16x896xbf16>, vector<896x128xbf16>, vector<16x128xf32> -> vector<16x128xf32>
    %c0_57 = arith.constant 0 : index
    %c0_58 = arith.constant 0 : index
    %123 = vector.load %arg16[%c0_57, %c0_58] : memref<1x128xf32, #tpu.memory_space<vmem>>, vector<1x128xf32>
    %124 = vector.broadcast %123 : vector<1x128xf32> to vector<16x128xf32>
    %125 = arith.addf %122, %124 : vector<16x128xf32>
    %126 = math.tanh %125 : vector<16x128xf32>
    %127 = tpu.concatenate %126, %69 in 1 : vector<16x128xf32>, vector<16x512xf32> -> vector<16x640xf32>
    %c0_59 = arith.constant 0 : index
    %c0_60 = arith.constant 0 : index
    %128 = vector.load %arg17[%c0_59, %c0_60] : memref<1x640xf32, #tpu.memory_space<vmem>>, vector<1x640xf32>
    %129 = vector.broadcast %128 : vector<1x640xf32> to vector<16x640xf32>
    %130 = arith.mulf %127, %129 : vector<16x640xf32>
    %cst_61 = arith.constant dense<0.000000e+00> : vector<16xf32>
    %131 = vector.multi_reduction <add>, %130, %cst_61 [1] : vector<16x640xf32> to vector<16xf32>
    %132 = vector.shape_cast %131 : vector<16xf32> to vector<16x1xf32>
    %c0_62 = arith.constant 0 : index
    %c0_63 = arith.constant 0 : index
    %133 = vector.load %arg18[%c0_62, %c0_63] : memref<1x1xf32, #tpu.memory_space<vmem>>, vector<1x1xf32>
    %134 = vector.broadcast %133 : vector<1x1xf32> to vector<16x1xf32>
    %135 = arith.addf %132, %134 : vector<16x1xf32>
    %cst_64 = arith.constant 1.000000e+00 : f32
    %136 = vector.broadcast %cst_64 : f32 to vector<16x1xf32>
    %137 = arith.subf %5, %136 : vector<16x1xf32>
    %cst_65 = arith.constant 1.000000e+09 : f32
    %138 = vector.broadcast %cst_65 : f32 to vector<16x1xf32>
    %139 = arith.mulf %137, %138 : vector<16x1xf32>
    %140 = arith.addf %135, %139 : vector<16x1xf32>
    %cst_66 = arith.constant dense<0xFF800000> : vector<1xf32>
    %141 = vector.multi_reduction <maximumf>, %140, %cst_66 [0] : vector<16x1xf32> to vector<1xf32>
    %142 = vector.shape_cast %141 : vector<1xf32> to vector<1x1xf32>
    %143 = vector.broadcast %142 : vector<1x1xf32> to vector<16x1xf32>
    %144 = arith.subf %140, %143 : vector<16x1xf32>
    %145 = math.exp %144 : vector<16x1xf32>
    %cst_67 = arith.constant dense<0.000000e+00> : vector<1xf32>
    %146 = vector.multi_reduction <add>, %145, %cst_67 [0] : vector<16x1xf32> to vector<1xf32>
    %147 = vector.shape_cast %146 : vector<1xf32> to vector<1x1xf32>
    %148 = vector.broadcast %147 : vector<1x1xf32> to vector<16x1xf32>
    %149 = arith.divf %145, %148 : vector<16x1xf32>
    %150 = tpu.transpose %149, [1, 0] : vector<16x1xf32> -> vector<1x16xf32>
    %c0_68 = arith.constant 0 : index
    %c0_69 = arith.constant 0 : index
    %c0_70 = arith.constant 0 : index
    %151 = vector.load %arg20[%c0_68, %c0_69, %c0_70] : memref<1x1x16xf32, #tpu.memory_space<vmem>>, vector<1x1x16xf32>
    %152 = vector.shape_cast %151 : vector<1x1x16xf32> to vector<1x16xf32>
    %153 = vector.shape_cast %150 : vector<1x16xf32> to vector<1x1x16xf32>
    tpu.vector_store %arg20[%c0_68, %c0_69, %c0_70], %153 {strides = array<i32>} : memref<1x1x16xf32, #tpu.memory_space<vmem>>, vector<1x1x16xf32>,
    return
  }
  func.func @transform_0(%arg0: i32) -> (i32, i32, i32) {
    %c0_i32 = arith.constant 0 : i32
    %c0_i32_0 = arith.constant 0 : i32
    %c0_i32_1 = arith.constant 0 : i32
    return %arg0, %c0_i32, %c0_i32_0 : i32, i32, i32
  }
  func.func @transform_1(%arg0: i32) -> (i32, i32, i32) {
    %c0_i32 = arith.constant 0 : i32
    %c0_i32_0 = arith.constant 0 : i32
    %c0_i32_1 = arith.constant 0 : i32
    return %arg0, %c0_i32, %c0_i32_0 : i32, i32, i32
  }
  func.func @transform_2(%arg0: i32) -> (i32, i32, i32) {
    %c0_i32 = arith.constant 0 : i32
    %c0_i32_0 = arith.constant 0 : i32
    %c0_i32_1 = arith.constant 0 : i32
    return %arg0, %c0_i32, %c0_i32_0 : i32, i32, i32
  }
  func.func @transform_3(%arg0: i32) -> (i32, i32, i32) {
    %c0_i32 = arith.constant 0 : i32
    %c0_i32_0 = arith.constant 0 : i32
    %c0_i32_1 = arith.constant 0 : i32
    return %arg0, %c0_i32, %c0_i32_0 : i32, i32, i32
  }
  func.func @transform_4(%arg0: i32) -> (i32, i32, i32) {
    %c0_i32 = arith.constant 0 : i32
    %c0_i32_0 = arith.constant 0 : i32
    %c0_i32_1 = arith.constant 0 : i32
    return %arg0, %c0_i32, %c0_i32_0 : i32, i32, i32
  }
  func.func @transform_5(%arg0: i32) -> (i32, i32) {
    %c0_i32 = arith.constant 0 : i32
    %c0_i32_0 = arith.constant 0 : i32
    %c0_i32_1 = arith.constant 0 : i32
    return %c0_i32, %c0_i32_0 : i32, i32
  }
  func.func @transform_6(%arg0: i32) -> (i32, i32) {
    %c0_i32 = arith.constant 0 : i32
    %c0_i32_0 = arith.constant 0 : i32
    %c0_i32_1 = arith.constant 0 : i32
    return %c0_i32, %c0_i32_0 : i32, i32
  }
  func.func @transform_7(%arg0: i32) -> (i32, i32) {
    %c0_i32 = arith.constant 0 : i32
    %c0_i32_0 = arith.constant 0 : i32
    %c0_i32_1 = arith.constant 0 : i32
    return %c0_i32, %c0_i32_0 : i32, i32
  }
  func.func @transform_8(%arg0: i32) -> (i32, i32) {
    %c0_i32 = arith.constant 0 : i32
    %c0_i32_0 = arith.constant 0 : i32
    %c0_i32_1 = arith.constant 0 : i32
    return %c0_i32, %c0_i32_0 : i32, i32
  }
  func.func @transform_9(%arg0: i32) -> (i32, i32) {
    %c0_i32 = arith.constant 0 : i32
    %c0_i32_0 = arith.constant 0 : i32
    %c0_i32_1 = arith.constant 0 : i32
    return %c0_i32, %c0_i32_0 : i32, i32
  }
  func.func @transform_10(%arg0: i32) -> (i32, i32) {
    %c0_i32 = arith.constant 0 : i32
    %c0_i32_0 = arith.constant 0 : i32
    %c0_i32_1 = arith.constant 0 : i32
    return %c0_i32, %c0_i32_0 : i32, i32
  }
  func.func @transform_11(%arg0: i32) -> (i32, i32) {
    %c0_i32 = arith.constant 0 : i32
    %c0_i32_0 = arith.constant 0 : i32
    %c0_i32_1 = arith.constant 0 : i32
    return %c0_i32, %c0_i32_0 : i32, i32
  }
  func.func @transform_12(%arg0: i32) -> (i32, i32) {
    %c0_i32 = arith.constant 0 : i32
    %c0_i32_0 = arith.constant 0 : i32
    %c0_i32_1 = arith.constant 0 : i32
    return %c0_i32, %c0_i32_0 : i32, i32
  }
  func.func @transform_13(%arg0: i32) -> (i32, i32) {
    %c0_i32 = arith.constant 0 : i32
    %c0_i32_0 = arith.constant 0 : i32
    %c0_i32_1 = arith.constant 0 : i32
    return %c0_i32, %c0_i32_0 : i32, i32
  }
  func.func @transform_14(%arg0: i32) -> (i32, i32) {
    %c0_i32 = arith.constant 0 : i32
    %c0_i32_0 = arith.constant 0 : i32
    %c0_i32_1 = arith.constant 0 : i32
    return %c0_i32, %c0_i32_0 : i32, i32
  }
  func.func @transform_15(%arg0: i32) -> (i32, i32) {
    %c0_i32 = arith.constant 0 : i32
    %c0_i32_0 = arith.constant 0 : i32
    %c0_i32_1 = arith.constant 0 : i32
    return %c0_i32, %c0_i32_0 : i32, i32
  }
  func.func @transform_16(%arg0: i32) -> (i32, i32) {
    %c0_i32 = arith.constant 0 : i32
    %c0_i32_0 = arith.constant 0 : i32
    %c0_i32_1 = arith.constant 0 : i32
    return %c0_i32, %c0_i32_0 : i32, i32
  }
  func.func @transform_17(%arg0: i32) -> (i32, i32) {
    %c0_i32 = arith.constant 0 : i32
    %c0_i32_0 = arith.constant 0 : i32
    %c0_i32_1 = arith.constant 0 : i32
    return %c0_i32, %c0_i32_0 : i32, i32
  }
  func.func @transform_18(%arg0: i32) -> (i32, i32, i32) {
    %c0_i32 = arith.constant 0 : i32
    %c0_i32_0 = arith.constant 0 : i32
    %c0_i32_1 = arith.constant 0 : i32
    return %arg0, %c0_i32, %c0_i32_0 : i32, i32, i32
  }
  func.func @transform_19(%arg0: i32) -> (i32, i32, i32) {
    %c0_i32 = arith.constant 0 : i32
    %c0_i32_0 = arith.constant 0 : i32
    %c0_i32_1 = arith.constant 0 : i32
    return %arg0, %c0_i32, %c0_i32_0 : i32, i32, i32
  }
}

</mosaic_0001>

<llo_original>
// kernel: _lambda_.3
$region0: #{_lambda_.3}
  #allocation0 [shape = 'u32[]', space=smem, size = 0x4, offset = 0x4, fixed_abs, tag = 'smem constant byte address 0x4 - core index']
  #allocation1 [shape = 'u32[144,128]{1,0:T(1,128)}', space=vmem, size = 0x12000, scoped, tag = 'internal scratch']
  %s0 = inlined_call_operand.vmem [shape: f32[48,32], index: 0, kind: input, shape index: {}]
  %s1 = inlined_call_operand.vmem [shape: bf16[32,256], index: 1, kind: input, shape index: {}]
  %s2 = inlined_call_operand.vmem [shape: f32[1,128], index: 2, kind: input, shape index: {}]
  %s3 = inlined_call_operand.vmem [shape: f32[48,128], index: 3, kind: output, shape index: {}]
  %s4 = sld [smem:[#allocation0]]
  $region22: #{_lambda_.3} parent=0
    _
  %s6 = ssub.s32 1, %s4
  %s7 = scalar_select 0, %s6, %s4
  // Predicated region
  $region2: #{_lambda_.3} parent=0 // pred_check
    _
  $region3: #{_lambda_.3} parent=0 // pred_check_branch
    %9 = sbr.rel (0) target = $region5
  $region4: #{_lambda_.3} parent=0 // pred_region
    _
  $region5: #{_lambda_.3} parent=0 // pred_fallthru
    _
  // Predicated region
  $region6: #{_lambda_.3} parent=0 // pred_check
    _
  $region7: #{_lambda_.3} parent=0 // pred_check_branch
    %11 = sbr.rel (0) target = $region9
  $region8: #{_lambda_.3} parent=0 // pred_region
    _
  $region9: #{_lambda_.3} parent=0 // pred_fallthru
    _
  // Predicated region
  $region10: #{_lambda_.3} parent=0 // pred_check
    _
  $region11: #{_lambda_.3} parent=0 // pred_check_branch
    %13 = sbr.rel (0) target = $region13
  $region12: #{_lambda_.3} parent=0 // pred_region
    _
  $region13: #{_lambda_.3} parent=0 // pred_fallthru
    _
  %v15 = vld [vmem:[%s0] sm:$0xff]
  %v16 = vld [vmem:[%s0 + $0x8] sm:$0xff]
  %v17 = vld [vmem:[%s0 + $0x10] sm:$0xff]
  %v18 = vld [vmem:[%s0 + $0x18] sm:$0xff]
  %v19 = vld [vmem:[%s0 + $0x20] sm:$0xff]
  %v20 = vld [vmem:[%s0 + $0x28] sm:$0xff]
  %v21 = vpack.c.bf16 %v16, %v15
  %v22 = vpack.c.bf16 %v18, %v17
  %v23 = vpack.c.bf16 %v20, %v19
  %v24 = vld [vmem:[%s1] sm:$0xff]
  %v25 = vld [vmem:[%s1 + $0x8] sm:$0xff]
  %v26 = vld [vmem:[%s1 + $0x10] sm:$0xff]
  %v27 = vld [vmem:[%s1 + $0x18] sm:$0xff]
  %v32 = vunpack.c.l.b16 %v24
  %v33 = vunpack.c.h.b16 %v24
  %v34 = vunpack.c.l.b16 %v25
  %v35 = vunpack.c.h.b16 %v25
  %v36 = vunpack.c.l.b16 %v26
  %v37 = vunpack.c.h.b16 %v26
  %v38 = vunpack.c.l.b16 %v27
  %v39 = vunpack.c.h.b16 %v27
  %v40 = vpack.c.b16 %v34, %v32
  %v41 = vpack.c.b16 %v35, %v33
  %v42 = vpack.c.b16 %v38, %v36
  %v43 = vpack.c.b16 %v39, %v37
  %vm48 = vcmask 261120
  %v50 = vsel %vm48, %v21, 0
  %v53 = vsel %vm48, %v22, 0
  %v56 = vsel %vm48, %v23, 0
  %58 = vmatprep.subr.bf16.mxu0 0
  %59 = vmatpush1.bf16.msra.mxu0 0
  %60 = vmatprep.subr.bf16.mxu0 0
  %61 = vmatpush1.bf16.msra.mxu0 0
  %62 = vmatprep.subr.bf16.mxu0 0
  %63 = vmatpush1.bf16.msra.mxu0 0
  %64 = vmatprep.subr.bf16.mxu0 0
  %65 = vmatpush1.bf16.msra.mxu0 0
  %66 = vmatprep.subr.bf16.mxu0 0
  %67 = vmatpush1.bf16.msra.mxu0 0
  %68 = vmatprep.subr.bf16.mxu0 0
  %69 = vmatpush1.bf16.msra.mxu0 0
  %70 = vmatprep.subr.bf16.mxu0 %v43
  %71 = vmatpush1.bf16.msra.mxu0 %v42
  %72 = vmatprep.subr.bf16.mxu0 %v41
  %73 = vmatpush1.bf16.msra.mxu0 %v40
  %74 = vmatprep.subr.bf16.mxu0 0
  %75 = vmatpush2.bf16.msra.mxu0 0
  %76 = vmatprep.subr.bf16.mxu0 0
  %77 = vmatpush2.bf16.msra.mxu0 0
  %78 = vmatprep.subr.bf16.mxu0 0
  %79 = vmatpush2.bf16.msra.mxu0 0
  %80 = vmatprep.subr.bf16.mxu0 0
  %81 = vmatpush2.bf16.msra.mxu0 0
  %82 = vmatprep.subr.bf16.mxu0 0
  %83 = vmatpush2.bf16.msra.mxu0 0
  %84 = vmatprep.subr.bf16.mxu0 0
  %85 = vmatpush2.bf16.msra.mxu0 0
  %86 = vmatprep.subr.bf16.mxu0 0
  %87 = vmatpush2.bf16.msra.mxu0 0
  %88 = vmatprep.subr.bf16.mxu0 0
  %89 = vmatpush2.bf16.msra.mxu0 0
  %90 = vmatprep.mubr.bf16.mxu0 0
  %91 = vmatmul.mubr.bf16.gmra.mxu0 %v50
  %v92 = vpop.f32.mrf.mxu0
  %v93 = vadd.f32 0.0, %v92
  %v94 = vpop.f32.mrf.mxu0
  %v95 = vadd.f32 0.0, %v94
  %v96 = vpop.f32.mrf.mxu0
  %v97 = vadd.f32 0.0, %v96
  %v98 = vpop.f32.mrf.mxu0
  %v99 = vadd.f32 0.0, %v98
  %100 = vmatprep.mubr.bf16.mxu0 0
  %101 = vmatmul.mubr.bf16.gmra.mxu0 %v53
  %v102 = vpop.f32.mrf.mxu0
  %v103 = vadd.f32 0.0, %v102
  %v104 = vpop.f32.mrf.mxu0
  %v105 = vadd.f32 0.0, %v104
  %v106 = vpop.f32.mrf.mxu0
  %v107 = vadd.f32 0.0, %v106
  %v108 = vpop.f32.mrf.mxu0
  %v109 = vadd.f32 0.0, %v108
  %110 = vmatprep.mubr.bf16.mxu0 0
  %111 = vmatmul.mubr.bf16.gmra.mxu0 %v56
  %v112 = vpop.f32.mrf.mxu0
  %v113 = vadd.f32 0.0, %v112
  %v114 = vpop.f32.mrf.mxu0
  %v115 = vadd.f32 0.0, %v114
  %v116 = vpop.f32.mrf.mxu0
  %v117 = vadd.f32 0.0, %v116
  %v118 = vpop.f32.mrf.mxu0
  %v119 = vadd.f32 0.0, %v118
  %120 = vdwg.mxu0
  %v121 = vmax.f32 %v93, %v95
  %v122 = vmax.f32 %v97, %v99
  %v123 = vmax.f32 %v103, %v105
  %v124 = vmax.f32 %v107, %v109
  %v125 = vmax.f32 %v113, %v115
  %v126 = vmax.f32 %v117, %v119
  %v127 = vld [vmem:[%s2] sm:$0x1]
  %v129 = vlaneseq
  %v130 = vshrl.u32 %v129, 7
  %v131 = vsub.s32 0, %v130
  %v132 = vrot.slane %v127, %v131
  %v134 = vadd.f32 %v121, %v132
  %v135 = vadd.f32 %v122, %v132
  %v136 = vadd.f32 %v123, %v132
  %v137 = vadd.f32 %v124, %v132
  %v138 = vadd.f32 %v125, %v132
  %v139 = vadd.f32 %v126, %v132
  %v140 = vmax.f32 %v134, 0.0
  %v141 = vmax.f32 %v135, 0.0
  %v142 = vmax.f32 %v136, 0.0
  %v143 = vmax.f32 %v137, 0.0
  %v144 = vmax.f32 %v138, 0.0
  %v145 = vmax.f32 %v139, 0.0
  %146 = vst [vmem:[%s3] sm:$0xff] %v140
  %147 = vst [vmem:[%s3 + $0x8] sm:$0xff] %v141
  %148 = vst [vmem:[%s3 + $0x10] sm:$0xff] %v142
  %149 = vst [vmem:[%s3 + $0x18] sm:$0xff] %v143
  %150 = vst [vmem:[%s3 + $0x20] sm:$0xff] %v144
  %151 = vst [vmem:[%s3 + $0x28] sm:$0xff] %v145
  // Predicated region
  $region14: #{_lambda_.3} parent=0 // pred_check
    _
  $region15: #{_lambda_.3} parent=0 // pred_check_branch
    %153 = sbr.rel (0) target = $region17
  $region16: #{_lambda_.3} parent=0 // pred_region
    _
  $region17: #{_lambda_.3} parent=0 // pred_fallthru
    _
  // Predicated region
  $region18: #{_lambda_.3} parent=0 // pred_check
    _
  $region19: #{_lambda_.3} parent=0 // pred_check_branch
    %155 = sbr.rel (0) target = $region21
  $region20: #{_lambda_.3} parent=0 // pred_region
    _
  $region21: #{_lambda_.3} parent=0 // pred_fallthru
    _

// kernel: _lambda_.4
$region0: #{_lambda_.4}
  #allocation0 [shape = 'u32[]', space=smem, size = 0x4, offset = 0x4, fixed_abs, tag = 'smem constant byte address 0x4 - core index']
  #allocation1 [shape = 'u32[144,128]{1,0:T(1,128)}', space=vmem, size = 0x12000, scoped, tag = 'internal scratch']
  %s0 = inlined_call_operand.vmem [shape: f32[48,128], index: 0, kind: input, shape index: {}]
  %s1 = inlined_call_operand.vmem [shape: f32[48,128], index: 1, kind: input, shape index: {}]
  %s2 = inlined_call_operand.vmem [shape: bf16[2,256,512], index: 2, kind: input, shape index: {}]
  %s3 = inlined_call_operand.vmem [shape: f32[2,1,512], index: 3, kind: input, shape index: {}]
  %s4 = inlined_call_operand.vmem [shape: bf16[256,128], index: 4, kind: input, shape index: {}]
  %s5 = inlined_call_operand.vmem [shape: f32[1,128], index: 5, kind: input, shape index: {}]
  %s6 = inlined_call_operand.vmem [shape: f32[48,128], index: 6, kind: output, shape index: {}]
  %s7 = sld [smem:[#allocation0]]
  $region34: #{_lambda_.4} parent=0
    _
  %s9 = ssub.s32 1, %s7
  %s10 = scalar_select 0, %s9, %s7
  // Predicated region
  $region2: #{_lambda_.4} parent=0 // pred_check
    _
  $region3: #{_lambda_.4} parent=0 // pred_check_branch
    %12 = sbr.rel (0) target = $region5
  $region4: #{_lambda_.4} parent=0 // pred_region
    _
  $region5: #{_lambda_.4} parent=0 // pred_fallthru
    _
  // Predicated region
  $region6: #{_lambda_.4} parent=0 // pred_check
    _
  $region7: #{_lambda_.4} parent=0 // pred_check_branch
    %14 = sbr.rel (0) target = $region9
  $region8: #{_lambda_.4} parent=0 // pred_region
    _
  $region9: #{_lambda_.4} parent=0 // pred_fallthru
    _
  // Predicated region
  $region10: #{_lambda_.4} parent=0 // pred_check
    _
  $region11: #{_lambda_.4} parent=0 // pred_check_branch
    %16 = sbr.rel (0) target = $region13
  $region12: #{_lambda_.4} parent=0 // pred_region
    _
  $region13: #{_lambda_.4} parent=0 // pred_fallthru
    _
  // Predicated region
  $region14: #{_lambda_.4} parent=0 // pred_check
    _
  $region15: #{_lambda_.4} parent=0 // pred_check_branch
    %18 = sbr.rel (0) target = $region17
  $region16: #{_lambda_.4} parent=0 // pred_region
    _
  $region17: #{_lambda_.4} parent=0 // pred_fallthru
    _
  // Predicated region
  $region18: #{_lambda_.4} parent=0 // pred_check
    _
  $region19: #{_lambda_.4} parent=0 // pred_check_branch
    %20 = sbr.rel (0) target = $region21
  $region20: #{_lambda_.4} parent=0 // pred_region
    _
  $region21: #{_lambda_.4} parent=0 // pred_fallthru
    _
  // Predicated region
  $region22: #{_lambda_.4} parent=0 // pred_check
    _
  $region23: #{_lambda_.4} parent=0 // pred_check_branch
    %22 = sbr.rel (0) target = $region25
  $region24: #{_lambda_.4} parent=0 // pred_region
    _
  $region25: #{_lambda_.4} parent=0 // pred_fallthru
    _
  %v24 = vld [vmem:[%s0] sm:$0xff]
  %v25 = vld [vmem:[%s0 + $0x8] sm:$0xff]
  %v26 = vld [vmem:[%s0 + $0x10] sm:$0xff]
  %v27 = vld [vmem:[%s0 + $0x18] sm:$0xff]
  %v28 = vld [vmem:[%s0 + $0x20] sm:$0xff]
  %v29 = vld [vmem:[%s0 + $0x28] sm:$0xff]
  %v30 = vld [vmem:[%s1] sm:$0xff]
  %v31 = vld [vmem:[%s1 + $0x8] sm:$0xff]
  %v32 = vld [vmem:[%s1 + $0x10] sm:$0xff]
  %v33 = vld [vmem:[%s1 + $0x18] sm:$0xff]
  %v34 = vld [vmem:[%s1 + $0x20] sm:$0xff]
  %v35 = vld [vmem:[%s1 + $0x28] sm:$0xff]
  %v36 = vpack.c.bf16 %v25, %v24
  %v37 = vpack.c.bf16 %v31, %v30
  %v38 = vpack.c.bf16 %v27, %v26
  %v39 = vpack.c.bf16 %v33, %v32
  %v40 = vpack.c.bf16 %v29, %v28
  %v41 = vpack.c.bf16 %v35, %v34
  %v42 = vld [vmem:[%s2] sm:$0xff]
  %v43 = vld [vmem:[%s2 + $0x8] sm:$0xff]
  %v44 = vld [vmem:[%s2 + $0x10] sm:$0xff]
  %v45 = vld [vmem:[%s2 + $0x18] sm:$0xff]
  %v46 = vld [vmem:[%s2 + $0x20] sm:$0xff]
  %v47 = vld [vmem:[%s2 + $0x28] sm:$0xff]
  %v48 = vld [vmem:[%s2 + $0x30] sm:$0xff]
  %v49 = vld [vmem:[%s2 + $0x38] sm:$0xff]
  %v50 = vld [vmem:[%s2 + $0x40] sm:$0xff]
  %v51 = vld [vmem:[%s2 + $0x48] sm:$0xff]
  %v52 = vld [vmem:[%s2 + $0x50] sm:$0xff]
  %v53 = vld [vmem:[%s2 + $0x58] sm:$0xff]
  %v54 = vld [vmem:[%s2 + $0x60] sm:$0xff]
  %v55 = vld [vmem:[%s2 + $0x68] sm:$0xff]
  %v56 = vld [vmem:[%s2 + $0x70] sm:$0xff]
  %v57 = vld [vmem:[%s2 + $0x78] sm:$0xff]
  %v58 = vld [vmem:[%s2 + $0x80] sm:$0xff]
  %v59 = vld [vmem:[%s2 + $0x88] sm:$0xff]
  %v60 = vld [vmem:[%s2 + $0x90] sm:$0xff]
  %v61 = vld [vmem:[%s2 + $0x98] sm:$0xff]
  %v62 = vld [vmem:[%s2 + $0xa0] sm:$0xff]
  %v63 = vld [vmem:[%s2 + $0xa8] sm:$0xff]
  %v64 = vld [vmem:[%s2 + $0xb0] sm:$0xff]
  %v65 = vld [vmem:[%s2 + $0xb8] sm:$0xff]
  %v66 = vld [vmem:[%s2 + $0xc0] sm:$0xff]
  %v67 = vld [vmem:[%s2 + $0xc8] sm:$0xff]
  %v68 = vld [vmem:[%s2 + $0xd0] sm:$0xff]
  %v69 = vld [vmem:[%s2 + $0xd8] sm:$0xff]
  %v70 = vld [vmem:[%s2 + $0xe0] sm:$0xff]
  %v71 = vld [vmem:[%s2 + $0xe8] sm:$0xff]
  %v72 = vld [vmem:[%s2 + $0xf0] sm:$0xff]
  %v73 = vld [vmem:[%s2 + $0xf8] sm:$0xff]
  %v74 = vld [vmem:[%s2 + $0x100] sm:$0xff]
  %v75 = vld [vmem:[%s2 + $0x108] sm:$0xff]
  %v76 = vld [vmem:[%s2 + $0x110] sm:$0xff]
  %v77 = vld [vmem:[%s2 + $0x118] sm:$0xff]
  %v78 = vld [vmem:[%s2 + $0x120] sm:$0xff]
  %v79 = vld [vmem:[%s2 + $0x128] sm:$0xff]
  %v80 = vld [vmem:[%s2 + $0x130] sm:$0xff]
  %v81 = vld [vmem:[%s2 + $0x138] sm:$0xff]
  %v82 = vld [vmem:[%s2 + $0x140] sm:$0xff]
  %v83 = vld [vmem:[%s2 + $0x148] sm:$0xff]
  %v84 = vld [vmem:[%s2 + $0x150] sm:$0xff]
  %v85 = vld [vmem:[%s2 + $0x158] sm:$0xff]
  %v86 = vld [vmem:[%s2 + $0x160] sm:$0xff]
  %v87 = vld [vmem:[%s2 + $0x168] sm:$0xff]
  %v88 = vld [vmem:[%s2 + $0x170] sm:$0xff]
  %v89 = vld [vmem:[%s2 + $0x178] sm:$0xff]
  %v90 = vld [vmem:[%s2 + $0x180] sm:$0xff]
  %v91 = vld [vmem:[%s2 + $0x188] sm:$0xff]
  %v92 = vld [vmem:[%s2 + $0x190] sm:$0xff]
  %v93 = vld [vmem:[%s2 + $0x198] sm:$0xff]
  %v94 = vld [vmem:[%s2 + $0x1a0] sm:$0xff]
  %v95 = vld [vmem:[%s2 + $0x1a8] sm:$0xff]
  %v96 = vld [vmem:[%s2 + $0x1b0] sm:$0xff]
  %v97 = vld [vmem:[%s2 + $0x1b8] sm:$0xff]
  %v98 = vld [vmem:[%s2 + $0x1c0] sm:$0xff]
  %v99 = vld [vmem:[%s2 + $0x1c8] sm:$0xff]
  %v100 = vld [vmem:[%s2 + $0x1d0] sm:$0xff]
  %v101 = vld [vmem:[%s2 + $0x1d8] sm:$0xff]
  %v102 = vld [vmem:[%s2 + $0x1e0] sm:$0xff]
  %v103 = vld [vmem:[%s2 + $0x1e8] sm:$0xff]
  %v104 = vld [vmem:[%s2 + $0x1f0] sm:$0xff]
  %v105 = vld [vmem:[%s2 + $0x1f8] sm:$0xff]
  %v106 = vld [vmem:[%s3] sm:$0xf]
  %v108 = vlaneseq
  %v109 = vshrl.u32 %v108, 7
  %v110 = vsub.s32 0, %v109
  %v111 = vrot.slane %v106, %v110
  %v112 = vlaneseq
  %v113 = vshrl.u32 %v112, 7
  %v114 = vsub.s32 1, %v113
  %v115 = vrot.slane %v106, %v114
  %v116 = vlaneseq
  %v117 = vshrl.u32 %v116, 7
  %v118 = vsub.s32 2, %v117
  %v119 = vrot.slane %v106, %v118
  %v120 = vlaneseq
  %v121 = vshrl.u32 %v120, 7
  %v122 = vsub.s32 3, %v121
  %v123 = vrot.slane %v106, %v122
  %v192 = vunpack.c.l.b16 %v42
  %v193 = vunpack.c.h.b16 %v42
  %v194 = vunpack.c.l.b16 %v43
  %v195 = vunpack.c.h.b16 %v43
  %v196 = vunpack.c.l.b16 %v44
  %v197 = vunpack.c.h.b16 %v44
  %v198 = vunpack.c.l.b16 %v45
  %v199 = vunpack.c.h.b16 %v45
  %v200 = vunpack.c.l.b16 %v46
  %v201 = vunpack.c.h.b16 %v46
  %v202 = vunpack.c.l.b16 %v47
  %v203 = vunpack.c.h.b16 %v47
  %v204 = vunpack.c.l.b16 %v48
  %v205 = vunpack.c.h.b16 %v48
  %v206 = vunpack.c.l.b16 %v49
  %v207 = vunpack.c.h.b16 %v49
  %v208 = vunpack.c.l.b16 %v50
  %v209 = vunpack.c.h.b16 %v50
  %v210 = vunpack.c.l.b16 %v51
  %v211 = vunpack.c.h.b16 %v51
  %v212 = vunpack.c.l.b16 %v52
  %v213 = vunpack.c.h.b16 %v52
  %v214 = vunpack.c.l.b16 %v53
  %v215 = vunpack.c.h.b16 %v53
  %v216 = vunpack.c.l.b16 %v54
  %v217 = vunpack.c.h.b16 %v54
  %v218 = vunpack.c.l.b16 %v55
  %v219 = vunpack.c.h.b16 %v55
  %v220 = vunpack.c.l.b16 %v56
  %v221 = vunpack.c.h.b16 %v56
  %v222 = vunpack.c.l.b16 %v57
  %v223 = vunpack.c.h.b16 %v57
  %v224 = vunpack.c.l.b16 %v58
  %v225 = vunpack.c.h.b16 %v58
  %v226 = vunpack.c.l.b16 %v59
  %v227 = vunpack.c.h.b16 %v59
  %v228 = vunpack.c.l.b16 %v60
  %v229 = vunpack.c.h.b16 %v60
  %v230 = vunpack.c.l.b16 %v61
  %v231 = vunpack.c.h.b16 %v61
  %v232 = vunpack.c.l.b16 %v62
  %v233 = vunpack.c.h.b16 %v62
  %v234 = vunpack.c.l.b16 %v63
  %v235 = vunpack.c.h.b16 %v63
  %v236 = vunpack.c.l.b16 %v64
  %v237 = vunpack.c.h.b16 %v64
  %v238 = vunpack.c.l.b16 %v65
  %v239 = vunpack.c.h.b16 %v65
  %v240 = vunpack.c.l.b16 %v66
  %v241 = vunpack.c.h.b16 %v66
  %v242 = vunpack.c.l.b16 %v67
  %v243 = vunpack.c.h.b16 %v67
  %v244 = vunpack.c.l.b16 %v68
  %v245 = vunpack.c.h.b16 %v68
  %v246 = vunpack.c.l.b16 %v69
  %v247 = vunpack.c.h.b16 %v69
  %v248 = vunpack.c.l.b16 %v70
  %v249 = vunpack.c.h.b16 %v70
  %v250 = vunpack.c.l.b16 %v71
  %v251 = vunpack.c.h.b16 %v71
  %v252 = vunpack.c.l.b16 %v72
  %v253 = vunpack.c.h.b16 %v72
  %v254 = vunpack.c.l.b16 %v73
  %v255 = vunpack.c.h.b16 %v73
  %v256 = vunpack.c.l.b16 %v74
  %v257 = vunpack.c.h.b16 %v74
  %v258 = vunpack.c.l.b16 %v75
  %v259 = vunpack.c.h.b16 %v75
  %v260 = vunpack.c.l.b16 %v76
  %v261 = vunpack.c.h.b16 %v76
  %v262 = vunpack.c.l.b16 %v77
  %v263 = vunpack.c.h.b16 %v77
  %v264 = vunpack.c.l.b16 %v78
  %v265 = vunpack.c.h.b16 %v78
  %v266 = vunpack.c.l.b16 %v79
  %v267 = vunpack.c.h.b16 %v79
  %v268 = vunpack.c.l.b16 %v80
  %v269 = vunpack.c.h.b16 %v80
  %v270 = vunpack.c.l.b16 %v81
  %v271 = vunpack.c.h.b16 %v81
  %v272 = vunpack.c.l.b16 %v82
  %v273 = vunpack.c.h.b16 %v82
  %v274 = vunpack.c.l.b16 %v83
  %v275 = vunpack.c.h.b16 %v83
  %v276 = vunpack.c.l.b16 %v84
  %v277 = vunpack.c.h.b16 %v84
  %v278 = vunpack.c.l.b16 %v85
  %v279 = vunpack.c.h.b16 %v85
  %v280 = vunpack.c.l.b16 %v86
  %v281 = vunpack.c.h.b16 %v86
  %v282 = vunpack.c.l.b16 %v87
  %v283 = vunpack.c.h.b16 %v87
  %v284 = vunpack.c.l.b16 %v88
  %v285 = vunpack.c.h.b16 %v88
  %v286 = vunpack.c.l.b16 %v89
  %v287 = vunpack.c.h.b16 %v89
  %v288 = vunpack.c.l.b16 %v90
  %v289 = vunpack.c.h.b16 %v90
  %v290 = vunpack.c.l.b16 %v91
  %v291 = vunpack.c.h.b16 %v91
  %v292 = vunpack.c.l.b16 %v92
  %v293 = vunpack.c.h.b16 %v92
  %v294 = vunpack.c.l.b16 %v93
  %v295 = vunpack.c.h.b16 %v93
  %v296 = vunpack.c.l.b16 %v94
  %v297 = vunpack.c.h.b16 %v94
  %v298 = vunpack.c.l.b16 %v95
  %v299 = vunpack.c.h.b16 %v95
  %v300 = vunpack.c.l.b16 %v96
  %v301 = vunpack.c.h.b16 %v96
  %v302 = vunpack.c.l.b16 %v97
  %v303 = vunpack.c.h.b16 %v97
  %v304 = vunpack.c.l.b16 %v98
  %v305 = vunpack.c.h.b16 %v98
  %v306 = vunpack.c.l.b16 %v99
  %v307 = vunpack.c.h.b16 %v99
  %v308 = vunpack.c.l.b16 %v100
  %v309 = vunpack.c.h.b16 %v100
  %v310 = vunpack.c.l.b16 %v101
  %v311 = vunpack.c.h.b16 %v101
  %v312 = vunpack.c.l.b16 %v102
  %v313 = vunpack.c.h.b16 %v102
  %v314 = vunpack.c.l.b16 %v103
  %v315 = vunpack.c.h.b16 %v103
  %v316 = vunpack.c.l.b16 %v104
  %v317 = vunpack.c.h.b16 %v104
  %v318 = vunpack.c.l.b16 %v105
  %v319 = vunpack.c.h.b16 %v105
  %v320 = vpack.c.b16 %v196, %v192
  %v321 = vpack.c.b16 %v197, %v193
  %v322 = vpack.c.b16 %v198, %v194
  %v323 = vpack.c.b16 %v199, %v195
  %v324 = vpack.c.b16 %v204, %v200
  %v325 = vpack.c.b16 %v205, %v201
  %v326 = vpack.c.b16 %v206, %v202
  %v327 = vpack.c.b16 %v207, %v203
  %v328 = vpack.c.b16 %v212, %v208
  %v329 = vpack.c.b16 %v213, %v209
  %v330 = vpack.c.b16 %v214, %v210
  %v331 = vpack.c.b16 %v215, %v211
  %v332 = vpack.c.b16 %v220, %v216
  %v333 = vpack.c.b16 %v221, %v217
  %v334 = vpack.c.b16 %v222, %v218
  %v335 = vpack.c.b16 %v223, %v219
  %v336 = vpack.c.b16 %v228, %v224
  %v337 = vpack.c.b16 %v229, %v225
  %v338 = vpack.c.b16 %v230, %v226
  %v339 = vpack.c.b16 %v231, %v227
  %v340 = vpack.c.b16 %v236, %v232
  %v341 = vpack.c.b16 %v237, %v233
  %v342 = vpack.c.b16 %v238, %v234
  %v343 = vpack.c.b16 %v239, %v235
  %v344 = vpack.c.b16 %v244, %v240
  %v345 = vpack.c.b16 %v245, %v241
  %v346 = vpack.c.b16 %v246, %v242
  %v347 = vpack.c.b16 %v247, %v243
  %v348 = vpack.c.b16 %v252, %v248
  %v349 = vpack.c.b16 %v253, %v249
  %v350 = vpack.c.b16 %v254, %v250
  %v351 = vpack.c.b16 %v255, %v251
  %v352 = vpack.c.b16 %v260, %v256
  %v353 = vpack.c.b16 %v261, %v257
  %v354 = vpack.c.b16 %v262, %v258
  %v355 = vpack.c.b16 %v263, %v259
  %v356 = vpack.c.b16 %v268, %v264
  %v357 = vpack.c.b16 %v269, %v265
  %v358 = vpack.c.b16 %v270, %v266
  %v359 = vpack.c.b16 %v271, %v267
  %v360 = vpack.c.b16 %v276, %v272
  %v361 = vpack.c.b16 %v277, %v273
  %v362 = vpack.c.b16 %v278, %v274
  %v363 = vpack.c.b16 %v279, %v275
  %v364 = vpack.c.b16 %v284, %v280
  %v365 = vpack.c.b16 %v285, %v281
  %v366 = vpack.c.b16 %v286, %v282
  %v367 = vpack.c.b16 %v287, %v283
  %v368 = vpack.c.b16 %v292, %v288
  %v369 = vpack.c.b16 %v293, %v289
  %v370 = vpack.c.b16 %v294, %v290
  %v371 = vpack.c.b16 %v295, %v291
  %v372 = vpack.c.b16 %v300, %v296
  %v373 = vpack.c.b16 %v301, %v297
  %v374 = vpack.c.b16 %v302, %v298
  %v375 = vpack.c.b16 %v303, %v299
  %v376 = vpack.c.b16 %v308, %v304
  %v377 = vpack.c.b16 %v309, %v305
  %v378 = vpack.c.b16 %v310, %v306
  %v379 = vpack.c.b16 %v311, %v307
  %v380 = vpack.c.b16 %v316, %v312
  %v381 = vpack.c.b16 %v317, %v313
  %v382 = vpack.c.b16 %v318, %v314
  %v383 = vpack.c.b16 %v319, %v315
  %448 = vmatprep.subr.bf16.mxu0 %v349
  %449 = vmatpush1.bf16.msra.mxu0 %v348
  %450 = vmatprep.subr.bf16.mxu0 %v345
  %451 = vmatpush1.bf16.msra.mxu0 %v344
  %452 = vmatprep.subr.bf16.mxu0 %v341
  %453 = vmatpush1.bf16.msra.mxu0 %v340
  %454 = vmatprep.subr.bf16.mxu0 %v337
  %455 = vmatpush1.bf16.msra.mxu0 %v336
  %456 = vmatprep.subr.bf16.mxu0 %v333
  %457 = vmatpush1.bf16.msra.mxu0 %v332
  %458 = vmatprep.subr.bf16.mxu0 %v329
  %459 = vmatpush1.bf16.msra.mxu0 %v328
  %460 = vmatprep.subr.bf16.mxu0 %v325
  %461 = vmatpush1.bf16.msra.mxu0 %v324
  %462 = vmatprep.subr.bf16.mxu0 %v321
  %463 = vmatpush1.bf16.msra.mxu0 %v320
  %464 = vmatprep.subr.bf16.mxu0 %v381
  %465 = vmatpush2.bf16.msra.mxu0 %v380
  %466 = vmatprep.subr.bf16.mxu0 %v377
  %467 = vmatpush2.bf16.msra.mxu0 %v376
  %468 = vmatprep.subr.bf16.mxu0 %v373
  %469 = vmatpush2.bf16.msra.mxu0 %v372
  %470 = vmatprep.subr.bf16.mxu0 %v369
  %471 = vmatpush2.bf16.msra.mxu0 %v368
  %472 = vmatprep.subr.bf16.mxu0 %v365
  %473 = vmatpush2.bf16.msra.mxu0 %v364
  %474 = vmatprep.subr.bf16.mxu0 %v361
  %475 = vmatpush2.bf16.msra.mxu0 %v360
  %476 = vmatprep.subr.bf16.mxu0 %v357
  %477 = vmatpush2.bf16.msra.mxu0 %v356
  %478 = vmatprep.subr.bf16.mxu0 %v353
  %479 = vmatpush2.bf16.msra.mxu0 %v352
  %480 = vmatprep.mubr.bf16.mxu0 %v37
  %481 = vmatmul.mubr.bf16.gmra.mxu0 %v36
  %v482 = vpop.f32.mrf.mxu0
  %v483 = vadd.f32 %v111, %v482
  %v484 = vpop.f32.mrf.mxu0
  %v485 = vadd.f32 %v115, %v484
  %v486 = vpop.f32.mrf.mxu0
  %v487 = vadd.f32 %v111, %v486
  %v488 = vpop.f32.mrf.mxu0
  %v489 = vadd.f32 %v115, %v488
  %490 = vmatprep.mubr.bf16.mxu0 %v39
  %491 = vmatmul.mubr.bf16.gmra.mxu0 %v38
  %v492 = vpop.f32.mrf.mxu0
  %v493 = vadd.f32 %v111, %v492
  %v494 = vpop.f32.mrf.mxu0
  %v495 = vadd.f32 %v115, %v494
  %v496 = vpop.f32.mrf.mxu0
  %v497 = vadd.f32 %v111, %v496
  %v498 = vpop.f32.mrf.mxu0
  %v499 = vadd.f32 %v115, %v498
  %500 = vmatprep.mubr.bf16.mxu0 %v41
  %501 = vmatmul.mubr.bf16.gmra.mxu0 %v40
  %v502 = vpop.f32.mrf.mxu0
  %v503 = vadd.f32 %v111, %v502
  %v504 = vpop.f32.mrf.mxu0
  %v505 = vadd.f32 %v115, %v504
  %v506 = vpop.f32.mrf.mxu0
  %v507 = vadd.f32 %v111, %v506
  %v508 = vpop.f32.mrf.mxu0
  %v509 = vadd.f32 %v115, %v508
  %510 = vdwg.mxu0
  %511 = vmatprep.subr.bf16.mxu0 %v351
  %512 = vmatpush1.bf16.msra.mxu0 %v350
  %513 = vmatprep.subr.bf16.mxu0 %v347
  %514 = vmatpush1.bf16.msra.mxu0 %v346
  %515 = vmatprep.subr.bf16.mxu0 %v343
  %516 = vmatpush1.bf16.msra.mxu0 %v342
  %517 = vmatprep.subr.bf16.mxu0 %v339
  %518 = vmatpush1.bf16.msra.mxu0 %v338
  %519 = vmatprep.subr.bf16.mxu0 %v335
  %520 = vmatpush1.bf16.msra.mxu0 %v334
  %521 = vmatprep.subr.bf16.mxu0 %v331
  %522 = vmatpush1.bf16.msra.mxu0 %v330
  %523 = vmatprep.subr.bf16.mxu0 %v327
  %524 = vmatpush1.bf16.msra.mxu0 %v326
  %525 = vmatprep.subr.bf16.mxu0 %v323
  %526 = vmatpush1.bf16.msra.mxu0 %v322
  %527 = vmatprep.subr.bf16.mxu0 %v383
  %528 = vmatpush2.bf16.msra.mxu0 %v382
  %529 = vmatprep.subr.bf16.mxu0 %v379
  %530 = vmatpush2.bf16.msra.mxu0 %v378
  %531 = vmatprep.subr.bf16.mxu0 %v375
  %532 = vmatpush2.bf16.msra.mxu0 %v374
  %533 = vmatprep.subr.bf16.mxu0 %v371
  %534 = vmatpush2.bf16.msra.mxu0 %v370
  %535 = vmatprep.subr.bf16.mxu0 %v367
  %536 = vmatpush2.bf16.msra.mxu0 %v366
  %537 = vmatprep.subr.bf16.mxu0 %v363
  %538 = vmatpush2.bf16.msra.mxu0 %v362
  %539 = vmatprep.subr.bf16.mxu0 %v359
  %540 = vmatpush2.bf16.msra.mxu0 %v358
  %541 = vmatprep.subr.bf16.mxu0 %v355
  %542 = vmatpush2.bf16.msra.mxu0 %v354
  %543 = vmatprep.mubr.bf16.mxu0 %v37
  %544 = vmatmul.mubr.bf16.gmra.mxu0 %v36
  %v545 = vpop.f32.mrf.mxu0
  %v546 = vadd.f32 %v119, %v545
  %v547 = vpop.f32.mrf.mxu0
  %v548 = vadd.f32 %v123, %v547
  %v549 = vpop.f32.mrf.mxu0
  %v550 = vadd.f32 %v119, %v549
  %v551 = vpop.f32.mrf.mxu0
  %v552 = vadd.f32 %v123, %v551
  %553 = vmatprep.mubr.bf16.mxu0 %v39
  %554 = vmatmul.mubr.bf16.gmra.mxu0 %v38
  %v555 = vpop.f32.mrf.mxu0
  %v556 = vadd.f32 %v119, %v555
  %v557 = vpop.f32.mrf.mxu0
  %v558 = vadd.f32 %v123, %v557
  %v559 = vpop.f32.mrf.mxu0
  %v560 = vadd.f32 %v119, %v559
  %v561 = vpop.f32.mrf.mxu0
  %v562 = vadd.f32 %v123, %v561
  %563 = vmatprep.mubr.bf16.mxu0 %v41
  %564 = vmatmul.mubr.bf16.gmra.mxu0 %v40
  %v565 = vpop.f32.mrf.mxu0
  %v566 = vadd.f32 %v119, %v565
  %v567 = vpop.f32.mrf.mxu0
  %v568 = vadd.f32 %v123, %v567
  %v569 = vpop.f32.mrf.mxu0
  %v570 = vadd.f32 %v119, %v569
  %v571 = vpop.f32.mrf.mxu0
  %v572 = vadd.f32 %v123, %v571
  %573 = vdwg.mxu0
  %v574 = vmax.f32 %v483, 0.0
  %v575 = vmax.f32 %v485, 0.0
  %v576 = vmax.f32 %v487, 0.0
  %v577 = vmax.f32 %v489, 0.0
  %v578 = vmax.f32 %v493, 0.0
  %v579 = vmax.f32 %v495, 0.0
  %v580 = vmax.f32 %v497, 0.0
  %v581 = vmax.f32 %v499, 0.0
  %v582 = vmax.f32 %v503, 0.0
  %v583 = vmax.f32 %v505, 0.0
  %v584 = vmax.f32 %v507, 0.0
  %v585 = vmax.f32 %v509, 0.0
  %v586 = vxor.u32 %v546, 2147483648
  %v587 = vxor.u32 %v548, 2147483648
  %v588 = vxor.u32 %v550, 2147483648
  %v589 = vxor.u32 %v552, 2147483648
  %v590 = vxor.u32 %v556, 2147483648
  %v591 = vxor.u32 %v558, 2147483648
  %v592 = vxor.u32 %v560, 2147483648
  %v593 = vxor.u32 %v562, 2147483648
  %v594 = vxor.u32 %v566, 2147483648
  %v595 = vxor.u32 %v568, 2147483648
  %v596 = vxor.u32 %v570, 2147483648
  %v597 = vxor.u32 %v572, 2147483648
  %v598 = vmul.f32 %v586, 1.442695
  %v599 = vpow.pop %v598
  %v600 = vmul.f32 %v587, 1.442695
  %v601 = vpow.pop %v600
  %v602 = vmul.f32 %v588, 1.442695
  %v603 = vpow.pop %v602
  %v604 = vmul.f32 %v589, 1.442695
  %v605 = vpow.pop %v604
  %v606 = vmul.f32 %v590, 1.442695
  %v607 = vpow.pop %v606
  %v608 = vmul.f32 %v591, 1.442695
  %v609 = vpow.pop %v608
  %v610 = vmul.f32 %v592, 1.442695
  %v611 = vpow.pop %v610
  %v612 = vmul.f32 %v593, 1.442695
  %v613 = vpow.pop %v612
  %v614 = vmul.f32 %v594, 1.442695
  %v615 = vpow.pop %v614
  %v616 = vmul.f32 %v595, 1.442695
  %v617 = vpow.pop %v616
  %v618 = vmul.f32 %v596, 1.442695
  %v619 = vpow.pop %v618
  %v620 = vmul.f32 %v597, 1.442695
  %v621 = vpow.pop %v620
  %v622 = vadd.f32 %v599, 1.0
  %v623 = vadd.f32 %v601, 1.0
  %v624 = vadd.f32 %v603, 1.0
  %v625 = vadd.f32 %v605, 1.0
  %v626 = vadd.f32 %v607, 1.0
  %v627 = vadd.f32 %v609, 1.0
  %v628 = vadd.f32 %v611, 1.0
  %v629 = vadd.f32 %v613, 1.0
  %v630 = vadd.f32 %v615, 1.0
  %v631 = vadd.f32 %v617, 1.0
  %v632 = vadd.f32 %v619, 1.0
  %v633 = vadd.f32 %v621, 1.0
  %v634 = vrcp.pop %v622
  %v635 = vmul.f32 1.0, %v634
  %v636 = vrcp.pop %v623
  %v637 = vmul.f32 1.0, %v636
  %v638 = vrcp.pop %v624
  %v639 = vmul.f32 1.0, %v638
  %v640 = vrcp.pop %v625
  %v641 = vmul.f32 1.0, %v640
  %v642 = vrcp.pop %v626
  %v643 = vmul.f32 1.0, %v642
  %v644 = vrcp.pop %v627
  %v645 = vmul.f32 1.0, %v644
  %v646 = vrcp.pop %v628
  %v647 = vmul.f32 1.0, %v646
  %v648 = vrcp.pop %v629
  %v649 = vmul.f32 1.0, %v648
  %v650 = vrcp.pop %v630
  %v651 = vmul.f32 1.0, %v650
  %v652 = vrcp.pop %v631
  %v653 = vmul.f32 1.0, %v652
  %v654 = vrcp.pop %v632
  %v655 = vmul.f32 1.0, %v654
  %v656 = vrcp.pop %v633
  %v657 = vmul.f32 1.0, %v656
  %v658 = vmul.f32 %v635, %v574
  %v659 = vmul.f32 %v637, %v575
  %v660 = vmul.f32 %v639, %v576
  %v661 = vmul.f32 %v641, %v577
  %v662 = vmul.f32 %v643, %v578
  %v663 = vmul.f32 %v645, %v579
  %v664 = vmul.f32 %v647, %v580
  %v665 = vmul.f32 %v649, %v581
  %v666 = vmul.f32 %v651, %v582
  %v667 = vmul.f32 %v653, %v583
  %v668 = vmul.f32 %v655, %v584
  %v669 = vmul.f32 %v657, %v585
  %v670 = vsub.f32 1.0, %v635
  %v671 = vsub.f32 1.0, %v637
  %v672 = vsub.f32 1.0, %v639
  %v673 = vsub.f32 1.0, %v641
  %v674 = vsub.f32 1.0, %v643
  %v675 = vsub.f32 1.0, %v645
  %v676 = vsub.f32 1.0, %v647
  %v677 = vsub.f32 1.0, %v649
  %v678 = vsub.f32 1.0, %v651
  %v679 = vsub.f32 1.0, %v653
  %v680 = vsub.f32 1.0, %v655
  %v681 = vsub.f32 1.0, %v657
  %v682 = vmul.f32 %v670, %v24
  %v683 = vmul.f32 %v671, %v30
  %v684 = vmul.f32 %v672, %v25
  %v685 = vmul.f32 %v673, %v31
  %v686 = vmul.f32 %v674, %v26
  %v687 = vmul.f32 %v675, %v32
  %v688 = vmul.f32 %v676, %v27
  %v689 = vmul.f32 %v677, %v33
  %v690 = vmul.f32 %v678, %v28
  %v691 = vmul.f32 %v679, %v34
  %v692 = vmul.f32 %v680, %v29
  %v693 = vmul.f32 %v681, %v35
  %v694 = vadd.f32 %v658, %v682
  %v695 = vadd.f32 %v659, %v683
  %v696 = vadd.f32 %v660, %v684
  %v697 = vadd.f32 %v661, %v685
  %v698 = vadd.f32 %v662, %v686
  %v699 = vadd.f32 %v663, %v687
  %v700 = vadd.f32 %v664, %v688
  %v701 = vadd.f32 %v665, %v689
  %v702 = vadd.f32 %v666, %v690
  %v703 = vadd.f32 %v667, %v691
  %v704 = vadd.f32 %v668, %v692
  %v705 = vadd.f32 %v669, %v693
  %v706 = vpack.c.bf16 %v696, %v694
  %v707 = vpack.c.bf16 %v697, %v695
  %v708 = vpack.c.bf16 %v700, %v698
  %v709 = vpack.c.bf16 %v701, %v699
  %v710 = vpack.c.bf16 %v704, %v702
  %v711 = vpack.c.bf16 %v705, %v703
  %s712 = scalar_lea.vmem %s2, 512
  %v713 = vld [vmem:[%s712] sm:$0xff]
  %v714 = vld [vmem:[%s712 + $0x8] sm:$0xff]
  %v715 = vld [vmem:[%s712 + $0x10] sm:$0xff]
  %v716 = vld [vmem:[%s712 + $0x18] sm:$0xff]
  %v717 = vld [vmem:[%s712 + $0x20] sm:$0xff]
  %v718 = vld [vmem:[%s712 + $0x28] sm:$0xff]
  %v719 = vld [vmem:[%s712 + $0x30] sm:$0xff]
  %v720 = vld [vmem:[%s712 + $0x38] sm:$0xff]
  %v721 = vld [vmem:[%s712 + $0x40] sm:$0xff]
  %v722 = vld [vmem:[%s712 + $0x48] sm:$0xff]
  %v723 = vld [vmem:[%s712 + $0x50] sm:$0xff]
  %v724 = vld [vmem:[%s712 + $0x58] sm:$0xff]
  %v725 = vld [vmem:[%s712 + $0x60] sm:$0xff]
  %v726 = vld [vmem:[%s712 + $0x68] sm:$0xff]
  %v727 = vld [vmem:[%s712 + $0x70] sm:$0xff]
  %v728 = vld [vmem:[%s712 + $0x78] sm:$0xff]
  %v729 = vld [vmem:[%s712 + $0x80] sm:$0xff]
  %v730 = vld [vmem:[%s712 + $0x88] sm:$0xff]
  %v731 = vld [vmem:[%s712 + $0x90] sm:$0xff]
  %v732 = vld [vmem:[%s712 + $0x98] sm:$0xff]
  %v733 = vld [vmem:[%s712 + $0xa0] sm:$0xff]
  %v734 = vld [vmem:[%s712 + $0xa8] sm:$0xff]
  %v735 = vld [vmem:[%s712 + $0xb0] sm:$0xff]
  %v736 = vld [vmem:[%s712 + $0xb8] sm:$0xff]
  %v737 = vld [vmem:[%s712 + $0xc0] sm:$0xff]
  %v738 = vld [vmem:[%s712 + $0xc8] sm:$0xff]
  %v739 = vld [vmem:[%s712 + $0xd0] sm:$0xff]
  %v740 = vld [vmem:[%s712 + $0xd8] sm:$0xff]
  %v741 = vld [vmem:[%s712 + $0xe0] sm:$0xff]
  %v742 = vld [vmem:[%s712 + $0xe8] sm:$0xff]
  %v743 = vld [vmem:[%s712 + $0xf0] sm:$0xff]
  %v744 = vld [vmem:[%s712 + $0xf8] sm:$0xff]
  %v745 = vld [vmem:[%s712 + $0x100] sm:$0xff]
  %v746 = vld [vmem:[%s712 + $0x108] sm:$0xff]
  %v747 = vld [vmem:[%s712 + $0x110] sm:$0xff]
  %v748 = vld [vmem:[%s712 + $0x118] sm:$0xff]
  %v749 = vld [vmem:[%s712 + $0x120] sm:$0xff]
  %v750 = vld [vmem:[%s712 + $0x128] sm:$0xff]
  %v751 = vld [vmem:[%s712 + $0x130] sm:$0xff]
  %v752 = vld [vmem:[%s712 + $0x138] sm:$0xff]
  %v753 = vld [vmem:[%s712 + $0x140] sm:$0xff]
  %v754 = vld [vmem:[%s712 + $0x148] sm:$0xff]
  %v755 = vld [vmem:[%s712 + $0x150] sm:$0xff]
  %v756 = vld [vmem:[%s712 + $0x158] sm:$0xff]
  %v757 = vld [vmem:[%s712 + $0x160] sm:$0xff]
  %v758 = vld [vmem:[%s712 + $0x168] sm:$0xff]
  %v759 = vld [vmem:[%s712 + $0x170] sm:$0xff]
  %v760 = vld [vmem:[%s712 + $0x178] sm:$0xff]
  %v761 = vld [vmem:[%s712 + $0x180] sm:$0xff]
  %v762 = vld [vmem:[%s712 + $0x188] sm:$0xff]
  %v763 = vld [vmem:[%s712 + $0x190] sm:$0xff]
  %v764 = vld [vmem:[%s712 + $0x198] sm:$0xff]
  %v765 = vld [vmem:[%s712 + $0x1a0] sm:$0xff]
  %v766 = vld [vmem:[%s712 + $0x1a8] sm:$0xff]
  %v767 = vld [vmem:[%s712 + $0x1b0] sm:$0xff]
  %v768 = vld [vmem:[%s712 + $0x1b8] sm:$0xff]
  %v769 = vld [vmem:[%s712 + $0x1c0] sm:$0xff]
  %v770 = vld [vmem:[%s712 + $0x1c8] sm:$0xff]
  %v771 = vld [vmem:[%s712 + $0x1d0] sm:$0xff]
  %v772 = vld [vmem:[%s712 + $0x1d8] sm:$0xff]
  %v773 = vld [vmem:[%s712 + $0x1e0] sm:$0xff]
  %v774 = vld [vmem:[%s712 + $0x1e8] sm:$0xff]
  %v775 = vld [vmem:[%s712 + $0x1f0] sm:$0xff]
  %v776 = vld [vmem:[%s712 + $0x1f8] sm:$0xff]
  %s777 = scalar_lea.vmem %s3, 4
  %v778 = vld [vmem:[%s777] sm:$0xf]
  %v780 = vlaneseq
  %v781 = vshrl.u32 %v780, 7
  %v782 = vsub.s32 0, %v781
  %v783 = vrot.slane %v778, %v782
  %v784 = vlaneseq
  %v785 = vshrl.u32 %v784, 7
  %v786 = vsub.s32 1, %v785
  %v787 = vrot.slane %v778, %v786
  %v788 = vlaneseq
  %v789 = vshrl.u32 %v788, 7
  %v790 = vsub.s32 2, %v789
  %v791 = vrot.slane %v778, %v790
  %v792 = vlaneseq
  %v793 = vshrl.u32 %v792, 7
  %v794 = vsub.s32 3, %v793
  %v795 = vrot.slane %v778, %v794
  %v864 = vunpack.c.l.b16 %v713
  %v865 = vunpack.c.h.b16 %v713
  %v866 = vunpack.c.l.b16 %v714
  %v867 = vunpack.c.h.b16 %v714
  %v868 = vunpack.c.l.b16 %v715
  %v869 = vunpack.c.h.b16 %v715
  %v870 = vunpack.c.l.b16 %v716
  %v871 = vunpack.c.h.b16 %v716
  %v872 = vunpack.c.l.b16 %v717
  %v873 = vunpack.c.h.b16 %v717
  %v874 = vunpack.c.l.b16 %v718
  %v875 = vunpack.c.h.b16 %v718
  %v876 = vunpack.c.l.b16 %v719
  %v877 = vunpack.c.h.b16 %v719
  %v878 = vunpack.c.l.b16 %v720
  %v879 = vunpack.c.h.b16 %v720
  %v880 = vunpack.c.l.b16 %v721
  %v881 = vunpack.c.h.b16 %v721
  %v882 = vunpack.c.l.b16 %v722
  %v883 = vunpack.c.h.b16 %v722
  %v884 = vunpack.c.l.b16 %v723
  %v885 = vunpack.c.h.b16 %v723
  %v886 = vunpack.c.l.b16 %v724
  %v887 = vunpack.c.h.b16 %v724
  %v888 = vunpack.c.l.b16 %v725
  %v889 = vunpack.c.h.b16 %v725
  %v890 = vunpack.c.l.b16 %v726
  %v891 = vunpack.c.h.b16 %v726
  %v892 = vunpack.c.l.b16 %v727
  %v893 = vunpack.c.h.b16 %v727
  %v894 = vunpack.c.l.b16 %v728
  %v895 = vunpack.c.h.b16 %v728
  %v896 = vunpack.c.l.b16 %v729
  %v897 = vunpack.c.h.b16 %v729
  %v898 = vunpack.c.l.b16 %v730
  %v899 = vunpack.c.h.b16 %v730
  %v900 = vunpack.c.l.b16 %v731
  %v901 = vunpack.c.h.b16 %v731
  %v902 = vunpack.c.l.b16 %v732
  %v903 = vunpack.c.h.b16 %v732
  %v904 = vunpack.c.l.b16 %v733
  %v905 = vunpack.c.h.b16 %v733
  %v906 = vunpack.c.l.b16 %v734
  %v907 = vunpack.c.h.b16 %v734
  %v908 = vunpack.c.l.b16 %v735
  %v909 = vunpack.c.h.b16 %v735
  %v910 = vunpack.c.l.b16 %v736
  %v911 = vunpack.c.h.b16 %v736
  %v912 = vunpack.c.l.b16 %v737
  %v913 = vunpack.c.h.b16 %v737
  %v914 = vunpack.c.l.b16 %v738
  %v915 = vunpack.c.h.b16 %v738
  %v916 = vunpack.c.l.b16 %v739
  %v917 = vunpack.c.h.b16 %v739
  %v918 = vunpack.c.l.b16 %v740
  %v919 = vunpack.c.h.b16 %v740
  %v920 = vunpack.c.l.b16 %v741
  %v921 = vunpack.c.h.b16 %v741
  %v922 = vunpack.c.l.b16 %v742
  %v923 = vunpack.c.h.b16 %v742
  %v924 = vunpack.c.l.b16 %v743
  %v925 = vunpack.c.h.b16 %v743
  %v926 = vunpack.c.l.b16 %v744
  %v927 = vunpack.c.h.b16 %v744
  %v928 = vunpack.c.l.b16 %v745
  %v929 = vunpack.c.h.b16 %v745
  %v930 = vunpack.c.l.b16 %v746
  %v931 = vunpack.c.h.b16 %v746
  %v932 = vunpack.c.l.b16 %v747
  %v933 = vunpack.c.h.b16 %v747
  %v934 = vunpack.c.l.b16 %v748
  %v935 = vunpack.c.h.b16 %v748
  %v936 = vunpack.c.l.b16 %v749
  %v937 = vunpack.c.h.b16 %v749
  %v938 = vunpack.c.l.b16 %v750
  %v939 = vunpack.c.h.b16 %v750
  %v940 = vunpack.c.l.b16 %v751
  %v941 = vunpack.c.h.b16 %v751
  %v942 = vunpack.c.l.b16 %v752
  %v943 = vunpack.c.h.b16 %v752
  %v944 = vunpack.c.l.b16 %v753
  %v945 = vunpack.c.h.b16 %v753
  %v946 = vunpack.c.l.b16 %v754
  %v947 = vunpack.c.h.b16 %v754
  %v948 = vunpack.c.l.b16 %v755
  %v949 = vunpack.c.h.b16 %v755
  %v950 = vunpack.c.l.b16 %v756
  %v951 = vunpack.c.h.b16 %v756
  %v952 = vunpack.c.l.b16 %v757
  %v953 = vunpack.c.h.b16 %v757
  %v954 = vunpack.c.l.b16 %v758
  %v955 = vunpack.c.h.b16 %v758
  %v956 = vunpack.c.l.b16 %v759
  %v957 = vunpack.c.h.b16 %v759
  %v958 = vunpack.c.l.b16 %v760
  %v959 = vunpack.c.h.b16 %v760
  %v960 = vunpack.c.l.b16 %v761
  %v961 = vunpack.c.h.b16 %v761
  %v962 = vunpack.c.l.b16 %v762
  %v963 = vunpack.c.h.b16 %v762
  %v964 = vunpack.c.l.b16 %v763
  %v965 = vunpack.c.h.b16 %v763
  %v966 = vunpack.c.l.b16 %v764
  %v967 = vunpack.c.h.b16 %v764
  %v968 = vunpack.c.l.b16 %v765
  %v969 = vunpack.c.h.b16 %v765
  %v970 = vunpack.c.l.b16 %v766
  %v971 = vunpack.c.h.b16 %v766
  %v972 = vunpack.c.l.b16 %v767
  %v973 = vunpack.c.h.b16 %v767
  %v974 = vunpack.c.l.b16 %v768
  %v975 = vunpack.c.h.b16 %v768
  %v976 = vunpack.c.l.b16 %v769
  %v977 = vunpack.c.h.b16 %v769
  %v978 = vunpack.c.l.b16 %v770
  %v979 = vunpack.c.h.b16 %v770
  %v980 = vunpack.c.l.b16 %v771
  %v981 = vunpack.c.h.b16 %v771
  %v982 = vunpack.c.l.b16 %v772
  %v983 = vunpack.c.h.b16 %v772
  %v984 = vunpack.c.l.b16 %v773
  %v985 = vunpack.c.h.b16 %v773
  %v986 = vunpack.c.l.b16 %v774
  %v987 = vunpack.c.h.b16 %v774
  %v988 = vunpack.c.l.b16 %v775
  %v989 = vunpack.c.h.b16 %v775
  %v990 = vunpack.c.l.b16 %v776
  %v991 = vunpack.c.h.b16 %v776
  %v992 = vpack.c.b16 %v868, %v864
  %v993 = vpack.c.b16 %v869, %v865
  %v994 = vpack.c.b16 %v870, %v866
  %v995 = vpack.c.b16 %v871, %v867
  %v996 = vpack.c.b16 %v876, %v872
  %v997 = vpack.c.b16 %v877, %v873
  %v998 = vpack.c.b16 %v878, %v874
  %v999 = vpack.c.b16 %v879, %v875
  %v1000 = vpack.c.b16 %v884, %v880
  %v1001 = vpack.c.b16 %v885, %v881
  %v1002 = vpack.c.b16 %v886, %v882
  %v1003 = vpack.c.b16 %v887, %v883
  %v1004 = vpack.c.b16 %v892, %v888
  %v1005 = vpack.c.b16 %v893, %v889
  %v1006 = vpack.c.b16 %v894, %v890
  %v1007 = vpack.c.b16 %v895, %v891
  %v1008 = vpack.c.b16 %v900, %v896
  %v1009 = vpack.c.b16 %v901, %v897
  %v1010 = vpack.c.b16 %v902, %v898
  %v1011 = vpack.c.b16 %v903, %v899
  %v1012 = vpack.c.b16 %v908, %v904
  %v1013 = vpack.c.b16 %v909, %v905
  %v1014 = vpack.c.b16 %v910, %v906
  %v1015 = vpack.c.b16 %v911, %v907
  %v1016 = vpack.c.b16 %v916, %v912
  %v1017 = vpack.c.b16 %v917, %v913
  %v1018 = vpack.c.b16 %v918, %v914
  %v1019 = vpack.c.b16 %v919, %v915
  %v1020 = vpack.c.b16 %v924, %v920
  %v1021 = vpack.c.b16 %v925, %v921
  %v1022 = vpack.c.b16 %v926, %v922
  %v1023 = vpack.c.b16 %v927, %v923
  %v1024 = vpack.c.b16 %v932, %v928
  %v1025 = vpack.c.b16 %v933, %v929
  %v1026 = vpack.c.b16 %v934, %v930
  %v1027 = vpack.c.b16 %v935, %v931
  %v1028 = vpack.c.b16 %v940, %v936
  %v1029 = vpack.c.b16 %v941, %v937
  %v1030 = vpack.c.b16 %v942, %v938
  %v1031 = vpack.c.b16 %v943, %v939
  %v1032 = vpack.c.b16 %v948, %v944
  %v1033 = vpack.c.b16 %v949, %v945
  %v1034 = vpack.c.b16 %v950, %v946
  %v1035 = vpack.c.b16 %v951, %v947
  %v1036 = vpack.c.b16 %v956, %v952
  %v1037 = vpack.c.b16 %v957, %v953
  %v1038 = vpack.c.b16 %v958, %v954
  %v1039 = vpack.c.b16 %v959, %v955
  %v1040 = vpack.c.b16 %v964, %v960
  %v1041 = vpack.c.b16 %v965, %v961
  %v1042 = vpack.c.b16 %v966, %v962
  %v1043 = vpack.c.b16 %v967, %v963
  %v1044 = vpack.c.b16 %v972, %v968
  %v1045 = vpack.c.b16 %v973, %v969
  %v1046 = vpack.c.b16 %v974, %v970
  %v1047 = vpack.c.b16 %v975, %v971
  %v1048 = vpack.c.b16 %v980, %v976
  %v1049 = vpack.c.b16 %v981, %v977
  %v1050 = vpack.c.b16 %v982, %v978
  %v1051 = vpack.c.b16 %v983, %v979
  %v1052 = vpack.c.b16 %v988, %v984
  %v1053 = vpack.c.b16 %v989, %v985
  %v1054 = vpack.c.b16 %v990, %v986
  %v1055 = vpack.c.b16 %v991, %v987
  %1120 = vmatprep.subr.bf16.mxu0 %v1021
  %1121 = vmatpush1.bf16.msra.mxu0 %v1020
  %1122 = vmatprep.subr.bf16.mxu0 %v1017
  %1123 = vmatpush1.bf16.msra.mxu0 %v1016
  %1124 = vmatprep.subr.bf16.mxu0 %v1013
  %1125 = vmatpush1.bf16.msra.mxu0 %v1012
  %1126 = vmatprep.subr.bf16.mxu0 %v1009
  %1127 = vmatpush1.bf16.msra.mxu0 %v1008
  %1128 = vmatprep.subr.bf16.mxu0 %v1005
  %1129 = vmatpush1.bf16.msra.mxu0 %v1004
  %1130 = vmatprep.subr.bf16.mxu0 %v1001
  %1131 = vmatpush1.bf16.msra.mxu0 %v1000
  %1132 = vmatprep.subr.bf16.mxu0 %v997
  %1133 = vmatpush1.bf16.msra.mxu0 %v996
  %1134 = vmatprep.subr.bf16.mxu0 %v993
  %1135 = vmatpush1.bf16.msra.mxu0 %v992
  %1136 = vmatprep.subr.bf16.mxu0 %v1053
  %1137 = vmatpush2.bf16.msra.mxu0 %v1052
  %1138 = vmatprep.subr.bf16.mxu0 %v1049
  %1139 = vmatpush2.bf16.msra.mxu0 %v1048
  %1140 = vmatprep.subr.bf16.mxu0 %v1045
  %1141 = vmatpush2.bf16.msra.mxu0 %v1044
  %1142 = vmatprep.subr.bf16.mxu0 %v1041
  %1143 = vmatpush2.bf16.msra.mxu0 %v1040
  %1144 = vmatprep.subr.bf16.mxu0 %v1037
  %1145 = vmatpush2.bf16.msra.mxu0 %v1036
  %1146 = vmatprep.subr.bf16.mxu0 %v1033
  %1147 = vmatpush2.bf16.msra.mxu0 %v1032
  %1148 = vmatprep.subr.bf16.mxu0 %v1029
  %1149 = vmatpush2.bf16.msra.mxu0 %v1028
  %1150 = vmatprep.subr.bf16.mxu0 %v1025
  %1151 = vmatpush2.bf16.msra.mxu0 %v1024
  %1152 = vmatprep.mubr.bf16.mxu0 %v707
  %1153 = vmatmul.mubr.bf16.gmra.mxu0 %v706
  %v1154 = vpop.f32.mrf.mxu0
  %v1155 = vadd.f32 %v783, %v1154
  %v1156 = vpop.f32.mrf.mxu0
  %v1157 = vadd.f32 %v787, %v1156
  %v1158 = vpop.f32.mrf.mxu0
  %v1159 = vadd.f32 %v783, %v1158
  %v1160 = vpop.f32.mrf.mxu0
  %v1161 = vadd.f32 %v787, %v1160
  %1162 = vmatprep.mubr.bf16.mxu0 %v709
  %1163 = vmatmul.mubr.bf16.gmra.mxu0 %v708
  %v1164 = vpop.f32.mrf.mxu0
  %v1165 = vadd.f32 %v783, %v1164
  %v1166 = vpop.f32.mrf.mxu0
  %v1167 = vadd.f32 %v787, %v1166
  %v1168 = vpop.f32.mrf.mxu0
  %v1169 = vadd.f32 %v783, %v1168
  %v1170 = vpop.f32.mrf.mxu0
  %v1171 = vadd.f32 %v787, %v1170
  %1172 = vmatprep.mubr.bf16.mxu0 %v711
  %1173 = vmatmul.mubr.bf16.gmra.mxu0 %v710
  %v1174 = vpop.f32.mrf.mxu0
  %v1175 = vadd.f32 %v783, %v1174
  %v1176 = vpop.f32.mrf.mxu0
  %v1177 = vadd.f32 %v787, %v1176
  %v1178 = vpop.f32.mrf.mxu0
  %v1179 = vadd.f32 %v783, %v1178
  %v1180 = vpop.f32.mrf.mxu0
  %v1181 = vadd.f32 %v787, %v1180
  %1182 = vdwg.mxu0
  %1183 = vmatprep.subr.bf16.mxu0 %v1023
  %1184 = vmatpush1.bf16.msra.mxu0 %v1022
  %1185 = vmatprep.subr.bf16.mxu0 %v1019
  %1186 = vmatpush1.bf16.msra.mxu0 %v1018
  %1187 = vmatprep.subr.bf16.mxu0 %v1015
  %1188 = vmatpush1.bf16.msra.mxu0 %v1014
  %1189 = vmatprep.subr.bf16.mxu0 %v1011
  %1190 = vmatpush1.bf16.msra.mxu0 %v1010
  %1191 = vmatprep.subr.bf16.mxu0 %v1007
  %1192 = vmatpush1.bf16.msra.mxu0 %v1006
  %1193 = vmatprep.subr.bf16.mxu0 %v1003
  %1194 = vmatpush1.bf16.msra.mxu0 %v1002
  %1195 = vmatprep.subr.bf16.mxu0 %v999
  %1196 = vmatpush1.bf16.msra.mxu0 %v998
  %1197 = vmatprep.subr.bf16.mxu0 %v995
  %1198 = vmatpush1.bf16.msra.mxu0 %v994
  %1199 = vmatprep.subr.bf16.mxu0 %v1055
  %1200 = vmatpush2.bf16.msra.mxu0 %v1054
  %1201 = vmatprep.subr.bf16.mxu0 %v1051
  %1202 = vmatpush2.bf16.msra.mxu0 %v1050
  %1203 = vmatprep.subr.bf16.mxu0 %v1047
  %1204 = vmatpush2.bf16.msra.mxu0 %v1046
  %1205 = vmatprep.subr.bf16.mxu0 %v1043
  %1206 = vmatpush2.bf16.msra.mxu0 %v1042
  %1207 = vmatprep.subr.bf16.mxu0 %v1039
  %1208 = vmatpush2.bf16.msra.mxu0 %v1038
  %1209 = vmatprep.subr.bf16.mxu0 %v1035
  %1210 = vmatpush2.bf16.msra.mxu0 %v1034
  %1211 = vmatprep.subr.bf16.mxu0 %v1031
  %1212 = vmatpush2.bf16.msra.mxu0 %v1030
  %1213 = vmatprep.subr.bf16.mxu0 %v1027
  %1214 = vmatpush2.bf16.msra.mxu0 %v1026
  %1215 = vmatprep.mubr.bf16.mxu0 %v707
  %1216 = vmatmul.mubr.bf16.gmra.mxu0 %v706
  %v1217 = vpop.f32.mrf.mxu0
  %v1218 = vadd.f32 %v791, %v1217
  %v1219 = vpop.f32.mrf.mxu0
  %v1220 = vadd.f32 %v795, %v1219
  %v1221 = vpop.f32.mrf.mxu0
  %v1222 = vadd.f32 %v791, %v1221
  %v1223 = vpop.f32.mrf.mxu0
  %v1224 = vadd.f32 %v795, %v1223
  %1225 = vmatprep.mubr.bf16.mxu0 %v709
  %1226 = vmatmul.mubr.bf16.gmra.mxu0 %v708
  %v1227 = vpop.f32.mrf.mxu0
  %v1228 = vadd.f32 %v791, %v1227
  %v1229 = vpop.f32.mrf.mxu0
  %v1230 = vadd.f32 %v795, %v1229
  %v1231 = vpop.f32.mrf.mxu0
  %v1232 = vadd.f32 %v791, %v1231
  %v1233 = vpop.f32.mrf.mxu0
  %v1234 = vadd.f32 %v795, %v1233
  %1235 = vmatprep.mubr.bf16.mxu0 %v711
  %1236 = vmatmul.mubr.bf16.gmra.mxu0 %v710
  %v1237 = vpop.f32.mrf.mxu0
  %v1238 = vadd.f32 %v791, %v1237
  %v1239 = vpop.f32.mrf.mxu0
  %v1240 = vadd.f32 %v795, %v1239
  %v1241 = vpop.f32.mrf.mxu0
  %v1242 = vadd.f32 %v791, %v1241
  %v1243 = vpop.f32.mrf.mxu0
  %v1244 = vadd.f32 %v795, %v1243
  %1245 = vdwg.mxu0
  %v1246 = vmax.f32 %v1155, 0.0
  %v1247 = vmax.f32 %v1157, 0.0
  %v1248 = vmax.f32 %v1159, 0.0
  %v1249 = vmax.f32 %v1161, 0.0
  %v1250 = vmax.f32 %v1165, 0.0
  %v1251 = vmax.f32 %v1167, 0.0
  %v1252 = vmax.f32 %v1169, 0.0
  %v1253 = vmax.f32 %v1171, 0.0
  %v1254 = vmax.f32 %v1175, 0.0
  %v1255 = vmax.f32 %v1177, 0.0
  %v1256 = vmax.f32 %v1179, 0.0
  %v1257 = vmax.f32 %v1181, 0.0
  %v1258 = vxor.u32 %v1218, 2147483648
  %v1259 = vxor.u32 %v1220, 2147483648
  %v1260 = vxor.u32 %v1222, 2147483648
  %v1261 = vxor.u32 %v1224, 2147483648
  %v1262 = vxor.u32 %v1228, 2147483648
  %v1263 = vxor.u32 %v1230, 2147483648
  %v1264 = vxor.u32 %v1232, 2147483648
  %v1265 = vxor.u32 %v1234, 2147483648
  %v1266 = vxor.u32 %v1238, 2147483648
  %v1267 = vxor.u32 %v1240, 2147483648
  %v1268 = vxor.u32 %v1242, 2147483648
  %v1269 = vxor.u32 %v1244, 2147483648
  %v1270 = vmul.f32 %v1258, 1.442695
  %v1271 = vpow.pop %v1270
  %v1272 = vmul.f32 %v1259, 1.442695
  %v1273 = vpow.pop %v1272
  %v1274 = vmul.f32 %v1260, 1.442695
  %v1275 = vpow.pop %v1274
  %v1276 = vmul.f32 %v1261, 1.442695
  %v1277 = vpow.pop %v1276
  %v1278 = vmul.f32 %v1262, 1.442695
  %v1279 = vpow.pop %v1278
  %v1280 = vmul.f32 %v1263, 1.442695
  %v1281 = vpow.pop %v1280
  %v1282 = vmul.f32 %v1264, 1.442695
  %v1283 = vpow.pop %v1282
  %v1284 = vmul.f32 %v1265, 1.442695
  %v1285 = vpow.pop %v1284
  %v1286 = vmul.f32 %v1266, 1.442695
  %v1287 = vpow.pop %v1286
  %v1288 = vmul.f32 %v1267, 1.442695
  %v1289 = vpow.pop %v1288
  %v1290 = vmul.f32 %v1268, 1.442695
  %v1291 = vpow.pop %v1290
  %v1292 = vmul.f32 %v1269, 1.442695
  %v1293 = vpow.pop %v1292
  %v1294 = vadd.f32 %v1271, 1.0
  %v1295 = vadd.f32 %v1273, 1.0
  %v1296 = vadd.f32 %v1275, 1.0
  %v1297 = vadd.f32 %v1277, 1.0
  %v1298 = vadd.f32 %v1279, 1.0
  %v1299 = vadd.f32 %v1281, 1.0
  %v1300 = vadd.f32 %v1283, 1.0
  %v1301 = vadd.f32 %v1285, 1.0
  %v1302 = vadd.f32 %v1287, 1.0
  %v1303 = vadd.f32 %v1289, 1.0
  %v1304 = vadd.f32 %v1291, 1.0
  %v1305 = vadd.f32 %v1293, 1.0
  %v1306 = vrcp.pop %v1294
  %v1307 = vmul.f32 1.0, %v1306
  %v1308 = vrcp.pop %v1295
  %v1309 = vmul.f32 1.0, %v1308
  %v1310 = vrcp.pop %v1296
  %v1311 = vmul.f32 1.0, %v1310
  %v1312 = vrcp.pop %v1297
  %v1313 = vmul.f32 1.0, %v1312
  %v1314 = vrcp.pop %v1298
  %v1315 = vmul.f32 1.0, %v1314
  %v1316 = vrcp.pop %v1299
  %v1317 = vmul.f32 1.0, %v1316
  %v1318 = vrcp.pop %v1300
  %v1319 = vmul.f32 1.0, %v1318
  %v1320 = vrcp.pop %v1301
  %v1321 = vmul.f32 1.0, %v1320
  %v1322 = vrcp.pop %v1302
  %v1323 = vmul.f32 1.0, %v1322
  %v1324 = vrcp.pop %v1303
  %v1325 = vmul.f32 1.0, %v1324
  %v1326 = vrcp.pop %v1304
  %v1327 = vmul.f32 1.0, %v1326
  %v1328 = vrcp.pop %v1305
  %v1329 = vmul.f32 1.0, %v1328
  %v1330 = vmul.f32 %v1307, %v1246
  %v1331 = vmul.f32 %v1309, %v1247
  %v1332 = vmul.f32 %v1311, %v1248
  %v1333 = vmul.f32 %v1313, %v1249
  %v1334 = vmul.f32 %v1315, %v1250
  %v1335 = vmul.f32 %v1317, %v1251
  %v1336 = vmul.f32 %v1319, %v1252
  %v1337 = vmul.f32 %v1321, %v1253
  %v1338 = vmul.f32 %v1323, %v1254
  %v1339 = vmul.f32 %v1325, %v1255
  %v1340 = vmul.f32 %v1327, %v1256
  %v1341 = vmul.f32 %v1329, %v1257
  %v1342 = vsub.f32 1.0, %v1307
  %v1343 = vsub.f32 1.0, %v1309
  %v1344 = vsub.f32 1.0, %v1311
  %v1345 = vsub.f32 1.0, %v1313
  %v1346 = vsub.f32 1.0, %v1315
  %v1347 = vsub.f32 1.0, %v1317
  %v1348 = vsub.f32 1.0, %v1319
  %v1349 = vsub.f32 1.0, %v1321
  %v1350 = vsub.f32 1.0, %v1323
  %v1351 = vsub.f32 1.0, %v1325
  %v1352 = vsub.f32 1.0, %v1327
  %v1353 = vsub.f32 1.0, %v1329
  %v1354 = vmul.f32 %v1342, %v694
  %v1355 = vmul.f32 %v1343, %v695
  %v1356 = vmul.f32 %v1344, %v696
  %v1357 = vmul.f32 %v1345, %v697
  %v1358 = vmul.f32 %v1346, %v698
  %v1359 = vmul.f32 %v1347, %v699
  %v1360 = vmul.f32 %v1348, %v700
  %v1361 = vmul.f32 %v1349, %v701
  %v1362 = vmul.f32 %v1350, %v702
  %v1363 = vmul.f32 %v1351, %v703
  %v1364 = vmul.f32 %v1352, %v704
  %v1365 = vmul.f32 %v1353, %v705
  %v1366 = vadd.f32 %v1330, %v1354
  %v1367 = vadd.f32 %v1331, %v1355
  %v1368 = vadd.f32 %v1332, %v1356
  %v1369 = vadd.f32 %v1333, %v1357
  %v1370 = vadd.f32 %v1334, %v1358
  %v1371 = vadd.f32 %v1335, %v1359
  %v1372 = vadd.f32 %v1336, %v1360
  %v1373 = vadd.f32 %v1337, %v1361
  %v1374 = vadd.f32 %v1338, %v1362
  %v1375 = vadd.f32 %v1339, %v1363
  %v1376 = vadd.f32 %v1340, %v1364
  %v1377 = vadd.f32 %v1341, %v1365
  %v1378 = vpack.c.bf16 %v1368, %v1366
  %v1379 = vpack.c.bf16 %v1369, %v1367
  %v1380 = vpack.c.bf16 %v1372, %v1370
  %v1381 = vpack.c.bf16 %v1373, %v1371
  %v1382 = vpack.c.bf16 %v1376, %v1374
  %v1383 = vpack.c.bf16 %v1377, %v1375
  %v1384 = vld [vmem:[%s4] sm:$0xf]
  %v1385 = vld [vmem:[%s4 + $0x4] sm:$0xf]
  %v1386 = vld [vmem:[%s4 + $0x8] sm:$0xf]
  %v1387 = vld [vmem:[%s4 + $0xc] sm:$0xf]
  %v1388 = vld [vmem:[%s4 + $0x10] sm:$0xf]
  %v1389 = vld [vmem:[%s4 + $0x14] sm:$0xf]
  %v1390 = vld [vmem:[%s4 + $0x18] sm:$0xf]
  %v1391 = vld [vmem:[%s4 + $0x1c] sm:$0xf]
  %v1392 = vld [vmem:[%s4 + $0x20] sm:$0xf]
  %v1393 = vld [vmem:[%s4 + $0x24] sm:$0xf]
  %v1394 = vld [vmem:[%s4 + $0x28] sm:$0xf]
  %v1395 = vld [vmem:[%s4 + $0x2c] sm:$0xf]
  %v1396 = vld [vmem:[%s4 + $0x30] sm:$0xf]
  %v1397 = vld [vmem:[%s4 + $0x34] sm:$0xf]
  %v1398 = vld [vmem:[%s4 + $0x38] sm:$0xf]
  %v1399 = vld [vmem:[%s4 + $0x3c] sm:$0xf]
  %v1400 = vld [vmem:[%s4 + $0x40] sm:$0xf]
  %v1401 = vld [vmem:[%s4 + $0x44] sm:$0xf]
  %v1402 = vld [vmem:[%s4 + $0x48] sm:$0xf]
  %v1403 = vld [vmem:[%s4 + $0x4c] sm:$0xf]
  %v1404 = vld [vmem:[%s4 + $0x50] sm:$0xf]
  %v1405 = vld [vmem:[%s4 + $0x54] sm:$0xf]
  %v1406 = vld [vmem:[%s4 + $0x58] sm:$0xf]
  %v1407 = vld [vmem:[%s4 + $0x5c] sm:$0xf]
  %v1408 = vld [vmem:[%s4 + $0x60] sm:$0xf]
  %v1409 = vld [vmem:[%s4 + $0x64] sm:$0xf]
  %v1410 = vld [vmem:[%s4 + $0x68] sm:$0xf]
  %v1411 = vld [vmem:[%s4 + $0x6c] sm:$0xf]
  %v1412 = vld [vmem:[%s4 + $0x70] sm:$0xf]
  %v1413 = vld [vmem:[%s4 + $0x74] sm:$0xf]
  %v1414 = vld [vmem:[%s4 + $0x78] sm:$0xf]
  %v1415 = vld [vmem:[%s4 + $0x7c] sm:$0xf]
  %v1416 = vld [vmem:[%s5] sm:$0x1]
  %v1418 = vlaneseq
  %v1419 = vshrl.u32 %v1418, 7
  %v1420 = vsub.s32 0, %v1419
  %v1421 = vrot.slane %v1416, %v1420
  %v1455 = vunpack.c.l.b16 %v1384
  %v1456 = vunpack.c.l.b16 %v1385
  %v1457 = vunpack.c.l.b16 %v1386
  %v1458 = vunpack.c.l.b16 %v1387
  %v1459 = vunpack.c.l.b16 %v1388
  %v1460 = vunpack.c.l.b16 %v1389
  %v1461 = vunpack.c.l.b16 %v1390
  %v1462 = vunpack.c.l.b16 %v1391
  %v1463 = vunpack.c.l.b16 %v1392
  %v1464 = vunpack.c.l.b16 %v1393
  %v1465 = vunpack.c.l.b16 %v1394
  %v1466 = vunpack.c.l.b16 %v1395
  %v1467 = vunpack.c.l.b16 %v1396
  %v1468 = vunpack.c.l.b16 %v1397
  %v1469 = vunpack.c.l.b16 %v1398
  %v1470 = vunpack.c.l.b16 %v1399
  %v1471 = vunpack.c.l.b16 %v1400
  %v1472 = vunpack.c.l.b16 %v1401
  %v1473 = vunpack.c.l.b16 %v1402
  %v1474 = vunpack.c.l.b16 %v1403
  %v1475 = vunpack.c.l.b16 %v1404
  %v1476 = vunpack.c.l.b16 %v1405
  %v1477 = vunpack.c.l.b16 %v1406
  %v1478 = vunpack.c.l.b16 %v1407
  %v1479 = vunpack.c.l.b16 %v1408
  %v1480 = vunpack.c.l.b16 %v1409
  %v1481 = vunpack.c.l.b16 %v1410
  %v1482 = vunpack.c.l.b16 %v1411
  %v1483 = vunpack.c.l.b16 %v1412
  %v1484 = vunpack.c.l.b16 %v1413
  %v1485 = vunpack.c.l.b16 %v1414
  %v1486 = vunpack.c.l.b16 %v1415
  %v1487 = vpack.c.b16 %v1456, %v1455
  %v1488 = vpack.c.b16 %v1458, %v1457
  %v1489 = vpack.c.b16 %v1460, %v1459
  %v1490 = vpack.c.b16 %v1462, %v1461
  %v1491 = vpack.c.b16 %v1464, %v1463
  %v1492 = vpack.c.b16 %v1466, %v1465
  %v1493 = vpack.c.b16 %v1468, %v1467
  %v1494 = vpack.c.b16 %v1470, %v1469
  %v1495 = vpack.c.b16 %v1472, %v1471
  %v1496 = vpack.c.b16 %v1474, %v1473
  %v1497 = vpack.c.b16 %v1476, %v1475
  %v1498 = vpack.c.b16 %v1478, %v1477
  %v1499 = vpack.c.b16 %v1480, %v1479
  %v1500 = vpack.c.b16 %v1482, %v1481
  %v1501 = vpack.c.b16 %v1484, %v1483
  %v1502 = vpack.c.b16 %v1486, %v1485
  %1519 = vmatprep.subr.bf16.mxu0 0
  %1520 = vmatpush1.bf16.msra.mxu0 %v1494
  %1521 = vmatprep.subr.bf16.mxu0 0
  %1522 = vmatpush1.bf16.msra.mxu0 %v1493
  %1523 = vmatprep.subr.bf16.mxu0 0
  %1524 = vmatpush1.bf16.msra.mxu0 %v1492
  %1525 = vmatprep.subr.bf16.mxu0 0
  %1526 = vmatpush1.bf16.msra.mxu0 %v1491
  %1527 = vmatprep.subr.bf16.mxu0 0
  %1528 = vmatpush1.bf16.msra.mxu0 %v1490
  %1529 = vmatprep.subr.bf16.mxu0 0
  %1530 = vmatpush1.bf16.msra.mxu0 %v1489
  %1531 = vmatprep.subr.bf16.mxu0 0
  %1532 = vmatpush1.bf16.msra.mxu0 %v1488
  %1533 = vmatprep.subr.bf16.mxu0 0
  %1534 = vmatpush1.bf16.msra.mxu0 %v1487
  %1535 = vmatprep.subr.bf16.mxu0 0
  %1536 = vmatpush2.bf16.msra.mxu0 %v1502
  %1537 = vmatprep.subr.bf16.mxu0 0
  %1538 = vmatpush2.bf16.msra.mxu0 %v1501
  %1539 = vmatprep.subr.bf16.mxu0 0
  %1540 = vmatpush2.bf16.msra.mxu0 %v1500
  %1541 = vmatprep.subr.bf16.mxu0 0
  %1542 = vmatpush2.bf16.msra.mxu0 %v1499
  %1543 = vmatprep.subr.bf16.mxu0 0
  %1544 = vmatpush2.bf16.msra.mxu0 %v1498
  %1545 = vmatprep.subr.bf16.mxu0 0
  %1546 = vmatpush2.bf16.msra.mxu0 %v1497
  %1547 = vmatprep.subr.bf16.mxu0 0
  %1548 = vmatpush2.bf16.msra.mxu0 %v1496
  %1549 = vmatprep.subr.bf16.mxu0 0
  %1550 = vmatpush2.bf16.msra.mxu0 %v1495
  %1551 = vmatprep.mubr.bf16.mxu0 %v1379
  %1552 = vmatmul.mubr.bf16.gmra.mxu0 %v1378
  %v1553 = vpop.f32.mrf.mxu0
  %v1554 = vadd.f32 %v1421, %v1553
  %v1555 = vpop.f32.mrf.mxu0
  %v1556 = vpop.f32.mrf.mxu0
  %v1557 = vadd.f32 %v1421, %v1556
  %v1558 = vpop.f32.mrf.mxu0
  %1559 = vmatprep.mubr.bf16.mxu0 %v1381
  %1560 = vmatmul.mubr.bf16.gmra.mxu0 %v1380
  %v1561 = vpop.f32.mrf.mxu0
  %v1562 = vadd.f32 %v1421, %v1561
  %v1563 = vpop.f32.mrf.mxu0
  %v1564 = vpop.f32.mrf.mxu0
  %v1565 = vadd.f32 %v1421, %v1564
  %v1566 = vpop.f32.mrf.mxu0
  %1567 = vmatprep.mubr.bf16.mxu0 %v1383
  %1568 = vmatmul.mubr.bf16.gmra.mxu0 %v1382
  %v1569 = vpop.f32.mrf.mxu0
  %v1570 = vadd.f32 %v1421, %v1569
  %v1571 = vpop.f32.mrf.mxu0
  %v1572 = vpop.f32.mrf.mxu0
  %v1573 = vadd.f32 %v1421, %v1572
  %v1574 = vpop.f32.mrf.mxu0
  %1575 = vdwg.mxu0
  %v1576 = vtanh.pop %v1554
  %v1577 = vtanh.pop %v1557
  %v1578 = vtanh.pop %v1562
  %v1579 = vtanh.pop %v1565
  %v1580 = vtanh.pop %v1570
  %v1581 = vtanh.pop %v1573
  %1582 = vst [vmem:[%s6] sm:$0xff] %v1576
  %1583 = vst [vmem:[%s6 + $0x8] sm:$0xff] %v1577
  %1584 = vst [vmem:[%s6 + $0x10] sm:$0xff] %v1578
  %1585 = vst [vmem:[%s6 + $0x18] sm:$0xff] %v1579
  %1586 = vst [vmem:[%s6 + $0x20] sm:$0xff] %v1580
  %1587 = vst [vmem:[%s6 + $0x28] sm:$0xff] %v1581
  // Predicated region
  $region26: #{_lambda_.4} parent=0 // pred_check
    _
  $region27: #{_lambda_.4} parent=0 // pred_check_branch
    %1589 = sbr.rel (0) target = $region29
  $region28: #{_lambda_.4} parent=0 // pred_region
    _
  $region29: #{_lambda_.4} parent=0 // pred_fallthru
    _
  // Predicated region
  $region30: #{_lambda_.4} parent=0 // pred_check
    _
  $region31: #{_lambda_.4} parent=0 // pred_check_branch
    %1591 = sbr.rel (0) target = $region33
  $region32: #{_lambda_.4} parent=0 // pred_region
    _
  $region33: #{_lambda_.4} parent=0 // pred_fallthru
    _

// kernel: _lambda_.5
$region0: #{_lambda_.5}
  #allocation0 [shape = 'u32[]', space=smem, size = 0x4, offset = 0x4, fixed_abs, tag = 'smem constant byte address 0x4 - core index']
  #allocation1 [shape = 'u32[144,128]{1,0:T(1,128)}', space=vmem, size = 0x12000, scoped, tag = 'internal scratch']
  #allocation2 [shape = 'f32[1,1]{1,0:T(1,128)S(1)}', space=vmem, size = 0x200, scoped, tag = 'scoped memory for _lambda_.5']
  #allocation3 [shape = 'f32[1,1]{1,0:T(1,128)S(1)}', space=vmem, size = 0x200, scoped, tag = 'scoped memory for _lambda_.5']
  #allocation4 [shape = 'f32[1,1]{1,0:T(1,128)S(1)}', space=vmem, size = 0x200, scoped, tag = 'scoped memory for _lambda_.5']
  %s0 = inlined_call_operand.vmem [shape: f32[2,16,128], index: 0, kind: input, shape index: {}]
  %s1 = inlined_call_operand.vmem [shape: f32[2,8,128], index: 1, kind: input, shape index: {}]
  %s2 = inlined_call_operand.vmem [shape: f32[2,16,1], index: 2, kind: input, shape index: {}]
  %s3 = inlined_call_operand.vmem [shape: f32[2,1,8], index: 3, kind: input, shape index: {}]
  %s4 = inlined_call_operand.vmem [shape: f32[2,1,8], index: 4, kind: input, shape index: {}]
  %s5 = inlined_call_operand.vmem [shape: f32[1,128], index: 5, kind: input, shape index: {}]
  %s6 = inlined_call_operand.vmem [shape: f32[1,128], index: 6, kind: input, shape index: {}]
  %s7 = inlined_call_operand.<no memory space> [shape: f32[1,1], index: 7, kind: input, shape index: {}]
  %s8 = inlined_call_operand.vmem [shape: bf16[512,128], index: 8, kind: input, shape index: {}]
  %s9 = inlined_call_operand.vmem [shape: f32[1,128], index: 9, kind: input, shape index: {}]
  %s10 = inlined_call_operand.vmem [shape: bf16[128,128], index: 10, kind: input, shape index: {}]
  %s11 = inlined_call_operand.vmem [shape: f32[1,128], index: 11, kind: input, shape index: {}]
  %s12 = inlined_call_operand.vmem [shape: f32[1,640], index: 12, kind: input, shape index: {}]
  %s13 = inlined_call_operand.<no memory space> [shape: f32[1,1], index: 13, kind: input, shape index: {}]
  %s14 = inlined_call_operand.vmem [shape: bf16[896,128], index: 14, kind: input, shape index: {}]
  %s15 = inlined_call_operand.vmem [shape: f32[1,128], index: 15, kind: input, shape index: {}]
  %s16 = inlined_call_operand.vmem [shape: f32[1,640], index: 16, kind: input, shape index: {}]
  %s17 = inlined_call_operand.<no memory space> [shape: f32[1,1], index: 17, kind: input, shape index: {}]
  %s18 = inlined_call_operand.vmem [shape: f32[2,1,16], index: 18, kind: output, shape index: {0}]
  %s19 = inlined_call_operand.vmem [shape: f32[2,1,16], index: 19, kind: output, shape index: {1}]
  %20 = xla_tuple %s18, %s19
  %s21 = sld [smem:[#allocation0]]
  $region113: #{_lambda_.5} parent=0
    _
  %s23 = ssub.s32 1, %s21
  %s24 = scalar_select 0, %s23, %s21
  %v25 = vstv %s7
  %26 = vst [vmem:[#allocation2] sm:$0x1] %v25
  %v27 = vstv %s13
  %28 = vst [vmem:[#allocation3] sm:$0x1] %v27
  %v29 = vstv %s17
  %30 = vst [vmem:[#allocation4] sm:$0x1] %v29
  loop: start=0, step=1, limit=4
  $region2: #{_lambda_.5} parent=0 // loop_pre_header
    _
  $region3: #{_lambda_.5} parent=0 // loop_header
    %s32 = sphi 0, %s36
    %p33 = scmp.ge.s32.totalorder %s32, 4
    %s42 = sphi 0, %s44
    %s45 = sphi 0, %s42
    %s46 = sphi 0, %s45
    %s62 = sphi 0, %s46
    %s68 = sphi 0, %s70
    %s71 = sphi 0, %s68
    %s72 = sphi 0, %s71
    %s88 = sphi 0, %s72
    %s94 = sphi 0, %s96
    %s97 = sphi 0, %s94
    %s98 = sphi 0, %s97
    %s114 = sphi 0, %s98
    %s120 = sphi 0, %s122
    %s123 = sphi 0, %s120
    %s124 = sphi 0, %s123
    %s140 = sphi 0, %s124
    %s146 = sphi 0, %s148
    %s149 = sphi 0, %s146
    %s150 = sphi 0, %s149
    %s166 = sphi 0, %s150
    %s170 = sphi 0, %s170
    %s172 = sphi 0, %s170
    %s173 = sphi 0, %s172
    %s187 = sphi 0, %s173
    %s191 = sphi 0, %s191
    %s193 = sphi 0, %s191
    %s194 = sphi 0, %s193
    %s208 = sphi 0, %s194
    %s212 = sphi 0, %s212
    %s214 = sphi 0, %s212
    %s215 = sphi 0, %s214
    %s229 = sphi 0, %s215
    %s233 = sphi 0, %s233
    %s235 = sphi 0, %s233
    %s236 = sphi 0, %s235
    %s250 = sphi 0, %s236
    %s254 = sphi 0, %s254
    %s256 = sphi 0, %s254
    %s257 = sphi 0, %s256
    %s271 = sphi 0, %s257
    %s275 = sphi 0, %s275
    %s277 = sphi 0, %s275
    %s278 = sphi 0, %s277
    %s292 = sphi 0, %s278
    %s296 = sphi 0, %s296
    %s298 = sphi 0, %s296
    %s299 = sphi 0, %s298
    %s313 = sphi 0, %s299
    %s317 = sphi 0, %s317
    %s319 = sphi 0, %s317
    %s320 = sphi 0, %s319
    %s334 = sphi 0, %s320
    %s338 = sphi 0, %s338
    %s340 = sphi 0, %s338
    %s341 = sphi 0, %s340
    %s355 = sphi 0, %s341
    %s359 = sphi 0, %s359
    %s361 = sphi 0, %s359
    %s362 = sphi 0, %s361
    %s376 = sphi 0, %s362
    %s380 = sphi 0, %s380
    %s382 = sphi 0, %s380
    %s383 = sphi 0, %s382
    %s397 = sphi 0, %s383
    %s401 = sphi 0, %s401
    %s403 = sphi 0, %s401
    %s404 = sphi 0, %s403
    %s418 = sphi 0, %s404
    %s422 = sphi 0, %s422
    %s424 = sphi 0, %s422
    %s425 = sphi 0, %s424
    %s439 = sphi 0, %s425
    %s445 = sphi 0, %s447
    %s448 = sphi 0, %s445
    %s449 = sphi 0, %s448
    %s465 = sphi 0, %s449
    %s471 = sphi 0, %s473
    %s474 = sphi 0, %s471
    %s475 = sphi 0, %s474
    %s491 = sphi 0, %s475
  $region4: #{_lambda_.5} parent=0 // loop_header_branch
    %35 = sbr.rel (%p33) target = $region8
  $region5: #{_lambda_.5} parent=0 // loop_body
    %s37 = ssub.s32 %s32, 1
    %s38 = ssub.s32 %s32, 2
    %s39 = sadd.s32 %s32, 1
    %s40 = ssub.s32 %s32, %s39
    %p41 = scmp.eq.s32.totalorder %s40, 0
    %s43 = sadd.s32 %s42, 1
    %s44 = scalar_select %p41, %s42, %s43
    %p47 = pneg %p41
    %p48 = scmp.eq.s32.totalorder %s32, 1
    %p49 = por %p47, %p48
    %p50 = scmp.ne.s32.totalorder %s42, %s45
    %p51 = scmp.eq.s32.totalorder %s32, 0
    %p52 = por %p50, %p51
    %p53 = scmp.ne.s32.totalorder %s42, %s45
    %p54 = scmp.eq.s32.totalorder %s37, 1
    %p55 = por %p53, %p54
    %p56 = scmp.ne.s32.totalorder %s45, %s46
    %p57 = scmp.eq.s32.totalorder %s37, 0
    %p58 = por %p56, %p57
    %p59 = scmp.ne.s32.totalorder %s45, %s46
    %p60 = scmp.eq.s32.totalorder %s38, 1
    %p61 = por %p59, %p60
    %p63 = scmp.ne.s32.totalorder %s46, %s62
    %p64 = scmp.eq.s32.totalorder %s38, 0
    %p65 = por %p63, %p64
    %s66 = ssub.s32 %s32, %s39
    %p67 = scmp.eq.s32.totalorder %s66, 0
    %s69 = sadd.s32 %s68, 1
    %s70 = scalar_select %p67, %s68, %s69
    %p73 = pneg %p67
    %p74 = scmp.eq.s32.totalorder %s32, 1
    %p75 = por %p73, %p74
    %p76 = scmp.ne.s32.totalorder %s68, %s71
    %p77 = scmp.eq.s32.totalorder %s32, 0
    %p78 = por %p76, %p77
    %p79 = scmp.ne.s32.totalorder %s68, %s71
    %p80 = scmp.eq.s32.totalorder %s37, 1
    %p81 = por %p79, %p80
    %p82 = scmp.ne.s32.totalorder %s71, %s72
    %p83 = scmp.eq.s32.totalorder %s37, 0
    %p84 = por %p82, %p83
    %p85 = scmp.ne.s32.totalorder %s71, %s72
    %p86 = scmp.eq.s32.totalorder %s38, 1
    %p87 = por %p85, %p86
    %p89 = scmp.ne.s32.totalorder %s72, %s88
    %p90 = scmp.eq.s32.totalorder %s38, 0
    %p91 = por %p89, %p90
    %s92 = ssub.s32 %s32, %s39
    %p93 = scmp.eq.s32.totalorder %s92, 0
    %s95 = sadd.s32 %s94, 1
    %s96 = scalar_select %p93, %s94, %s95
    %p99 = pneg %p93
    %p100 = scmp.eq.s32.totalorder %s32, 1
    %p101 = por %p99, %p100
    %p102 = scmp.ne.s32.totalorder %s94, %s97
    %p103 = scmp.eq.s32.totalorder %s32, 0
    %p104 = por %p102, %p103
    %p105 = scmp.ne.s32.totalorder %s94, %s97
    %p106 = scmp.eq.s32.totalorder %s37, 1
    %p107 = por %p105, %p106
    %p108 = scmp.ne.s32.totalorder %s97, %s98
    %p109 = scmp.eq.s32.totalorder %s37, 0
    %p110 = por %p108, %p109
    %p111 = scmp.ne.s32.totalorder %s97, %s98
    %p112 = scmp.eq.s32.totalorder %s38, 1
    %p113 = por %p111, %p112
    %p115 = scmp.ne.s32.totalorder %s98, %s114
    %p116 = scmp.eq.s32.totalorder %s38, 0
    %p117 = por %p115, %p116
    %s118 = ssub.s32 %s32, %s39
    %p119 = scmp.eq.s32.totalorder %s118, 0
    %s121 = sadd.s32 %s120, 1
    %s122 = scalar_select %p119, %s120, %s121
    %p125 = pneg %p119
    %p126 = scmp.eq.s32.totalorder %s32, 1
    %p127 = por %p125, %p126
    %p128 = scmp.ne.s32.totalorder %s120, %s123
    %p129 = scmp.eq.s32.totalorder %s32, 0
    %p130 = por %p128, %p129
    %p131 = scmp.ne.s32.totalorder %s120, %s123
    %p132 = scmp.eq.s32.totalorder %s37, 1
    %p133 = por %p131, %p132
    %p134 = scmp.ne.s32.totalorder %s123, %s124
    %p135 = scmp.eq.s32.totalorder %s37, 0
    %p136 = por %p134, %p135
    %p137 = scmp.ne.s32.totalorder %s123, %s124
    %p138 = scmp.eq.s32.totalorder %s38, 1
    %p139 = por %p137, %p138
    %p141 = scmp.ne.s32.totalorder %s124, %s140
    %p142 = scmp.eq.s32.totalorder %s38, 0
    %p143 = por %p141, %p142
    %s144 = ssub.s32 %s32, %s39
    %p145 = scmp.eq.s32.totalorder %s144, 0
    %s147 = sadd.s32 %s146, 1
    %s148 = scalar_select %p145, %s146, %s147
    %p151 = pneg %p145
    %p152 = scmp.eq.s32.totalorder %s32, 1
    %p153 = por %p151, %p152
    %p154 = scmp.ne.s32.totalorder %s146, %s149
    %p155 = scmp.eq.s32.totalorder %s32, 0
    %p156 = por %p154, %p155
    %p157 = scmp.ne.s32.totalorder %s146, %s149
    %p158 = scmp.eq.s32.totalorder %s37, 1
    %p159 = por %p157, %p158
    %p160 = scmp.ne.s32.totalorder %s149, %s150
    %p161 = scmp.eq.s32.totalorder %s37, 0
    %p162 = por %p160, %p161
    %p163 = scmp.ne.s32.totalorder %s149, %s150
    %p164 = scmp.eq.s32.totalorder %s38, 1
    %p165 = por %p163, %p164
    %p167 = scmp.ne.s32.totalorder %s150, %s166
    %p168 = scmp.eq.s32.totalorder %s38, 0
    %p169 = por %p167, %p168
    %s171 = sadd.s32 %s170, 1
    %p174 = scmp.eq.s32.totalorder %s32, 1
    %p175 = scmp.ne.s32.totalorder %s170, %s172
    %p176 = scmp.eq.s32.totalorder %s32, 0
    %p177 = por %p175, %p176
    %p178 = scmp.ne.s32.totalorder %s170, %s172
    %p179 = scmp.eq.s32.totalorder %s37, 1
    %p180 = por %p178, %p179
    %p181 = scmp.ne.s32.totalorder %s172, %s173
    %p182 = scmp.eq.s32.totalorder %s37, 0
    %p183 = por %p181, %p182
    %p184 = scmp.ne.s32.totalorder %s172, %s173
    %p185 = scmp.eq.s32.totalorder %s38, 1
    %p186 = por %p184, %p185
    %p188 = scmp.ne.s32.totalorder %s173, %s187
    %p189 = scmp.eq.s32.totalorder %s38, 0
    %p190 = por %p188, %p189
    %s192 = sadd.s32 %s191, 1
    %p195 = scmp.eq.s32.totalorder %s32, 1
    %p196 = scmp.ne.s32.totalorder %s191, %s193
    %p197 = scmp.eq.s32.totalorder %s32, 0
    %p198 = por %p196, %p197
    %p199 = scmp.ne.s32.totalorder %s191, %s193
    %p200 = scmp.eq.s32.totalorder %s37, 1
    %p201 = por %p199, %p200
    %p202 = scmp.ne.s32.totalorder %s193, %s194
    %p203 = scmp.eq.s32.totalorder %s37, 0
    %p204 = por %p202, %p203
    %p205 = scmp.ne.s32.totalorder %s193, %s194
    %p206 = scmp.eq.s32.totalorder %s38, 1
    %p207 = por %p205, %p206
    %p209 = scmp.ne.s32.totalorder %s194, %s208
    %p210 = scmp.eq.s32.totalorder %s38, 0
    %p211 = por %p209, %p210
    %s213 = sadd.s32 %s212, 1
    %p216 = scmp.eq.s32.totalorder %s32, 1
    %p217 = scmp.ne.s32.totalorder %s212, %s214
    %p218 = scmp.eq.s32.totalorder %s32, 0
    %p219 = por %p217, %p218
    %p220 = scmp.ne.s32.totalorder %s212, %s214
    %p221 = scmp.eq.s32.totalorder %s37, 1
    %p222 = por %p220, %p221
    %p223 = scmp.ne.s32.totalorder %s214, %s215
    %p224 = scmp.eq.s32.totalorder %s37, 0
    %p225 = por %p223, %p224
    %p226 = scmp.ne.s32.totalorder %s214, %s215
    %p227 = scmp.eq.s32.totalorder %s38, 1
    %p228 = por %p226, %p227
    %p230 = scmp.ne.s32.totalorder %s215, %s229
    %p231 = scmp.eq.s32.totalorder %s38, 0
    %p232 = por %p230, %p231
    %s234 = sadd.s32 %s233, 1
    %p237 = scmp.eq.s32.totalorder %s32, 1
    %p238 = scmp.ne.s32.totalorder %s233, %s235
    %p239 = scmp.eq.s32.totalorder %s32, 0
    %p240 = por %p238, %p239
    %p241 = scmp.ne.s32.totalorder %s233, %s235
    %p242 = scmp.eq.s32.totalorder %s37, 1
    %p243 = por %p241, %p242
    %p244 = scmp.ne.s32.totalorder %s235, %s236
    %p245 = scmp.eq.s32.totalorder %s37, 0
    %p246 = por %p244, %p245
    %p247 = scmp.ne.s32.totalorder %s235, %s236
    %p248 = scmp.eq.s32.totalorder %s38, 1
    %p249 = por %p247, %p248
    %p251 = scmp.ne.s32.totalorder %s236, %s250
    %p252 = scmp.eq.s32.totalorder %s38, 0
    %p253 = por %p251, %p252
    %s255 = sadd.s32 %s254, 1
    %p258 = scmp.eq.s32.totalorder %s32, 1
    %p259 = scmp.ne.s32.totalorder %s254, %s256
    %p260 = scmp.eq.s32.totalorder %s32, 0
    %p261 = por %p259, %p260
    %p262 = scmp.ne.s32.totalorder %s254, %s256
    %p263 = scmp.eq.s32.totalorder %s37, 1
    %p264 = por %p262, %p263
    %p265 = scmp.ne.s32.totalorder %s256, %s257
    %p266 = scmp.eq.s32.totalorder %s37, 0
    %p267 = por %p265, %p266
    %p268 = scmp.ne.s32.totalorder %s256, %s257
    %p269 = scmp.eq.s32.totalorder %s38, 1
    %p270 = por %p268, %p269
    %p272 = scmp.ne.s32.totalorder %s257, %s271
    %p273 = scmp.eq.s32.totalorder %s38, 0
    %p274 = por %p272, %p273
    %s276 = sadd.s32 %s275, 1
    %p279 = scmp.eq.s32.totalorder %s32, 1
    %p280 = scmp.ne.s32.totalorder %s275, %s277
    %p281 = scmp.eq.s32.totalorder %s32, 0
    %p282 = por %p280, %p281
    %p283 = scmp.ne.s32.totalorder %s275, %s277
    %p284 = scmp.eq.s32.totalorder %s37, 1
    %p285 = por %p283, %p284
    %p286 = scmp.ne.s32.totalorder %s277, %s278
    %p287 = scmp.eq.s32.totalorder %s37, 0
    %p288 = por %p286, %p287
    %p289 = scmp.ne.s32.totalorder %s277, %s278
    %p290 = scmp.eq.s32.totalorder %s38, 1
    %p291 = por %p289, %p290
    %p293 = scmp.ne.s32.totalorder %s278, %s292
    %p294 = scmp.eq.s32.totalorder %s38, 0
    %p295 = por %p293, %p294
    %s297 = sadd.s32 %s296, 1
    %p300 = scmp.eq.s32.totalorder %s32, 1
    %p301 = scmp.ne.s32.totalorder %s296, %s298
    %p302 = scmp.eq.s32.totalorder %s32, 0
    %p303 = por %p301, %p302
    %p304 = scmp.ne.s32.totalorder %s296, %s298
    %p305 = scmp.eq.s32.totalorder %s37, 1
    %p306 = por %p304, %p305
    %p307 = scmp.ne.s32.totalorder %s298, %s299
    %p308 = scmp.eq.s32.totalorder %s37, 0
    %p309 = por %p307, %p308
    %p310 = scmp.ne.s32.totalorder %s298, %s299
    %p311 = scmp.eq.s32.totalorder %s38, 1
    %p312 = por %p310, %p311
    %p314 = scmp.ne.s32.totalorder %s299, %s313
    %p315 = scmp.eq.s32.totalorder %s38, 0
    %p316 = por %p314, %p315
    %s318 = sadd.s32 %s317, 1
    %p321 = scmp.eq.s32.totalorder %s32, 1
    %p322 = scmp.ne.s32.totalorder %s317, %s319
    %p323 = scmp.eq.s32.totalorder %s32, 0
    %p324 = por %p322, %p323
    %p325 = scmp.ne.s32.totalorder %s317, %s319
    %p326 = scmp.eq.s32.totalorder %s37, 1
    %p327 = por %p325, %p326
    %p328 = scmp.ne.s32.totalorder %s319, %s320
    %p329 = scmp.eq.s32.totalorder %s37, 0
    %p330 = por %p328, %p329
    %p331 = scmp.ne.s32.totalorder %s319, %s320
    %p332 = scmp.eq.s32.totalorder %s38, 1
    %p333 = por %p331, %p332
    %p335 = scmp.ne.s32.totalorder %s320, %s334
    %p336 = scmp.eq.s32.totalorder %s38, 0
    %p337 = por %p335, %p336
    %s339 = sadd.s32 %s338, 1
    %p342 = scmp.eq.s32.totalorder %s32, 1
    %p343 = scmp.ne.s32.totalorder %s338, %s340
    %p344 = scmp.eq.s32.totalorder %s32, 0
    %p345 = por %p343, %p344
    %p346 = scmp.ne.s32.totalorder %s338, %s340
    %p347 = scmp.eq.s32.totalorder %s37, 1
    %p348 = por %p346, %p347
    %p349 = scmp.ne.s32.totalorder %s340, %s341
    %p350 = scmp.eq.s32.totalorder %s37, 0
    %p351 = por %p349, %p350
    %p352 = scmp.ne.s32.totalorder %s340, %s341
    %p353 = scmp.eq.s32.totalorder %s38, 1
    %p354 = por %p352, %p353
    %p356 = scmp.ne.s32.totalorder %s341, %s355
    %p357 = scmp.eq.s32.totalorder %s38, 0
    %p358 = por %p356, %p357
    %s360 = sadd.s32 %s359, 1
    %p363 = scmp.eq.s32.totalorder %s32, 1
    %p364 = scmp.ne.s32.totalorder %s359, %s361
    %p365 = scmp.eq.s32.totalorder %s32, 0
    %p366 = por %p364, %p365
    %p367 = scmp.ne.s32.totalorder %s359, %s361
    %p368 = scmp.eq.s32.totalorder %s37, 1
    %p369 = por %p367, %p368
    %p370 = scmp.ne.s32.totalorder %s361, %s362
    %p371 = scmp.eq.s32.totalorder %s37, 0
    %p372 = por %p370, %p371
    %p373 = scmp.ne.s32.totalorder %s361, %s362
    %p374 = scmp.eq.s32.totalorder %s38, 1
    %p375 = por %p373, %p374
    %p377 = scmp.ne.s32.totalorder %s362, %s376
    %p378 = scmp.eq.s32.totalorder %s38, 0
    %p379 = por %p377, %p378
    %s381 = sadd.s32 %s380, 1
    %p384 = scmp.eq.s32.totalorder %s32, 1
    %p385 = scmp.ne.s32.totalorder %s380, %s382
    %p386 = scmp.eq.s32.totalorder %s32, 0
    %p387 = por %p385, %p386
    %p388 = scmp.ne.s32.totalorder %s380, %s382
    %p389 = scmp.eq.s32.totalorder %s37, 1
    %p390 = por %p388, %p389
    %p391 = scmp.ne.s32.totalorder %s382, %s383
    %p392 = scmp.eq.s32.totalorder %s37, 0
    %p393 = por %p391, %p392
    %p394 = scmp.ne.s32.totalorder %s382, %s383
    %p395 = scmp.eq.s32.totalorder %s38, 1
    %p396 = por %p394, %p395
    %p398 = scmp.ne.s32.totalorder %s383, %s397
    %p399 = scmp.eq.s32.totalorder %s38, 0
    %p400 = por %p398, %p399
    %s402 = sadd.s32 %s401, 1
    %p405 = scmp.eq.s32.totalorder %s32, 1
    %p406 = scmp.ne.s32.totalorder %s401, %s403
    %p407 = scmp.eq.s32.totalorder %s32, 0
    %p408 = por %p406, %p407
    %p409 = scmp.ne.s32.totalorder %s401, %s403
    %p410 = scmp.eq.s32.totalorder %s37, 1
    %p411 = por %p409, %p410
    %p412 = scmp.ne.s32.totalorder %s403, %s404
    %p413 = scmp.eq.s32.totalorder %s37, 0
    %p414 = por %p412, %p413
    %p415 = scmp.ne.s32.totalorder %s403, %s404
    %p416 = scmp.eq.s32.totalorder %s38, 1
    %p417 = por %p415, %p416
    %p419 = scmp.ne.s32.totalorder %s404, %s418
    %p420 = scmp.eq.s32.totalorder %s38, 0
    %p421 = por %p419, %p420
    %s423 = sadd.s32 %s422, 1
    %p426 = scmp.eq.s32.totalorder %s32, 1
    %p427 = scmp.ne.s32.totalorder %s422, %s424
    %p428 = scmp.eq.s32.totalorder %s32, 0
    %p429 = por %p427, %p428
    %p430 = scmp.ne.s32.totalorder %s422, %s424
    %p431 = scmp.eq.s32.totalorder %s37, 1
    %p432 = por %p430, %p431
    %p433 = scmp.ne.s32.totalorder %s424, %s425
    %p434 = scmp.eq.s32.totalorder %s37, 0
    %p435 = por %p433, %p434
    %p436 = scmp.ne.s32.totalorder %s424, %s425
    %p437 = scmp.eq.s32.totalorder %s38, 1
    %p438 = por %p436, %p437
    %p440 = scmp.ne.s32.totalorder %s425, %s439
    %p441 = scmp.eq.s32.totalorder %s38, 0
    %p442 = por %p440, %p441
    %s443 = ssub.s32 %s32, %s39
    %p444 = scmp.eq.s32.totalorder %s443, 0
    %s446 = sadd.s32 %s445, 1
    %s447 = scalar_select %p444, %s445, %s446
    %p450 = pneg %p444
    %p451 = scmp.eq.s32.totalorder %s32, 1
    %p452 = por %p450, %p451
    %p453 = scmp.ne.s32.totalorder %s445, %s448
    %p454 = scmp.eq.s32.totalorder %s32, 0
    %p455 = por %p453, %p454
    %p456 = scmp.ne.s32.totalorder %s445, %s448
    %p457 = scmp.eq.s32.totalorder %s37, 1
    %p458 = por %p456, %p457
    %p459 = scmp.ne.s32.totalorder %s448, %s449
    %p460 = scmp.eq.s32.totalorder %s37, 0
    %p461 = por %p459, %p460
    %p462 = scmp.ne.s32.totalorder %s448, %s449
    %p463 = scmp.eq.s32.totalorder %s38, 1
    %p464 = por %p462, %p463
    %p466 = scmp.ne.s32.totalorder %s449, %s465
    %p467 = scmp.eq.s32.totalorder %s38, 0
    %p468 = por %p466, %p467
    %s469 = ssub.s32 %s32, %s39
    %p470 = scmp.eq.s32.totalorder %s469, 0
    %s472 = sadd.s32 %s471, 1
    %s473 = scalar_select %p470, %s471, %s472
    %p476 = pneg %p470
    %p477 = scmp.eq.s32.totalorder %s32, 1
    %p478 = por %p476, %p477
    %p479 = scmp.ne.s32.totalorder %s471, %s474
    %p480 = scmp.eq.s32.totalorder %s32, 0
    %p481 = por %p479, %p480
    %p482 = scmp.ne.s32.totalorder %s471, %s474
    %p483 = scmp.eq.s32.totalorder %s37, 1
    %p484 = por %p482, %p483
    %p485 = scmp.ne.s32.totalorder %s474, %s475
    %p486 = scmp.eq.s32.totalorder %s37, 0
    %p487 = por %p485, %p486
    %p488 = scmp.ne.s32.totalorder %s474, %s475
    %p489 = scmp.eq.s32.totalorder %s38, 1
    %p490 = por %p488, %p489
    %p492 = scmp.ne.s32.totalorder %s475, %s491
    %p493 = scmp.eq.s32.totalorder %s38, 0
    %p494 = por %p492, %p493
    %p495 = scmp.le.s32.totalorder 1, %s32
    %p496 = scmp.lt.s32.totalorder %s32, 3
    %p497 = pnand %p495, %p496
    %p498 = pneg %p497
    // Predicated region
    $region9: #{_lambda_.5} parent=5 // pred_check
      _
    $region10: #{_lambda_.5} parent=5 // pred_check_branch
      %500 = sbr.rel (%p497) target = $region12
    $region11: #{_lambda_.5} parent=5 // pred_region
      %s501 = ssub.s32 %s32, 1
      // Predicated region
      $region13: #{_lambda_.5} parent=11 // pred_check
        %p502 = pneg %p183
      $region14: #{_lambda_.5} parent=11 // pred_check_branch
        %504 = sbr.rel (%p502) target = $region16
      $region15: #{_lambda_.5} parent=11 // pred_region
        _
      $region16: #{_lambda_.5} parent=11 // pred_fallthru
        _
      // Predicated region
      $region17: #{_lambda_.5} parent=11 // pred_check
        %p505 = pneg %p204
      $region18: #{_lambda_.5} parent=11 // pred_check_branch
        %507 = sbr.rel (%p505) target = $region20
      $region19: #{_lambda_.5} parent=11 // pred_region
        _
      $region20: #{_lambda_.5} parent=11 // pred_fallthru
        _
      // Predicated region
      $region21: #{_lambda_.5} parent=11 // pred_check
        %p508 = pneg %p225
      $region22: #{_lambda_.5} parent=11 // pred_check_branch
        %510 = sbr.rel (%p508) target = $region24
      $region23: #{_lambda_.5} parent=11 // pred_region
        _
      $region24: #{_lambda_.5} parent=11 // pred_fallthru
        _
      // Predicated region
      $region25: #{_lambda_.5} parent=11 // pred_check
        %p511 = pneg %p246
      $region26: #{_lambda_.5} parent=11 // pred_check_branch
        %513 = sbr.rel (%p511) target = $region28
      $region27: #{_lambda_.5} parent=11 // pred_region
        _
      $region28: #{_lambda_.5} parent=11 // pred_fallthru
        _
      // Predicated region
      $region29: #{_lambda_.5} parent=11 // pred_check
        %p514 = pneg %p267
      $region30: #{_lambda_.5} parent=11 // pred_check_branch
        %516 = sbr.rel (%p514) target = $region32
      $region31: #{_lambda_.5} parent=11 // pred_region
        _
      $region32: #{_lambda_.5} parent=11 // pred_fallthru
        _
      // Predicated region
      $region33: #{_lambda_.5} parent=11 // pred_check
        %p517 = pneg %p288
      $region34: #{_lambda_.5} parent=11 // pred_check_branch
        %519 = sbr.rel (%p517) target = $region36
      $region35: #{_lambda_.5} parent=11 // pred_region
        _
      $region36: #{_lambda_.5} parent=11 // pred_fallthru
        _
      // Predicated region
      $region37: #{_lambda_.5} parent=11 // pred_check
        %p520 = pneg %p309
      $region38: #{_lambda_.5} parent=11 // pred_check_branch
        %522 = sbr.rel (%p520) target = $region40
      $region39: #{_lambda_.5} parent=11 // pred_region
        _
      $region40: #{_lambda_.5} parent=11 // pred_fallthru
        _
      // Predicated region
      $region41: #{_lambda_.5} parent=11 // pred_check
        %p523 = pneg %p330
      $region42: #{_lambda_.5} parent=11 // pred_check_branch
        %525 = sbr.rel (%p523) target = $region44
      $region43: #{_lambda_.5} parent=11 // pred_region
        _
      $region44: #{_lambda_.5} parent=11 // pred_fallthru
        _
      // Predicated region
      $region45: #{_lambda_.5} parent=11 // pred_check
        %p526 = pneg %p351
      $region46: #{_lambda_.5} parent=11 // pred_check_branch
        %528 = sbr.rel (%p526) target = $region48
      $region47: #{_lambda_.5} parent=11 // pred_region
        _
      $region48: #{_lambda_.5} parent=11 // pred_fallthru
        _
      // Predicated region
      $region49: #{_lambda_.5} parent=11 // pred_check
        %p529 = pneg %p372
      $region50: #{_lambda_.5} parent=11 // pred_check_branch
        %531 = sbr.rel (%p529) target = $region52
      $region51: #{_lambda_.5} parent=11 // pred_region
        _
      $region52: #{_lambda_.5} parent=11 // pred_fallthru
        _
      // Predicated region
      $region53: #{_lambda_.5} parent=11 // pred_check
        %p532 = pneg %p393
      $region54: #{_lambda_.5} parent=11 // pred_check_branch
        %534 = sbr.rel (%p532) target = $region56
      $region55: #{_lambda_.5} parent=11 // pred_region
        _
      $region56: #{_lambda_.5} parent=11 // pred_fallthru
        _
      // Predicated region
      $region57: #{_lambda_.5} parent=11 // pred_check
        %p535 = pneg %p414
      $region58: #{_lambda_.5} parent=11 // pred_check_branch
        %537 = sbr.rel (%p535) target = $region60
      $region59: #{_lambda_.5} parent=11 // pred_region
        _
      $region60: #{_lambda_.5} parent=11 // pred_fallthru
        _
      // Predicated region
      $region61: #{_lambda_.5} parent=11 // pred_check
        %p538 = pneg %p435
      $region62: #{_lambda_.5} parent=11 // pred_check_branch
        %540 = sbr.rel (%p538) target = $region64
      $region63: #{_lambda_.5} parent=11 // pred_region
        _
      $region64: #{_lambda_.5} parent=11 // pred_fallthru
        _
    $region12: #{_lambda_.5} parent=5 // pred_fallthru
      _
    %p541 = scmp.lt.s32.totalorder %s32, 2
    // Predicated region
    $region65: #{_lambda_.5} parent=5 // pred_check
      %p542 = pneg %p541
    $region66: #{_lambda_.5} parent=5 // pred_check_branch
      %544 = sbr.rel (%p542) target = $region68
    $region67: #{_lambda_.5} parent=5 // pred_region
      // Predicated region
      $region69: #{_lambda_.5} parent=67 // pred_check
        %p545 = pneg %p52
      $region70: #{_lambda_.5} parent=67 // pred_check_branch
        %547 = sbr.rel (%p545) target = $region72
      $region71: #{_lambda_.5} parent=67 // pred_region
        %p548 = scmp.lt.s32.totalorder %s32, 1
        %s549 = scalar_select %p548, %s32, 1
        %s550 = smul.addr %s549, 2
        %s551 = smul.addr %s550, 8
        %s552 = scalar_lea.vmem %s0, %s551
      $region72: #{_lambda_.5} parent=67 // pred_fallthru
        _
      // Predicated region
      $region73: #{_lambda_.5} parent=67 // pred_check
        %p553 = pneg %p78
      $region74: #{_lambda_.5} parent=67 // pred_check_branch
        %555 = sbr.rel (%p553) target = $region76
      $region75: #{_lambda_.5} parent=67 // pred_region
        %p556 = scmp.lt.s32.totalorder %s32, 1
        %s557 = scalar_select %p556, %s32, 1
        %s558 = smul.addr %s557, 8
        %s559 = scalar_lea.vmem %s1, %s558
      $region76: #{_lambda_.5} parent=67 // pred_fallthru
        _
      // Predicated region
      $region77: #{_lambda_.5} parent=67 // pred_check
        %p560 = pneg %p104
      $region78: #{_lambda_.5} parent=67 // pred_check_branch
        %562 = sbr.rel (%p560) target = $region80
      $region79: #{_lambda_.5} parent=67 // pred_region
        %p563 = scmp.lt.s32.totalorder %s32, 1
        %s564 = scalar_select %p563, %s32, 1
        %s565 = smul.addr %s564, 2
        %s566 = smul.addr %s565, 8
        %s567 = scalar_lea.vmem %s2, %s566
      $region80: #{_lambda_.5} parent=67 // pred_fallthru
        _
      // Predicated region
      $region81: #{_lambda_.5} parent=67 // pred_check
        %p568 = pneg %p130
      $region82: #{_lambda_.5} parent=67 // pred_check_branch
        %570 = sbr.rel (%p568) target = $region84
      $region83: #{_lambda_.5} parent=67 // pred_region
        %p571 = scmp.lt.s32.totalorder %s32, 1
        %s572 = scalar_select %p571, %s32, 1
        %s573 = scalar_lea.vmem %s3, %s572
      $region84: #{_lambda_.5} parent=67 // pred_fallthru
        _
      // Predicated region
      $region85: #{_lambda_.5} parent=67 // pred_check
        %p574 = pneg %p156
      $region86: #{_lambda_.5} parent=67 // pred_check_branch
        %576 = sbr.rel (%p574) target = $region88
      $region87: #{_lambda_.5} parent=67 // pred_region
        %p577 = scmp.lt.s32.totalorder %s32, 1
        %s578 = scalar_select %p577, %s32, 1
        %s579 = scalar_lea.vmem %s4, %s578
      $region88: #{_lambda_.5} parent=67 // pred_fallthru
        _
    $region68: #{_lambda_.5} parent=5 // pred_fallthru
      _
    %p580 = scmp.le.s32.totalorder 1, %s32
    %p581 = scmp.lt.s32.totalorder %s32, 3
    %p582 = pnand %p580, %p581
    %p583 = pneg %p582
    // Predicated region
    $region89: #{_lambda_.5} parent=5 // pred_check
      _
    $region90: #{_lambda_.5} parent=5 // pred_check_branch
      %585 = sbr.rel (%p582) target = $region92
    $region91: #{_lambda_.5} parent=5 // pred_region
      %s586 = ssub.s32 %s32, 1
      %p587 = scmp.lt.s32.totalorder %s37, 1
      %s588 = scalar_select %p587, %s37, 1
      %s589 = smul.addr %s588, 2
      %s590 = smul.addr %s589, 8
      %s591 = scalar_lea.vmem %s0, %s590
      %p592 = pneg %p58
      %p593 = pneg %p55
      %p594 = scmp.lt.s32.totalorder %s37, 1
      %s595 = scalar_select %p594, %s37, 1
      %s596 = smul.addr %s595, 8
      %s597 = scalar_lea.vmem %s1, %s596
      %p598 = pneg %p84
      %p599 = pneg %p81
      %p600 = scmp.lt.s32.totalorder %s37, 1
      %s601 = scalar_select %p600, %s37, 1
      %s602 = smul.addr %s601, 2
      %s603 = smul.addr %s602, 8
      %s604 = scalar_lea.vmem %s2, %s603
      %p605 = pneg %p110
      %p606 = pneg %p107
      %p607 = scmp.lt.s32.totalorder %s37, 1
      %s608 = scalar_select %p607, %s37, 1
      %s609 = scalar_lea.vmem %s3, %s608
      %p610 = pneg %p136
      %p611 = pneg %p133
      %p612 = scmp.lt.s32.totalorder %s37, 1
      %s613 = scalar_select %p612, %s37, 1
      %s614 = scalar_lea.vmem %s4, %s613
      %p615 = pneg %p162
      %p616 = pneg %p159
      %p617 = pneg %p183
      %p618 = pneg %p180
      %p619 = pneg %p204
      %p620 = pneg %p201
      %p621 = pneg %p225
      %p622 = pneg %p222
      %p623 = pneg %p246
      %p624 = pneg %p243
      %p625 = pneg %p267
      %p626 = pneg %p264
      %p627 = pneg %p288
      %p628 = pneg %p285
      %p629 = pneg %p309
      %p630 = pneg %p306
      %p631 = pneg %p330
      %p632 = pneg %p327
      %p633 = pneg %p351
      %p634 = pneg %p348
      %p635 = pneg %p372
      %p636 = pneg %p369
      %p637 = pneg %p393
      %p638 = pneg %p390
      %p639 = pneg %p414
      %p640 = pneg %p411
      %p641 = pneg %p435
      %p642 = pneg %p432
      %p643 = pneg %p461
      %p644 = pneg %p458
      %p645 = scmp.lt.s32.totalorder %s37, 1
      %s646 = scalar_select %p645, %s37, 1
      %s647 = scalar_lea.vmem %s18, %s646
      %p648 = pneg %p487
      %p649 = pneg %p484
      %p650 = scmp.lt.s32.totalorder %s37, 1
      %s651 = scalar_select %p650, %s37, 1
      %s652 = scalar_lea.vmem %s19, %s651
      %p653 = scmp.lt.s32.totalorder %s37, 1
      %s654 = scalar_select %p653, %s37, 1
      %s655 = smul.addr %s654, 2
      %s656 = smul.addr %s655, 8
      %s657 = scalar_lea.vmem %s0, %s656
      %p658 = scmp.lt.s32.totalorder %s37, 1
      %s659 = scalar_select %p658, %s37, 1
      %s660 = smul.addr %s659, 8
      %s661 = scalar_lea.vmem %s1, %s660
      %p662 = scmp.lt.s32.totalorder %s37, 1
      %s663 = scalar_select %p662, %s37, 1
      %s664 = smul.addr %s663, 2
      %s665 = smul.addr %s664, 8
      %s666 = scalar_lea.vmem %s2, %s665
      %p667 = scmp.lt.s32.totalorder %s37, 1
      %s668 = scalar_select %p667, %s37, 1
      %s669 = scalar_lea.vmem %s3, %s668
      %p670 = scmp.lt.s32.totalorder %s37, 1
      %s671 = scalar_select %p670, %s37, 1
      %s672 = scalar_lea.vmem %s4, %s671
      %p673 = scmp.lt.s32.totalorder %s37, 1
      %s674 = scalar_select %p673, %s37, 1
      %s675 = scalar_lea.vmem %s18, %s674
      %p676 = scmp.lt.s32.totalorder %s37, 1
      %s677 = scalar_select %p676, %s37, 1
      %s678 = scalar_lea.vmem %s19, %s677
      %v680 = vld [vmem:[%s657] sm:$0xff]
      %v681 = vld [vmem:[%s657 + $0x8] sm:$0xff]
      %v682 = vld [vmem:[%s661] sm:$0xff]
      %v683 = vld [vmem:[%s666] sm:$0xff]
      %v684 = vld [vmem:[%s666 + $0x8] sm:$0xff]
      %v685 = vld [vmem:[%s669] sm:$0x1]
      %v686 = vld [vmem:[%s672] sm:$0x1]
      %v687 = vld [vmem:[%s6] sm:$0x1]
      %v689 = vlaneseq
      %v690 = vshrl.u32 %v689, 7
      %v691 = vsub.s32 0, %v690
      %v692 = vrot.slane %v687, %v691
      %v694 = vmul.f32 %v680, %v692
      %v695 = vmul.f32 %v681, %v692
      %v696 = vpack.c.bf16 %v695, %v694
      %v697 = vpack.c.bf16 %v682, %v682
      %v698 = vld [vmem:[%s5] sm:$0x1]
      %v700 = vlaneseq
      %v701 = vshrl.u32 %v700, 7
      %v702 = vsub.s32 0, %v701
      %v703 = vrot.slane %v698, %v702
      %v705 = vmul.f32 %v680, %v703
      %v706 = vmul.f32 %v681, %v703
      %707 = vadd.xlane.f32.xlu0 %v705
      %v708 = vpop.xlane.xlu0 %707
      %709 = vadd.xlane.f32.xlu0 %v706
      %v710 = vpop.xlane.xlu0 %709
      %711 = vmatprep.subr.bf16.mxu0 0
      %712 = vmatpush1.bf16.xpose.msra.mxu0 0
      %713 = vmatprep.subr.bf16.mxu0 0
      %714 = vmatpush1.bf16.xpose.msra.mxu0 0
      %715 = vmatprep.subr.bf16.mxu0 0
      %716 = vmatpush1.bf16.xpose.msra.mxu0 0
      %717 = vmatprep.subr.bf16.mxu0 0
      %718 = vmatpush1.bf16.xpose.msra.mxu0 0
      %719 = vmatprep.subr.bf16.mxu0 0
      %720 = vmatpush1.bf16.xpose.msra.mxu0 0
      %721 = vmatprep.subr.bf16.mxu0 0
      %722 = vmatpush1.bf16.xpose.msra.mxu0 0
      %723 = vmatprep.subr.bf16.mxu0 0
      %724 = vmatpush1.bf16.xpose.msra.mxu0 0
      %725 = vmatprep.subr.bf16.mxu0 0
      %726 = vmatpush1.bf16.xpose.msra.mxu0 %v697
      %727 = vmatprep.subr.bf16.mxu0 0
      %728 = vmatpush2.bf16.xpose.msra.mxu0 0
      %729 = vmatprep.subr.bf16.mxu0 0
      %730 = vmatpush2.bf16.xpose.msra.mxu0 0
      %731 = vmatprep.subr.bf16.mxu0 0
      %732 = vmatpush2.bf16.xpose.msra.mxu0 0
      %733 = vmatprep.subr.bf16.mxu0 0
      %734 = vmatpush2.bf16.xpose.msra.mxu0 0
      %735 = vmatprep.subr.bf16.mxu0 0
      %736 = vmatpush2.bf16.xpose.msra.mxu0 0
      %737 = vmatprep.subr.bf16.mxu0 0
      %738 = vmatpush2.bf16.xpose.msra.mxu0 0
      %739 = vmatprep.subr.bf16.mxu0 0
      %740 = vmatpush2.bf16.xpose.msra.mxu0 0
      %741 = vmatprep.subr.bf16.mxu0 0
      %742 = vmatpush2.bf16.xpose.msra.mxu0 0
      %743 = vmatprep.mubr.bf16.mxu0 0
      %744 = vmatmul.mubr.bf16.gmra.mxu0 %v696
      %v745 = vpop.f32.mrf.mxu0
      %v746 = vadd.f32 %v708, %v745
      %v747 = vpop.f32.mrf.mxu0
      %v748 = vpop.f32.mrf.mxu0
      %v749 = vadd.f32 %v710, %v748
      %v750 = vpop.f32.mrf.mxu0
      %751 = vdwg.mxu0
      %v753 = vlaneseq
      %v754 = vshrl.u32 %v753, 7
      %v755 = vsub.s32 0, %v754
      %v756 = vrot.slane %v686, %v755
      %v758 = vadd.f32 %v746, %v756
      %v759 = vadd.f32 %v749, %v756
      %v760 = vld [vmem:[#allocation2] sm:$0x1]
      %v762 = vlaneseq
      %v763 = vshrl.u32 %v762, 7
      %v764 = vsub.s32 0, %v763
      %v765 = vrot.slane %v760, %v764
      %766 = vset.pattern.permute.xlu0 0
      %767 = vperm.xlu0 %766, %v765
      %v768 = vpop.permute.xlu0 %767
      %v770 = vadd.f32 %v758, %v768
      %v771 = vadd.f32 %v759, %v768
      %v772 = vsub.f32 %v685, 1.0
      %v773 = vmul.f32 %v772, 1e+09
      %v775 = vlaneseq
      %v776 = vshrl.u32 %v775, 7
      %v777 = vsub.s32 0, %v776
      %v778 = vrot.slane %v773, %v777
      %v780 = vadd.f32 %v770, %v778
      %v781 = vadd.f32 %v771, %v778
      %vm782 = vcmask 64512
      %v783 = vsel %vm782, %v780, -inf
      %784 = vmax.xlane.f32.xlu0 %v783
      %v785 = vpop.xlane.xlu0 %784
      %v786 = vsel %vm782, %v781, -inf
      %787 = vmax.xlane.f32.xlu0 %v786
      %v788 = vpop.xlane.xlu0 %787
      %v789 = vsub.f32 %v780, %v785
      %v790 = vsub.f32 %v781, %v788
      %v791 = vmul.f32 %v789, 1.442695
      %v792 = vpow.pop %v791
      %v793 = vmul.f32 %v790, 1.442695
      %v794 = vpow.pop %v793
      %v795 = vsel %vm782, %v792, 0.0
      %796 = vadd.xlane.f32.xlu0 %v795
      %v797 = vpop.xlane.xlu0 %796
      %v798 = vsel %vm782, %v794, 0.0
      %799 = vadd.xlane.f32.xlu0 %v798
      %v800 = vpop.xlane.xlu0 %799
      %v801 = vrcp.pop %v797
      %v802 = vrcp.pop %v800
      %v803 = vmul.f32 %v792, %v801
      %v804 = vmul.f32 %v794, %v802
      %v805 = vpack.c.bf16 %v804, %v803
      %v807 = vsel %vm782, %v805, 0
      %vm809 = vcmask 1043456
      %v811 = vsel %vm809, %v697, 0
      %813 = vmatprep.subr.bf16.mxu0 0
      %814 = vmatpush1.bf16.msra.mxu0 0
      %815 = vmatprep.subr.bf16.mxu0 0
      %816 = vmatpush1.bf16.msra.mxu0 0
      %817 = vmatprep.subr.bf16.mxu0 0
      %818 = vmatpush1.bf16.msra.mxu0 0
      %819 = vmatprep.subr.bf16.mxu0 0
      %820 = vmatpush1.bf16.msra.mxu0 0
      %821 = vmatprep.subr.bf16.mxu0 0
      %822 = vmatpush1.bf16.msra.mxu0 0
      %823 = vmatprep.subr.bf16.mxu0 0
      %824 = vmatpush1.bf16.msra.mxu0 0
      %825 = vmatprep.subr.bf16.mxu0 0
      %826 = vmatpush1.bf16.msra.mxu0 0
      %827 = vmatprep.subr.bf16.mxu0 0
      %828 = vmatpush1.bf16.msra.mxu0 %v811
      %829 = vmatprep.subr.bf16.mxu0 0
      %830 = vmatpush2.bf16.msra.mxu0 0
      %831 = vmatprep.subr.bf16.mxu0 0
      %832 = vmatpush2.bf16.msra.mxu0 0
      %833 = vmatprep.subr.bf16.mxu0 0
      %834 = vmatpush2.bf16.msra.mxu0 0
      %835 = vmatprep.subr.bf16.mxu0 0
      %836 = vmatpush2.bf16.msra.mxu0 0
      %837 = vmatprep.subr.bf16.mxu0 0
      %838 = vmatpush2.bf16.msra.mxu0 0
      %839 = vmatprep.subr.bf16.mxu0 0
      %840 = vmatpush2.bf16.msra.mxu0 0
      %841 = vmatprep.subr.bf16.mxu0 0
      %842 = vmatpush2.bf16.msra.mxu0 0
      %843 = vmatprep.subr.bf16.mxu0 0
      %844 = vmatpush2.bf16.msra.mxu0 0
      %845 = vmatprep.mubr.bf16.mxu0 0
      %846 = vmatmul.mubr.bf16.gmra.mxu0 %v807
      %v847 = vpop.f32.mrf.mxu0
      %v848 = vadd.f32 0.0, %v847
      %v849 = vpop.f32.mrf.mxu0
      %v850 = vpop.f32.mrf.mxu0
      %v851 = vadd.f32 0.0, %v850
      %v852 = vpop.f32.mrf.mxu0
      %853 = vdwg.mxu0
      %v854 = vsub.f32 %v683, 1.0
      %v855 = vsub.f32 %v684, 1.0
      %v856 = vmul.f32 %v854, 1e+09
      %v857 = vmul.f32 %v855, 1e+09
      %v858 = vadd.f32 %v785, %v856
      %v859 = vadd.f32 %v788, %v857
      %vm860 = vcmask 7168
      %v861 = vsel %vm860, %v858, -inf
      %v862 = vsel %vm860, %v859, -inf
      %v863 = vmax.f32 %v861, %v862
      %v864 = vrot.slane %v863, 4
      %v865 = vmax.f32 %v863, %v864
      %v866 = vrot.slane %v865, 2
      %v867 = vmax.f32 %v865, %v866
      %v868 = vrot.slane %v867, 1
      %v869 = vmax.f32 %v867, %v868
      %v870 = vsub.f32 %v858, %v869
      %v871 = vsub.f32 %v859, %v869
      %v872 = vmul.f32 %v870, 1.442695
      %v873 = vpow.pop %v872
      %v874 = vmul.f32 %v871, 1.442695
      %v875 = vpow.pop %v874
      %v876 = vsel %vm860, %v873, 0.0
      %v877 = vsel %vm860, %v875, 0.0
      %v878 = vadd.f32 %v876, %v877
      %v879 = vrot.slane %v878, 4
      %v880 = vadd.f32 %v878, %v879
      %v881 = vrot.slane %v880, 2
      %v882 = vadd.f32 %v880, %v881
      %v883 = vrot.slane %v882, 1
      %v884 = vadd.f32 %v882, %v883
      %v885 = vrcp.pop %v884
      %v886 = vmul.f32 %v873, %v885
      %v887 = vmul.f32 %v875, %v885
      %889 = vset.pattern.permute.xlu0 0
      %890 = vperm.xlu0 %889, %v886
      %v891 = vpop.permute.xlu0 %890
      %894 = vset.pattern.permute.xlu0 0
      %895 = vperm.xlu0 %894, %v887
      %v896 = vpop.permute.xlu0 %895
      %v898 = vmul.f32 %v680, %v891
      %v899 = vmul.f32 %v681, %v896
      %v900 = vadd.f32 %v898, %v899
      %v901 = vrot.slane %v900, 4
      %v902 = vadd.f32 %v900, %v901
      %v903 = vrot.slane %v902, 2
      %v904 = vadd.f32 %v902, %v903
      %v905 = vrot.slane %v904, 1
      %v906 = vadd.f32 %v904, %v905
      %v907 = vmul.f32 %v680, %v906
      %v908 = vmul.f32 %v681, %v906
      %v909 = vmul.f32 %v680, %v848
      %v910 = vmul.f32 %v681, %v851
      %v911 = vpack.c.bf16 %v681, %v680
      %v912 = vpack.c.bf16 %v851, %v848
      %v913 = vpack.c.bf16 %v910, %v909
      %v914 = vpack.c.bf16 %v908, %v907
      %v915 = vld [vmem:[%s8] sm:$0xf]
      %v916 = vld [vmem:[%s8 + $0x4] sm:$0xf]
      %v917 = vld [vmem:[%s8 + $0x8] sm:$0xf]
      %v918 = vld [vmem:[%s8 + $0xc] sm:$0xf]
      %v919 = vld [vmem:[%s8 + $0x10] sm:$0xf]
      %v920 = vld [vmem:[%s8 + $0x14] sm:$0xf]
      %v921 = vld [vmem:[%s8 + $0x18] sm:$0xf]
      %v922 = vld [vmem:[%s8 + $0x1c] sm:$0xf]
      %v923 = vld [vmem:[%s8 + $0x20] sm:$0xf]
      %v924 = vld [vmem:[%s8 + $0x24] sm:$0xf]
      %v925 = vld [vmem:[%s8 + $0x28] sm:$0xf]
      %v926 = vld [vmem:[%s8 + $0x2c] sm:$0xf]
      %v927 = vld [vmem:[%s8 + $0x30] sm:$0xf]
      %v928 = vld [vmem:[%s8 + $0x34] sm:$0xf]
      %v929 = vld [vmem:[%s8 + $0x38] sm:$0xf]
      %v930 = vld [vmem:[%s8 + $0x3c] sm:$0xf]
      %v931 = vld [vmem:[%s8 + $0x40] sm:$0xf]
      %v932 = vld [vmem:[%s8 + $0x44] sm:$0xf]
      %v933 = vld [vmem:[%s8 + $0x48] sm:$0xf]
      %v934 = vld [vmem:[%s8 + $0x4c] sm:$0xf]
      %v935 = vld [vmem:[%s8 + $0x50] sm:$0xf]
      %v936 = vld [vmem:[%s8 + $0x54] sm:$0xf]
      %v937 = vld [vmem:[%s8 + $0x58] sm:$0xf]
      %v938 = vld [vmem:[%s8 + $0x5c] sm:$0xf]
      %v939 = vld [vmem:[%s8 + $0x60] sm:$0xf]
      %v940 = vld [vmem:[%s8 + $0x64] sm:$0xf]
      %v941 = vld [vmem:[%s8 + $0x68] sm:$0xf]
      %v942 = vld [vmem:[%s8 + $0x6c] sm:$0xf]
      %v943 = vld [vmem:[%s8 + $0x70] sm:$0xf]
      %v944 = vld [vmem:[%s8 + $0x74] sm:$0xf]
      %v945 = vld [vmem:[%s8 + $0x78] sm:$0xf]
      %v946 = vld [vmem:[%s8 + $0x7c] sm:$0xf]
      %v947 = vld [vmem:[%s8 + $0x80] sm:$0xf]
      %v948 = vld [vmem:[%s8 + $0x84] sm:$0xf]
      %v949 = vld [vmem:[%s8 + $0x88] sm:$0xf]
      %v950 = vld [vmem:[%s8 + $0x8c] sm:$0xf]
      %v951 = vld [vmem:[%s8 + $0x90] sm:$0xf]
      %v952 = vld [vmem:[%s8 + $0x94] sm:$0xf]
      %v953 = vld [vmem:[%s8 + $0x98] sm:$0xf]
      %v954 = vld [vmem:[%s8 + $0x9c] sm:$0xf]
      %v955 = vld [vmem:[%s8 + $0xa0] sm:$0xf]
      %v956 = vld [vmem:[%s8 + $0xa4] sm:$0xf]
      %v957 = vld [vmem:[%s8 + $0xa8] sm:$0xf]
      %v958 = vld [vmem:[%s8 + $0xac] sm:$0xf]
      %v959 = vld [vmem:[%s8 + $0xb0] sm:$0xf]
      %v960 = vld [vmem:[%s8 + $0xb4] sm:$0xf]
      %v961 = vld [vmem:[%s8 + $0xb8] sm:$0xf]
      %v962 = vld [vmem:[%s8 + $0xbc] sm:$0xf]
      %v963 = vld [vmem:[%s8 + $0xc0] sm:$0xf]
      %v964 = vld [vmem:[%s8 + $0xc4] sm:$0xf]
      %v965 = vld [vmem:[%s8 + $0xc8] sm:$0xf]
      %v966 = vld [vmem:[%s8 + $0xcc] sm:$0xf]
      %v967 = vld [vmem:[%s8 + $0xd0] sm:$0xf]
      %v968 = vld [vmem:[%s8 + $0xd4] sm:$0xf]
      %v969 = vld [vmem:[%s8 + $0xd8] sm:$0xf]
      %v970 = vld [vmem:[%s8 + $0xdc] sm:$0xf]
      %v971 = vld [vmem:[%s8 + $0xe0] sm:$0xf]
      %v972 = vld [vmem:[%s8 + $0xe4] sm:$0xf]
      %v973 = vld [vmem:[%s8 + $0xe8] sm:$0xf]
      %v974 = vld [vmem:[%s8 + $0xec] sm:$0xf]
      %v975 = vld [vmem:[%s8 + $0xf0] sm:$0xf]
      %v976 = vld [vmem:[%s8 + $0xf4] sm:$0xf]
      %v977 = vld [vmem:[%s8 + $0xf8] sm:$0xf]
      %v978 = vld [vmem:[%s8 + $0xfc] sm:$0xf]
      %v979 = vld [vmem:[%s9] sm:$0x1]
      %v981 = vlaneseq
      %v982 = vshrl.u32 %v981, 7
      %v983 = vsub.s32 0, %v982
      %v984 = vrot.slane %v979, %v983
      %v1050 = vunpack.c.l.b16 %v915
      %v1051 = vunpack.c.l.b16 %v916
      %v1052 = vunpack.c.l.b16 %v917
      %v1053 = vunpack.c.l.b16 %v918
      %v1054 = vunpack.c.l.b16 %v919
      %v1055 = vunpack.c.l.b16 %v920
      %v1056 = vunpack.c.l.b16 %v921
      %v1057 = vunpack.c.l.b16 %v922
      %v1058 = vunpack.c.l.b16 %v923
      %v1059 = vunpack.c.l.b16 %v924
      %v1060 = vunpack.c.l.b16 %v925
      %v1061 = vunpack.c.l.b16 %v926
      %v1062 = vunpack.c.l.b16 %v927
      %v1063 = vunpack.c.l.b16 %v928
      %v1064 = vunpack.c.l.b16 %v929
      %v1065 = vunpack.c.l.b16 %v930
      %v1066 = vunpack.c.l.b16 %v931
      %v1067 = vunpack.c.l.b16 %v932
      %v1068 = vunpack.c.l.b16 %v933
      %v1069 = vunpack.c.l.b16 %v934
      %v1070 = vunpack.c.l.b16 %v935
      %v1071 = vunpack.c.l.b16 %v936
      %v1072 = vunpack.c.l.b16 %v937
      %v1073 = vunpack.c.l.b16 %v938
      %v1074 = vunpack.c.l.b16 %v939
      %v1075 = vunpack.c.l.b16 %v940
      %v1076 = vunpack.c.l.b16 %v941
      %v1077 = vunpack.c.l.b16 %v942
      %v1078 = vunpack.c.l.b16 %v943
      %v1079 = vunpack.c.l.b16 %v944
      %v1080 = vunpack.c.l.b16 %v945
      %v1081 = vunpack.c.l.b16 %v946
      %v1082 = vunpack.c.l.b16 %v947
      %v1083 = vunpack.c.l.b16 %v948
      %v1084 = vunpack.c.l.b16 %v949
      %v1085 = vunpack.c.l.b16 %v950
      %v1086 = vunpack.c.l.b16 %v951
      %v1087 = vunpack.c.l.b16 %v952
      %v1088 = vunpack.c.l.b16 %v953
      %v1089 = vunpack.c.l.b16 %v954
      %v1090 = vunpack.c.l.b16 %v955
      %v1091 = vunpack.c.l.b16 %v956
      %v1092 = vunpack.c.l.b16 %v957
      %v1093 = vunpack.c.l.b16 %v958
      %v1094 = vunpack.c.l.b16 %v959
      %v1095 = vunpack.c.l.b16 %v960
      %v1096 = vunpack.c.l.b16 %v961
      %v1097 = vunpack.c.l.b16 %v962
      %v1098 = vunpack.c.l.b16 %v963
      %v1099 = vunpack.c.l.b16 %v964
      %v1100 = vunpack.c.l.b16 %v965
      %v1101 = vunpack.c.l.b16 %v966
      %v1102 = vunpack.c.l.b16 %v967
      %v1103 = vunpack.c.l.b16 %v968
      %v1104 = vunpack.c.l.b16 %v969
      %v1105 = vunpack.c.l.b16 %v970
      %v1106 = vunpack.c.l.b16 %v971
      %v1107 = vunpack.c.l.b16 %v972
      %v1108 = vunpack.c.l.b16 %v973
      %v1109 = vunpack.c.l.b16 %v974
      %v1110 = vunpack.c.l.b16 %v975
      %v1111 = vunpack.c.l.b16 %v976
      %v1112 = vunpack.c.l.b16 %v977
      %v1113 = vunpack.c.l.b16 %v978
      %v1114 = vpack.c.b16 %v1051, %v1050
      %v1115 = vpack.c.b16 %v1053, %v1052
      %v1116 = vpack.c.b16 %v1055, %v1054
      %v1117 = vpack.c.b16 %v1057, %v1056
      %v1118 = vpack.c.b16 %v1059, %v1058
      %v1119 = vpack.c.b16 %v1061, %v1060
      %v1120 = vpack.c.b16 %v1063, %v1062
      %v1121 = vpack.c.b16 %v1065, %v1064
      %v1122 = vpack.c.b16 %v1067, %v1066
      %v1123 = vpack.c.b16 %v1069, %v1068
      %v1124 = vpack.c.b16 %v1071, %v1070
      %v1125 = vpack.c.b16 %v1073, %v1072
      %v1126 = vpack.c.b16 %v1075, %v1074
      %v1127 = vpack.c.b16 %v1077, %v1076
      %v1128 = vpack.c.b16 %v1079, %v1078
      %v1129 = vpack.c.b16 %v1081, %v1080
      %v1130 = vpack.c.b16 %v1083, %v1082
      %v1131 = vpack.c.b16 %v1085, %v1084
      %v1132 = vpack.c.b16 %v1087, %v1086
      %v1133 = vpack.c.b16 %v1089, %v1088
      %v1134 = vpack.c.b16 %v1091, %v1090
      %v1135 = vpack.c.b16 %v1093, %v1092
      %v1136 = vpack.c.b16 %v1095, %v1094
      %v1137 = vpack.c.b16 %v1097, %v1096
      %v1138 = vpack.c.b16 %v1099, %v1098
      %v1139 = vpack.c.b16 %v1101, %v1100
      %v1140 = vpack.c.b16 %v1103, %v1102
      %v1141 = vpack.c.b16 %v1105, %v1104
      %v1142 = vpack.c.b16 %v1107, %v1106
      %v1143 = vpack.c.b16 %v1109, %v1108
      %v1144 = vpack.c.b16 %v1111, %v1110
      %v1145 = vpack.c.b16 %v1113, %v1112
      %1178 = vmatprep.subr.bf16.mxu0 0
      %1179 = vmatpush1.bf16.msra.mxu0 %v1121
      %1180 = vmatprep.subr.bf16.mxu0 0
      %1181 = vmatpush1.bf16.msra.mxu0 %v1120
      %1182 = vmatprep.subr.bf16.mxu0 0
      %1183 = vmatpush1.bf16.msra.mxu0 %v1119
      %1184 = vmatprep.subr.bf16.mxu0 0
      %1185 = vmatpush1.bf16.msra.mxu0 %v1118
      %1186 = vmatprep.subr.bf16.mxu0 0
      %1187 = vmatpush1.bf16.msra.mxu0 %v1117
      %1188 = vmatprep.subr.bf16.mxu0 0
      %1189 = vmatpush1.bf16.msra.mxu0 %v1116
      %1190 = vmatprep.subr.bf16.mxu0 0
      %1191 = vmatpush1.bf16.msra.mxu0 %v1115
      %1192 = vmatprep.subr.bf16.mxu0 0
      %1193 = vmatpush1.bf16.msra.mxu0 %v1114
      %1194 = vmatprep.subr.bf16.mxu0 0
      %1195 = vmatpush2.bf16.msra.mxu0 %v1129
      %1196 = vmatprep.subr.bf16.mxu0 0
      %1197 = vmatpush2.bf16.msra.mxu0 %v1128
      %1198 = vmatprep.subr.bf16.mxu0 0
      %1199 = vmatpush2.bf16.msra.mxu0 %v1127
      %1200 = vmatprep.subr.bf16.mxu0 0
      %1201 = vmatpush2.bf16.msra.mxu0 %v1126
      %1202 = vmatprep.subr.bf16.mxu0 0
      %1203 = vmatpush2.bf16.msra.mxu0 %v1125
      %1204 = vmatprep.subr.bf16.mxu0 0
      %1205 = vmatpush2.bf16.msra.mxu0 %v1124
      %1206 = vmatprep.subr.bf16.mxu0 0
      %1207 = vmatpush2.bf16.msra.mxu0 %v1123
      %1208 = vmatprep.subr.bf16.mxu0 0
      %1209 = vmatpush2.bf16.msra.mxu0 %v1122
      %1210 = vmatprep.mubr.bf16.mxu0 %v912
      %1211 = vmatmul.mubr.bf16.gmra.mxu0 %v911
      %v1212 = vpop.f32.mrf.mxu0
      %v1213 = vadd.f32 %v984, %v1212
      %v1214 = vpop.f32.mrf.mxu0
      %v1215 = vpop.f32.mrf.mxu0
      %v1216 = vadd.f32 %v984, %v1215
      %v1217 = vpop.f32.mrf.mxu0
      %1218 = vdwg.mxu0
      %1219 = vmatprep.subr.bf16.mxu0 0
      %1220 = vmatpush1.bf16.msra.mxu0 %v1137
      %1221 = vmatprep.subr.bf16.mxu0 0
      %1222 = vmatpush1.bf16.msra.mxu0 %v1136
      %1223 = vmatprep.subr.bf16.mxu0 0
      %1224 = vmatpush1.bf16.msra.mxu0 %v1135
      %1225 = vmatprep.subr.bf16.mxu0 0
      %1226 = vmatpush1.bf16.msra.mxu0 %v1134
      %1227 = vmatprep.subr.bf16.mxu0 0
      %1228 = vmatpush1.bf16.msra.mxu0 %v1133
      %1229 = vmatprep.subr.bf16.mxu0 0
      %1230 = vmatpush1.bf16.msra.mxu0 %v1132
      %1231 = vmatprep.subr.bf16.mxu0 0
      %1232 = vmatpush1.bf16.msra.mxu0 %v1131
      %1233 = vmatprep.subr.bf16.mxu0 0
      %1234 = vmatpush1.bf16.msra.mxu0 %v1130
      %1235 = vmatprep.subr.bf16.mxu0 0
      %1236 = vmatpush2.bf16.msra.mxu0 %v1145
      %1237 = vmatprep.subr.bf16.mxu0 0
      %1238 = vmatpush2.bf16.msra.mxu0 %v1144
      %1239 = vmatprep.subr.bf16.mxu0 0
      %1240 = vmatpush2.bf16.msra.mxu0 %v1143
      %1241 = vmatprep.subr.bf16.mxu0 0
      %1242 = vmatpush2.bf16.msra.mxu0 %v1142
      %1243 = vmatprep.subr.bf16.mxu0 0
      %1244 = vmatpush2.bf16.msra.mxu0 %v1141
      %1245 = vmatprep.subr.bf16.mxu0 0
      %1246 = vmatpush2.bf16.msra.mxu0 %v1140
      %1247 = vmatprep.subr.bf16.mxu0 0
      %1248 = vmatpush2.bf16.msra.mxu0 %v1139
      %1249 = vmatprep.subr.bf16.mxu0 0
      %1250 = vmatpush2.bf16.msra.mxu0 %v1138
      %1251 = vmatprep.mubr.bf16.mxu0 %v914
      %1252 = vmatmul.mubr.bf16.gmra.mxu0 %v913
      %v1253 = vpop.f32.mrf.mxu0
      %v1254 = vadd.f32 %v1213, %v1253
      %v1255 = vpop.f32.mrf.mxu0
      %v1256 = vpop.f32.mrf.mxu0
      %v1257 = vadd.f32 %v1216, %v1256
      %v1258 = vpop.f32.mrf.mxu0
      %1259 = vdwg.mxu0
      %v1260 = vtanh.pop %v1254
      %v1261 = vtanh.pop %v1257
      %v1262 = vpack.c.bf16 %v1261, %v1260
      %v1263 = vld [vmem:[%s10] sm:$0xf]
      %v1264 = vld [vmem:[%s10 + $0x4] sm:$0xf]
      %v1265 = vld [vmem:[%s10 + $0x8] sm:$0xf]
      %v1266 = vld [vmem:[%s10 + $0xc] sm:$0xf]
      %v1267 = vld [vmem:[%s10 + $0x10] sm:$0xf]
      %v1268 = vld [vmem:[%s10 + $0x14] sm:$0xf]
      %v1269 = vld [vmem:[%s10 + $0x18] sm:$0xf]
      %v1270 = vld [vmem:[%s10 + $0x1c] sm:$0xf]
      %v1271 = vld [vmem:[%s10 + $0x20] sm:$0xf]
      %v1272 = vld [vmem:[%s10 + $0x24] sm:$0xf]
      %v1273 = vld [vmem:[%s10 + $0x28] sm:$0xf]
      %v1274 = vld [vmem:[%s10 + $0x2c] sm:$0xf]
      %v1275 = vld [vmem:[%s10 + $0x30] sm:$0xf]
      %v1276 = vld [vmem:[%s10 + $0x34] sm:$0xf]
      %v1277 = vld [vmem:[%s10 + $0x38] sm:$0xf]
      %v1278 = vld [vmem:[%s10 + $0x3c] sm:$0xf]
      %v1279 = vld [vmem:[%s11] sm:$0x1]
      %v1281 = vlaneseq
      %v1282 = vshrl.u32 %v1281, 7
      %v1283 = vsub.s32 0, %v1282
      %v1284 = vrot.slane %v1279, %v1283
      %v1302 = vunpack.c.l.b16 %v1263
      %v1303 = vunpack.c.l.b16 %v1264
      %v1304 = vunpack.c.l.b16 %v1265
      %v1305 = vunpack.c.l.b16 %v1266
      %v1306 = vunpack.c.l.b16 %v1267
      %v1307 = vunpack.c.l.b16 %v1268
      %v1308 = vunpack.c.l.b16 %v1269
      %v1309 = vunpack.c.l.b16 %v1270
      %v1310 = vunpack.c.l.b16 %v1271
      %v1311 = vunpack.c.l.b16 %v1272
      %v1312 = vunpack.c.l.b16 %v1273
      %v1313 = vunpack.c.l.b16 %v1274
      %v1314 = vunpack.c.l.b16 %v1275
      %v1315 = vunpack.c.l.b16 %v1276
      %v1316 = vunpack.c.l.b16 %v1277
      %v1317 = vunpack.c.l.b16 %v1278
      %v1318 = vpack.c.b16 %v1303, %v1302
      %v1319 = vpack.c.b16 %v1305, %v1304
      %v1320 = vpack.c.b16 %v1307, %v1306
      %v1321 = vpack.c.b16 %v1309, %v1308
      %v1322 = vpack.c.b16 %v1311, %v1310
      %v1323 = vpack.c.b16 %v1313, %v1312
      %v1324 = vpack.c.b16 %v1315, %v1314
      %v1325 = vpack.c.b16 %v1317, %v1316
      %1334 = vmatprep.subr.bf16.mxu0 0
      %1335 = vmatpush1.bf16.msra.mxu0 %v1325
      %1336 = vmatprep.subr.bf16.mxu0 0
      %1337 = vmatpush1.bf16.msra.mxu0 %v1324
      %1338 = vmatprep.subr.bf16.mxu0 0
      %1339 = vmatpush1.bf16.msra.mxu0 %v1323
      %1340 = vmatprep.subr.bf16.mxu0 0
      %1341 = vmatpush1.bf16.msra.mxu0 %v1322
      %1342 = vmatprep.subr.bf16.mxu0 0
      %1343 = vmatpush1.bf16.msra.mxu0 %v1321
      %1344 = vmatprep.subr.bf16.mxu0 0
      %1345 = vmatpush1.bf16.msra.mxu0 %v1320
      %1346 = vmatprep.subr.bf16.mxu0 0
      %1347 = vmatpush1.bf16.msra.mxu0 %v1319
      %1348 = vmatprep.subr.bf16.mxu0 0
      %1349 = vmatpush1.bf16.msra.mxu0 %v1318
      %1350 = vmatprep.subr.bf16.mxu0 0
      %1351 = vmatpush2.bf16.msra.mxu0 0
      %1352 = vmatprep.subr.bf16.mxu0 0
      %1353 = vmatpush2.bf16.msra.mxu0 0
      %1354 = vmatprep.subr.bf16.mxu0 0
      %1355 = vmatpush2.bf16.msra.mxu0 0
      %1356 = vmatprep.subr.bf16.mxu0 0
      %1357 = vmatpush2.bf16.msra.mxu0 0
      %1358 = vmatprep.subr.bf16.mxu0 0
      %1359 = vmatpush2.bf16.msra.mxu0 0
      %1360 = vmatprep.subr.bf16.mxu0 0
      %1361 = vmatpush2.bf16.msra.mxu0 0
      %1362 = vmatprep.subr.bf16.mxu0 0
      %1363 = vmatpush2.bf16.msra.mxu0 0
      %1364 = vmatprep.subr.bf16.mxu0 0
      %1365 = vmatpush2.bf16.msra.mxu0 0
      %1366 = vmatprep.mubr.bf16.mxu0 0
      %1367 = vmatmul.mubr.bf16.gmra.mxu0 %v1262
      %v1368 = vpop.f32.mrf.mxu0
      %v1369 = vadd.f32 %v1284, %v1368
      %v1370 = vpop.f32.mrf.mxu0
      %v1371 = vpop.f32.mrf.mxu0
      %v1372 = vadd.f32 %v1284, %v1371
      %v1373 = vpop.f32.mrf.mxu0
      %1374 = vdwg.mxu0
      %v1375 = vtanh.pop %v1369
      %v1376 = vtanh.pop %v1372
      %v1377 = vld [vmem:[%s12] sm:$0x1f]
      %v1379 = vlaneseq
      %v1380 = vshrl.u32 %v1379, 7
      %v1381 = vsub.s32 0, %v1380
      %v1382 = vrot.slane %v1377, %v1381
      %v1383 = vlaneseq
      %v1384 = vshrl.u32 %v1383, 7
      %v1385 = vsub.s32 1, %v1384
      %v1386 = vrot.slane %v1377, %v1385
      %v1387 = vlaneseq
      %v1388 = vshrl.u32 %v1387, 7
      %v1389 = vsub.s32 2, %v1388
      %v1390 = vrot.slane %v1377, %v1389
      %v1391 = vlaneseq
      %v1392 = vshrl.u32 %v1391, 7
      %v1393 = vsub.s32 3, %v1392
      %v1394 = vrot.slane %v1377, %v1393
      %v1395 = vlaneseq
      %v1396 = vshrl.u32 %v1395, 7
      %v1397 = vsub.s32 4, %v1396
      %v1398 = vrot.slane %v1377, %v1397
      %v1404 = vmul.f32 %v1375, %v1382
      %v1405 = vmul.f32 %v680, %v1386
      %v1406 = vmul.f32 %v848, %v1390
      %v1407 = vmul.f32 %v909, %v1394
      %v1408 = vmul.f32 %v907, %v1398
      %v1409 = vmul.f32 %v1376, %v1382
      %v1410 = vmul.f32 %v681, %v1386
      %v1411 = vmul.f32 %v851, %v1390
      %v1412 = vmul.f32 %v910, %v1394
      %v1413 = vmul.f32 %v908, %v1398
      %v1414 = vadd.f32 %v1404, %v1405
      %v1415 = vadd.f32 %v1414, %v1406
      %v1416 = vadd.f32 %v1415, %v1407
      %v1417 = vadd.f32 %v1416, %v1408
      %1418 = vadd.xlane.f32.xlu0 %v1417
      %v1419 = vpop.xlane.xlu0 %1418
      %v1420 = vadd.f32 %v1409, %v1410
      %v1421 = vadd.f32 %v1420, %v1411
      %v1422 = vadd.f32 %v1421, %v1412
      %v1423 = vadd.f32 %v1422, %v1413
      %1424 = vadd.xlane.f32.xlu0 %v1423
      %v1425 = vpop.xlane.xlu0 %1424
      %v1426 = vld [vmem:[#allocation3] sm:$0x1]
      %v1428 = vlaneseq
      %v1429 = vshrl.u32 %v1428, 7
      %v1430 = vsub.s32 0, %v1429
      %v1431 = vrot.slane %v1426, %v1430
      %v1433 = vadd.f32 %v1419, %v1431
      %v1434 = vadd.f32 %v1425, %v1431
      %v1435 = vadd.f32 %v1433, %v856
      %v1436 = vadd.f32 %v1434, %v857
      %v1437 = vsel %vm860, %v1435, -inf
      %v1438 = vsel %vm860, %v1436, -inf
      %v1439 = vmax.f32 %v1437, %v1438
      %v1440 = vrot.slane %v1439, 4
      %v1441 = vmax.f32 %v1439, %v1440
      %v1442 = vrot.slane %v1441, 2
      %v1443 = vmax.f32 %v1441, %v1442
      %v1444 = vrot.slane %v1443, 1
      %v1445 = vmax.f32 %v1443, %v1444
      %v1446 = vsub.f32 %v1435, %v1445
      %v1447 = vsub.f32 %v1436, %v1445
      %v1448 = vmul.f32 %v1446, 1.442695
      %v1449 = vpow.pop %v1448
      %v1450 = vmul.f32 %v1447, 1.442695
      %v1451 = vpow.pop %v1450
      %v1452 = vsel %vm860, %v1449, 0.0
      %v1453 = vsel %vm860, %v1451, 0.0
      %v1454 = vadd.f32 %v1452, %v1453
      %v1455 = vrot.slane %v1454, 4
      %v1456 = vadd.f32 %v1454, %v1455
      %v1457 = vrot.slane %v1456, 2
      %v1458 = vadd.f32 %v1456, %v1457
      %v1459 = vrot.slane %v1458, 1
      %v1460 = vadd.f32 %v1458, %v1459
      %v1461 = vrcp.pop %v1460
      %v1462 = vmul.f32 %v1449, %v1461
      %v1463 = vmul.f32 %v1451, %v1461
      %1465 = vset.pattern.permute.xlu0 0
      %1466 = vperm.xlu0 %1465, %v1462
      %v1467 = vpop.permute.xlu0 %1466
      %1470 = vset.pattern.permute.xlu0 0
      %1471 = vperm.xlu0 %1470, %v1463
      %v1472 = vpop.permute.xlu0 %1471
      %v1474 = vmul.f32 %v1375, %v1467
      %v1475 = vmul.f32 %v1376, %v1472
      %v1476 = vadd.f32 %v1474, %v1475
      %v1477 = vrot.slane %v1476, 4
      %v1478 = vadd.f32 %v1476, %v1477
      %v1479 = vrot.slane %v1478, 2
      %v1480 = vadd.f32 %v1478, %v1479
      %v1481 = vrot.slane %v1480, 1
      %v1482 = vadd.f32 %v1480, %v1481
      %1483 = vxpose.xlu0.b32.start [1/16] %v1462, 128
      %1484 = vxpose.xlu0.b32.cont [2/16] %v1463, 128
      %1485 = vxpose.xlu0.b32.cont [3/16] 0.0, 128
      %1486 = vxpose.xlu0.b32.cont [4/16] 0.0, 128
      %1487 = vxpose.xlu0.b32.cont [5/16] 0.0, 128
      %1488 = vxpose.xlu0.b32.cont [6/16] 0.0, 128
      %1489 = vxpose.xlu0.b32.cont [7/16] 0.0, 128
      %1490 = vxpose.xlu0.b32.cont [8/16] 0.0, 128
      %1491 = vxpose.xlu0.b32.cont [9/16] 0.0, 128
      %1492 = vxpose.xlu0.b32.cont [10/16] 0.0, 128
      %1493 = vxpose.xlu0.b32.cont [11/16] 0.0, 128
      %1494 = vxpose.xlu0.b32.cont [12/16] 0.0, 128
      %1495 = vxpose.xlu0.b32.cont [13/16] 0.0, 128
      %1496 = vxpose.xlu0.b32.cont [14/16] 0.0, 128
      %1497 = vxpose.xlu0.b32.cont [15/16] 0.0, 128
      %1498 = vxpose.xlu0.b32.end [16/16] 0.0, 128
      %v1499 = vpop.trf.xlu0
      %v1500 = vpop.trf.xlu0
      %v1501 = vpop.trf.xlu0
      %v1502 = vpop.trf.xlu0
      %v1503 = vpop.trf.xlu0
      %v1504 = vpop.trf.xlu0
      %v1505 = vpop.trf.xlu0
      %v1506 = vpop.trf.xlu0
      %v1507 = vpop.trf.xlu0
      %v1508 = vpop.trf.xlu0
      %v1509 = vpop.trf.xlu0
      %v1510 = vpop.trf.xlu0
      %v1511 = vpop.trf.xlu0
      %v1512 = vpop.trf.xlu0
      %v1513 = vpop.trf.xlu0
      %v1514 = vpop.trf.xlu0
      %vm1515 = vcmask 122880
      %1516 = vst.msk [vmem:[%s675] sm:$0x1] %vm1515, %v1499
      %v1517 = vmul.f32 %v1375, %v1482
      %v1518 = vmul.f32 %v1376, %v1482
      %v1519 = vpack.c.bf16 %v1376, %v1375
      %v1520 = vpack.c.bf16 %v1482, %v1482
      %v1521 = vpack.c.bf16 %v1518, %v1517
      %v1522 = vld [vmem:[%s14] sm:$0xf]
      %v1523 = vld [vmem:[%s14 + $0x4] sm:$0xf]
      %v1524 = vld [vmem:[%s14 + $0x8] sm:$0xf]
      %v1525 = vld [vmem:[%s14 + $0xc] sm:$0xf]
      %v1526 = vld [vmem:[%s14 + $0x10] sm:$0xf]
      %v1527 = vld [vmem:[%s14 + $0x14] sm:$0xf]
      %v1528 = vld [vmem:[%s14 + $0x18] sm:$0xf]
      %v1529 = vld [vmem:[%s14 + $0x1c] sm:$0xf]
      %v1530 = vld [vmem:[%s14 + $0x20] sm:$0xf]
      %v1531 = vld [vmem:[%s14 + $0x24] sm:$0xf]
      %v1532 = vld [vmem:[%s14 + $0x28] sm:$0xf]
      %v1533 = vld [vmem:[%s14 + $0x2c] sm:$0xf]
      %v1534 = vld [vmem:[%s14 + $0x30] sm:$0xf]
      %v1535 = vld [vmem:[%s14 + $0x34] sm:$0xf]
      %v1536 = vld [vmem:[%s14 + $0x38] sm:$0xf]
      %v1537 = vld [vmem:[%s14 + $0x3c] sm:$0xf]
      %v1538 = vld [vmem:[%s14 + $0x40] sm:$0xf]
      %v1539 = vld [vmem:[%s14 + $0x44] sm:$0xf]
      %v1540 = vld [vmem:[%s14 + $0x48] sm:$0xf]
      %v1541 = vld [vmem:[%s14 + $0x4c] sm:$0xf]
      %v1542 = vld [vmem:[%s14 + $0x50] sm:$0xf]
      %v1543 = vld [vmem:[%s14 + $0x54] sm:$0xf]
      %v1544 = vld [vmem:[%s14 + $0x58] sm:$0xf]
      %v1545 = vld [vmem:[%s14 + $0x5c] sm:$0xf]
      %v1546 = vld [vmem:[%s14 + $0x60] sm:$0xf]
      %v1547 = vld [vmem:[%s14 + $0x64] sm:$0xf]
      %v1548 = vld [vmem:[%s14 + $0x68] sm:$0xf]
      %v1549 = vld [vmem:[%s14 + $0x6c] sm:$0xf]
      %v1550 = vld [vmem:[%s14 + $0x70] sm:$0xf]
      %v1551 = vld [vmem:[%s14 + $0x74] sm:$0xf]
      %v1552 = vld [vmem:[%s14 + $0x78] sm:$0xf]
      %v1553 = vld [vmem:[%s14 + $0x7c] sm:$0xf]
      %v1554 = vld [vmem:[%s14 + $0x80] sm:$0xf]
      %v1555 = vld [vmem:[%s14 + $0x84] sm:$0xf]
      %v1556 = vld [vmem:[%s14 + $0x88] sm:$0xf]
      %v1557 = vld [vmem:[%s14 + $0x8c] sm:$0xf]
      %v1558 = vld [vmem:[%s14 + $0x90] sm:$0xf]
      %v1559 = vld [vmem:[%s14 + $0x94] sm:$0xf]
      %v1560 = vld [vmem:[%s14 + $0x98] sm:$0xf]
      %v1561 = vld [vmem:[%s14 + $0x9c] sm:$0xf]
      %v1562 = vld [vmem:[%s14 + $0xa0] sm:$0xf]
      %v1563 = vld [vmem:[%s14 + $0xa4] sm:$0xf]
      %v1564 = vld [vmem:[%s14 + $0xa8] sm:$0xf]
      %v1565 = vld [vmem:[%s14 + $0xac] sm:$0xf]
      %v1566 = vld [vmem:[%s14 + $0xb0] sm:$0xf]
      %v1567 = vld [vmem:[%s14 + $0xb4] sm:$0xf]
      %v1568 = vld [vmem:[%s14 + $0xb8] sm:$0xf]
      %v1569 = vld [vmem:[%s14 + $0xbc] sm:$0xf]
      %v1570 = vld [vmem:[%s14 + $0xc0] sm:$0xf]
      %v1571 = vld [vmem:[%s14 + $0xc4] sm:$0xf]
      %v1572 = vld [vmem:[%s14 + $0xc8] sm:$0xf]
      %v1573 = vld [vmem:[%s14 + $0xcc] sm:$0xf]
      %v1574 = vld [vmem:[%s14 + $0xd0] sm:$0xf]
      %v1575 = vld [vmem:[%s14 + $0xd4] sm:$0xf]
      %v1576 = vld [vmem:[%s14 + $0xd8] sm:$0xf]
      %v1577 = vld [vmem:[%s14 + $0xdc] sm:$0xf]
      %v1578 = vld [vmem:[%s14 + $0xe0] sm:$0xf]
      %v1579 = vld [vmem:[%s14 + $0xe4] sm:$0xf]
      %v1580 = vld [vmem:[%s14 + $0xe8] sm:$0xf]
      %v1581 = vld [vmem:[%s14 + $0xec] sm:$0xf]
      %v1582 = vld [vmem:[%s14 + $0xf0] sm:$0xf]
      %v1583 = vld [vmem:[%s14 + $0xf4] sm:$0xf]
      %v1584 = vld [vmem:[%s14 + $0xf8] sm:$0xf]
      %v1585 = vld [vmem:[%s14 + $0xfc] sm:$0xf]
      %v1586 = vld [vmem:[%s14 + $0x100] sm:$0xf]
      %v1587 = vld [vmem:[%s14 + $0x104] sm:$0xf]
      %v1588 = vld [vmem:[%s14 + $0x108] sm:$0xf]
      %v1589 = vld [vmem:[%s14 + $0x10c] sm:$0xf]
      %v1590 = vld [vmem:[%s14 + $0x110] sm:$0xf]
      %v1591 = vld [vmem:[%s14 + $0x114] sm:$0xf]
      %v1592 = vld [vmem:[%s14 + $0x118] sm:$0xf]
      %v1593 = vld [vmem:[%s14 + $0x11c] sm:$0xf]
      %v1594 = vld [vmem:[%s14 + $0x120] sm:$0xf]
      %v1595 = vld [vmem:[%s14 + $0x124] sm:$0xf]
      %v1596 = vld [vmem:[%s14 + $0x128] sm:$0xf]
      %v1597 = vld [vmem:[%s14 + $0x12c] sm:$0xf]
      %v1598 = vld [vmem:[%s14 + $0x130] sm:$0xf]
      %v1599 = vld [vmem:[%s14 + $0x134] sm:$0xf]
      %v1600 = vld [vmem:[%s14 + $0x138] sm:$0xf]
      %v1601 = vld [vmem:[%s14 + $0x13c] sm:$0xf]
      %v1602 = vld [vmem:[%s14 + $0x140] sm:$0xf]
      %v1603 = vld [vmem:[%s14 + $0x144] sm:$0xf]
      %v1604 = vld [vmem:[%s14 + $0x148] sm:$0xf]
      %v1605 = vld [vmem:[%s14 + $0x14c] sm:$0xf]
      %v1606 = vld [vmem:[%s14 + $0x150] sm:$0xf]
      %v1607 = vld [vmem:[%s14 + $0x154] sm:$0xf]
      %v1608 = vld [vmem:[%s14 + $0x158] sm:$0xf]
      %v1609 = vld [vmem:[%s14 + $0x15c] sm:$0xf]
      %v1610 = vld [vmem:[%s14 + $0x160] sm:$0xf]
      %v1611 = vld [vmem:[%s14 + $0x164] sm:$0xf]
      %v1612 = vld [vmem:[%s14 + $0x168] sm:$0xf]
      %v1613 = vld [vmem:[%s14 + $0x16c] sm:$0xf]
      %v1614 = vld [vmem:[%s14 + $0x170] sm:$0xf]
      %v1615 = vld [vmem:[%s14 + $0x174] sm:$0xf]
      %v1616 = vld [vmem:[%s14 + $0x178] sm:$0xf]
      %v1617 = vld [vmem:[%s14 + $0x17c] sm:$0xf]
      %v1618 = vld [vmem:[%s14 + $0x180] sm:$0xf]
      %v1619 = vld [vmem:[%s14 + $0x184] sm:$0xf]
      %v1620 = vld [vmem:[%s14 + $0x188] sm:$0xf]
      %v1621 = vld [vmem:[%s14 + $0x18c] sm:$0xf]
      %v1622 = vld [vmem:[%s14 + $0x190] sm:$0xf]
      %v1623 = vld [vmem:[%s14 + $0x194] sm:$0xf]
      %v1624 = vld [vmem:[%s14 + $0x198] sm:$0xf]
      %v1625 = vld [vmem:[%s14 + $0x19c] sm:$0xf]
      %v1626 = vld [vmem:[%s14 + $0x1a0] sm:$0xf]
      %v1627 = vld [vmem:[%s14 + $0x1a4] sm:$0xf]
      %v1628 = vld [vmem:[%s14 + $0x1a8] sm:$0xf]
      %v1629 = vld [vmem:[%s14 + $0x1ac] sm:$0xf]
      %v1630 = vld [vmem:[%s14 + $0x1b0] sm:$0xf]
      %v1631 = vld [vmem:[%s14 + $0x1b4] sm:$0xf]
      %v1632 = vld [vmem:[%s14 + $0x1b8] sm:$0xf]
      %v1633 = vld [vmem:[%s14 + $0x1bc] sm:$0xf]
      %v1634 = vld [vmem:[%s15] sm:$0x1]
      %v1636 = vlaneseq
      %v1637 = vshrl.u32 %v1636, 7
      %v1638 = vsub.s32 0, %v1637
      %v1639 = vrot.slane %v1634, %v1638
      %v1753 = vunpack.c.l.b16 %v1522
      %v1754 = vunpack.c.l.b16 %v1523
      %v1755 = vunpack.c.l.b16 %v1524
      %v1756 = vunpack.c.l.b16 %v1525
      %v1757 = vunpack.c.l.b16 %v1526
      %v1758 = vunpack.c.l.b16 %v1527
      %v1759 = vunpack.c.l.b16 %v1528
      %v1760 = vunpack.c.l.b16 %v1529
      %v1761 = vunpack.c.l.b16 %v1530
      %v1762 = vunpack.c.l.b16 %v1531
      %v1763 = vunpack.c.l.b16 %v1532
      %v1764 = vunpack.c.l.b16 %v1533
      %v1765 = vunpack.c.l.b16 %v1534
      %v1766 = vunpack.c.l.b16 %v1535
      %v1767 = vunpack.c.l.b16 %v1536
      %v1768 = vunpack.c.l.b16 %v1537
      %v1769 = vunpack.c.l.b16 %v1538
      %v1770 = vunpack.c.l.b16 %v1539
      %v1771 = vunpack.c.l.b16 %v1540
      %v1772 = vunpack.c.l.b16 %v1541
      %v1773 = vunpack.c.l.b16 %v1542
      %v1774 = vunpack.c.l.b16 %v1543
      %v1775 = vunpack.c.l.b16 %v1544
      %v1776 = vunpack.c.l.b16 %v1545
      %v1777 = vunpack.c.l.b16 %v1546
      %v1778 = vunpack.c.l.b16 %v1547
      %v1779 = vunpack.c.l.b16 %v1548
      %v1780 = vunpack.c.l.b16 %v1549
      %v1781 = vunpack.c.l.b16 %v1550
      %v1782 = vunpack.c.l.b16 %v1551
      %v1783 = vunpack.c.l.b16 %v1552
      %v1784 = vunpack.c.l.b16 %v1553
      %v1785 = vunpack.c.l.b16 %v1554
      %v1786 = vunpack.c.l.b16 %v1555
      %v1787 = vunpack.c.l.b16 %v1556
      %v1788 = vunpack.c.l.b16 %v1557
      %v1789 = vunpack.c.l.b16 %v1558
      %v1790 = vunpack.c.l.b16 %v1559
      %v1791 = vunpack.c.l.b16 %v1560
      %v1792 = vunpack.c.l.b16 %v1561
      %v1793 = vunpack.c.l.b16 %v1562
      %v1794 = vunpack.c.l.b16 %v1563
      %v1795 = vunpack.c.l.b16 %v1564
      %v1796 = vunpack.c.l.b16 %v1565
      %v1797 = vunpack.c.l.b16 %v1566
      %v1798 = vunpack.c.l.b16 %v1567
      %v1799 = vunpack.c.l.b16 %v1568
      %v1800 = vunpack.c.l.b16 %v1569
      %v1801 = vunpack.c.l.b16 %v1570
      %v1802 = vunpack.c.l.b16 %v1571
      %v1803 = vunpack.c.l.b16 %v1572
      %v1804 = vunpack.c.l.b16 %v1573
      %v1805 = vunpack.c.l.b16 %v1574
      %v1806 = vunpack.c.l.b16 %v1575
      %v1807 = vunpack.c.l.b16 %v1576
      %v1808 = vunpack.c.l.b16 %v1577
      %v1809 = vunpack.c.l.b16 %v1578
      %v1810 = vunpack.c.l.b16 %v1579
      %v1811 = vunpack.c.l.b16 %v1580
      %v1812 = vunpack.c.l.b16 %v1581
      %v1813 = vunpack.c.l.b16 %v1582
      %v1814 = vunpack.c.l.b16 %v1583
      %v1815 = vunpack.c.l.b16 %v1584
      %v1816 = vunpack.c.l.b16 %v1585
      %v1817 = vunpack.c.l.b16 %v1586
      %v1818 = vunpack.c.l.b16 %v1587
      %v1819 = vunpack.c.l.b16 %v1588
      %v1820 = vunpack.c.l.b16 %v1589
      %v1821 = vunpack.c.l.b16 %v1590
      %v1822 = vunpack.c.l.b16 %v1591
      %v1823 = vunpack.c.l.b16 %v1592
      %v1824 = vunpack.c.l.b16 %v1593
      %v1825 = vunpack.c.l.b16 %v1594
      %v1826 = vunpack.c.l.b16 %v1595
      %v1827 = vunpack.c.l.b16 %v1596
      %v1828 = vunpack.c.l.b16 %v1597
      %v1829 = vunpack.c.l.b16 %v1598
      %v1830 = vunpack.c.l.b16 %v1599
      %v1831 = vunpack.c.l.b16 %v1600
      %v1832 = vunpack.c.l.b16 %v1601
      %v1833 = vunpack.c.l.b16 %v1602
      %v1834 = vunpack.c.l.b16 %v1603
      %v1835 = vunpack.c.l.b16 %v1604
      %v1836 = vunpack.c.l.b16 %v1605
      %v1837 = vunpack.c.l.b16 %v1606
      %v1838 = vunpack.c.l.b16 %v1607
      %v1839 = vunpack.c.l.b16 %v1608
      %v1840 = vunpack.c.l.b16 %v1609
      %v1841 = vunpack.c.l.b16 %v1610
      %v1842 = vunpack.c.l.b16 %v1611
      %v1843 = vunpack.c.l.b16 %v1612
      %v1844 = vunpack.c.l.b16 %v1613
      %v1845 = vunpack.c.l.b16 %v1614
      %v1846 = vunpack.c.l.b16 %v1615
      %v1847 = vunpack.c.l.b16 %v1616
      %v1848 = vunpack.c.l.b16 %v1617
      %v1849 = vunpack.c.l.b16 %v1618
      %v1850 = vunpack.c.l.b16 %v1619
      %v1851 = vunpack.c.l.b16 %v1620
      %v1852 = vunpack.c.l.b16 %v1621
      %v1853 = vunpack.c.l.b16 %v1622
      %v1854 = vunpack.c.l.b16 %v1623
      %v1855 = vunpack.c.l.b16 %v1624
      %v1856 = vunpack.c.l.b16 %v1625
      %v1857 = vunpack.c.l.b16 %v1626
      %v1858 = vunpack.c.l.b16 %v1627
      %v1859 = vunpack.c.l.b16 %v1628
      %v1860 = vunpack.c.l.b16 %v1629
      %v1861 = vunpack.c.l.b16 %v1630
      %v1862 = vunpack.c.l.b16 %v1631
      %v1863 = vunpack.c.l.b16 %v1632
      %v1864 = vunpack.c.l.b16 %v1633
      %v1865 = vpack.c.b16 %v1754, %v1753
      %v1866 = vpack.c.b16 %v1756, %v1755
      %v1867 = vpack.c.b16 %v1758, %v1757
      %v1868 = vpack.c.b16 %v1760, %v1759
      %v1869 = vpack.c.b16 %v1762, %v1761
      %v1870 = vpack.c.b16 %v1764, %v1763
      %v1871 = vpack.c.b16 %v1766, %v1765
      %v1872 = vpack.c.b16 %v1768, %v1767
      %v1873 = vpack.c.b16 %v1770, %v1769
      %v1874 = vpack.c.b16 %v1772, %v1771
      %v1875 = vpack.c.b16 %v1774, %v1773
      %v1876 = vpack.c.b16 %v1776, %v1775
      %v1877 = vpack.c.b16 %v1778, %v1777
      %v1878 = vpack.c.b16 %v1780, %v1779
      %v1879 = vpack.c.b16 %v1782, %v1781
      %v1880 = vpack.c.b16 %v1784, %v1783
      %v1881 = vpack.c.b16 %v1786, %v1785
      %v1882 = vpack.c.b16 %v1788, %v1787
      %v1883 = vpack.c.b16 %v1790, %v1789
      %v1884 = vpack.c.b16 %v1792, %v1791
      %v1885 = vpack.c.b16 %v1794, %v1793
      %v1886 = vpack.c.b16 %v1796, %v1795
      %v1887 = vpack.c.b16 %v1798, %v1797
      %v1888 = vpack.c.b16 %v1800, %v1799
      %v1889 = vpack.c.b16 %v1802, %v1801
      %v1890 = vpack.c.b16 %v1804, %v1803
      %v1891 = vpack.c.b16 %v1806, %v1805
      %v1892 = vpack.c.b16 %v1808, %v1807
      %v1893 = vpack.c.b16 %v1810, %v1809
      %v1894 = vpack.c.b16 %v1812, %v1811
      %v1895 = vpack.c.b16 %v1814, %v1813
      %v1896 = vpack.c.b16 %v1816, %v1815
      %v1897 = vpack.c.b16 %v1818, %v1817
      %v1898 = vpack.c.b16 %v1820, %v1819
      %v1899 = vpack.c.b16 %v1822, %v1821
      %v1900 = vpack.c.b16 %v1824, %v1823
      %v1901 = vpack.c.b16 %v1826, %v1825
      %v1902 = vpack.c.b16 %v1828, %v1827
      %v1903 = vpack.c.b16 %v1830, %v1829
      %v1904 = vpack.c.b16 %v1832, %v1831
      %v1905 = vpack.c.b16 %v1834, %v1833
      %v1906 = vpack.c.b16 %v1836, %v1835
      %v1907 = vpack.c.b16 %v1838, %v1837
      %v1908 = vpack.c.b16 %v1840, %v1839
      %v1909 = vpack.c.b16 %v1842, %v1841
      %v1910 = vpack.c.b16 %v1844, %v1843
      %v1911 = vpack.c.b16 %v1846, %v1845
      %v1912 = vpack.c.b16 %v1848, %v1847
      %v1913 = vpack.c.b16 %v1850, %v1849
      %v1914 = vpack.c.b16 %v1852, %v1851
      %v1915 = vpack.c.b16 %v1854, %v1853
      %v1916 = vpack.c.b16 %v1856, %v1855
      %v1917 = vpack.c.b16 %v1858, %v1857
      %v1918 = vpack.c.b16 %v1860, %v1859
      %v1919 = vpack.c.b16 %v1862, %v1861
      %v1920 = vpack.c.b16 %v1864, %v1863
      %1977 = vmatprep.subr.bf16.mxu0 0
      %1978 = vmatpush1.bf16.msra.mxu0 %v1872
      %1979 = vmatprep.subr.bf16.mxu0 0
      %1980 = vmatpush1.bf16.msra.mxu0 %v1871
      %1981 = vmatprep.subr.bf16.mxu0 0
      %1982 = vmatpush1.bf16.msra.mxu0 %v1870
      %1983 = vmatprep.subr.bf16.mxu0 0
      %1984 = vmatpush1.bf16.msra.mxu0 %v1869
      %1985 = vmatprep.subr.bf16.mxu0 0
      %1986 = vmatpush1.bf16.msra.mxu0 %v1868
      %1987 = vmatprep.subr.bf16.mxu0 0
      %1988 = vmatpush1.bf16.msra.mxu0 %v1867
      %1989 = vmatprep.subr.bf16.mxu0 0
      %1990 = vmatpush1.bf16.msra.mxu0 %v1866
      %1991 = vmatprep.subr.bf16.mxu0 0
      %1992 = vmatpush1.bf16.msra.mxu0 %v1865
      %1993 = vmatprep.subr.bf16.mxu0 0
      %1994 = vmatpush2.bf16.msra.mxu0 %v1880
      %1995 = vmatprep.subr.bf16.mxu0 0
      %1996 = vmatpush2.bf16.msra.mxu0 %v1879
      %1997 = vmatprep.subr.bf16.mxu0 0
      %1998 = vmatpush2.bf16.msra.mxu0 %v1878
      %1999 = vmatprep.subr.bf16.mxu0 0
      %2000 = vmatpush2.bf16.msra.mxu0 %v1877
      %2001 = vmatprep.subr.bf16.mxu0 0
      %2002 = vmatpush2.bf16.msra.mxu0 %v1876
      %2003 = vmatprep.subr.bf16.mxu0 0
      %2004 = vmatpush2.bf16.msra.mxu0 %v1875
      %2005 = vmatprep.subr.bf16.mxu0 0
      %2006 = vmatpush2.bf16.msra.mxu0 %v1874
      %2007 = vmatprep.subr.bf16.mxu0 0
      %2008 = vmatpush2.bf16.msra.mxu0 %v1873
      %2009 = vmatprep.mubr.bf16.mxu0 %v912
      %2010 = vmatmul.mubr.bf16.gmra.mxu0 %v911
      %v2011 = vpop.f32.mrf.mxu0
      %v2012 = vadd.f32 %v1639, %v2011
      %v2013 = vpop.f32.mrf.mxu0
      %v2014 = vpop.f32.mrf.mxu0
      %v2015 = vadd.f32 %v1639, %v2014
      %v2016 = vpop.f32.mrf.mxu0
      %2017 = vdwg.mxu0
      %2018 = vmatprep.subr.bf16.mxu0 0
      %2019 = vmatpush1.bf16.msra.mxu0 %v1888
      %2020 = vmatprep.subr.bf16.mxu0 0
      %2021 = vmatpush1.bf16.msra.mxu0 %v1887
      %2022 = vmatprep.subr.bf16.mxu0 0
      %2023 = vmatpush1.bf16.msra.mxu0 %v1886
      %2024 = vmatprep.subr.bf16.mxu0 0
      %2025 = vmatpush1.bf16.msra.mxu0 %v1885
      %2026 = vmatprep.subr.bf16.mxu0 0
      %2027 = vmatpush1.bf16.msra.mxu0 %v1884
      %2028 = vmatprep.subr.bf16.mxu0 0
      %2029 = vmatpush1.bf16.msra.mxu0 %v1883
      %2030 = vmatprep.subr.bf16.mxu0 0
      %2031 = vmatpush1.bf16.msra.mxu0 %v1882
      %2032 = vmatprep.subr.bf16.mxu0 0
      %2033 = vmatpush1.bf16.msra.mxu0 %v1881
      %2034 = vmatprep.subr.bf16.mxu0 0
      %2035 = vmatpush2.bf16.msra.mxu0 %v1896
      %2036 = vmatprep.subr.bf16.mxu0 0
      %2037 = vmatpush2.bf16.msra.mxu0 %v1895
      %2038 = vmatprep.subr.bf16.mxu0 0
      %2039 = vmatpush2.bf16.msra.mxu0 %v1894
      %2040 = vmatprep.subr.bf16.mxu0 0
      %2041 = vmatpush2.bf16.msra.mxu0 %v1893
      %2042 = vmatprep.subr.bf16.mxu0 0
      %2043 = vmatpush2.bf16.msra.mxu0 %v1892
      %2044 = vmatprep.subr.bf16.mxu0 0
      %2045 = vmatpush2.bf16.msra.mxu0 %v1891
      %2046 = vmatprep.subr.bf16.mxu0 0
      %2047 = vmatpush2.bf16.msra.mxu0 %v1890
      %2048 = vmatprep.subr.bf16.mxu0 0
      %2049 = vmatpush2.bf16.msra.mxu0 %v1889
      %2050 = vmatprep.mubr.bf16.mxu0 %v914
      %2051 = vmatmul.mubr.bf16.gmra.mxu0 %v913
      %v2052 = vpop.f32.mrf.mxu0
      %v2053 = vadd.f32 %v2012, %v2052
      %v2054 = vpop.f32.mrf.mxu0
      %v2055 = vpop.f32.mrf.mxu0
      %v2056 = vadd.f32 %v2015, %v2055
      %v2057 = vpop.f32.mrf.mxu0
      %2058 = vdwg.mxu0
      %2059 = vmatprep.subr.bf16.mxu0 0
      %2060 = vmatpush1.bf16.msra.mxu0 %v1904
      %2061 = vmatprep.subr.bf16.mxu0 0
      %2062 = vmatpush1.bf16.msra.mxu0 %v1903
      %2063 = vmatprep.subr.bf16.mxu0 0
      %2064 = vmatpush1.bf16.msra.mxu0 %v1902
      %2065 = vmatprep.subr.bf16.mxu0 0
      %2066 = vmatpush1.bf16.msra.mxu0 %v1901
      %2067 = vmatprep.subr.bf16.mxu0 0
      %2068 = vmatpush1.bf16.msra.mxu0 %v1900
      %2069 = vmatprep.subr.bf16.mxu0 0
      %2070 = vmatpush1.bf16.msra.mxu0 %v1899
      %2071 = vmatprep.subr.bf16.mxu0 0
      %2072 = vmatpush1.bf16.msra.mxu0 %v1898
      %2073 = vmatprep.subr.bf16.mxu0 0
      %2074 = vmatpush1.bf16.msra.mxu0 %v1897
      %2075 = vmatprep.subr.bf16.mxu0 0
      %2076 = vmatpush2.bf16.msra.mxu0 %v1912
      %2077 = vmatprep.subr.bf16.mxu0 0
      %2078 = vmatpush2.bf16.msra.mxu0 %v1911
      %2079 = vmatprep.subr.bf16.mxu0 0
      %2080 = vmatpush2.bf16.msra.mxu0 %v1910
      %2081 = vmatprep.subr.bf16.mxu0 0
      %2082 = vmatpush2.bf16.msra.mxu0 %v1909
      %2083 = vmatprep.subr.bf16.mxu0 0
      %2084 = vmatpush2.bf16.msra.mxu0 %v1908
      %2085 = vmatprep.subr.bf16.mxu0 0
      %2086 = vmatpush2.bf16.msra.mxu0 %v1907
      %2087 = vmatprep.subr.bf16.mxu0 0
      %2088 = vmatpush2.bf16.msra.mxu0 %v1906
      %2089 = vmatprep.subr.bf16.mxu0 0
      %2090 = vmatpush2.bf16.msra.mxu0 %v1905
      %2091 = vmatprep.mubr.bf16.mxu0 %v1520
      %2092 = vmatmul.mubr.bf16.gmra.mxu0 %v1519
      %v2093 = vpop.f32.mrf.mxu0
      %v2094 = vadd.f32 %v2053, %v2093
      %v2095 = vpop.f32.mrf.mxu0
      %v2096 = vpop.f32.mrf.mxu0
      %v2097 = vadd.f32 %v2056, %v2096
      %v2098 = vpop.f32.mrf.mxu0
      %2099 = vdwg.mxu0
      %2100 = vmatprep.subr.bf16.mxu0 0
      %2101 = vmatpush1.bf16.msra.mxu0 %v1920
      %2102 = vmatprep.subr.bf16.mxu0 0
      %2103 = vmatpush1.bf16.msra.mxu0 %v1919
      %2104 = vmatprep.subr.bf16.mxu0 0
      %2105 = vmatpush1.bf16.msra.mxu0 %v1918
      %2106 = vmatprep.subr.bf16.mxu0 0
      %2107 = vmatpush1.bf16.msra.mxu0 %v1917
      %2108 = vmatprep.subr.bf16.mxu0 0
      %2109 = vmatpush1.bf16.msra.mxu0 %v1916
      %2110 = vmatprep.subr.bf16.mxu0 0
      %2111 = vmatpush1.bf16.msra.mxu0 %v1915
      %2112 = vmatprep.subr.bf16.mxu0 0
      %2113 = vmatpush1.bf16.msra.mxu0 %v1914
      %2114 = vmatprep.subr.bf16.mxu0 0
      %2115 = vmatpush1.bf16.msra.mxu0 %v1913
      %2116 = vmatprep.subr.bf16.mxu0 0
      %2117 = vmatpush2.bf16.msra.mxu0 0
      %2118 = vmatprep.subr.bf16.mxu0 0
      %2119 = vmatpush2.bf16.msra.mxu0 0
      %2120 = vmatprep.subr.bf16.mxu0 0
      %2121 = vmatpush2.bf16.msra.mxu0 0
      %2122 = vmatprep.subr.bf16.mxu0 0
      %2123 = vmatpush2.bf16.msra.mxu0 0
      %2124 = vmatprep.subr.bf16.mxu0 0
      %2125 = vmatpush2.bf16.msra.mxu0 0
      %2126 = vmatprep.subr.bf16.mxu0 0
      %2127 = vmatpush2.bf16.msra.mxu0 0
      %2128 = vmatprep.subr.bf16.mxu0 0
      %2129 = vmatpush2.bf16.msra.mxu0 0
      %2130 = vmatprep.subr.bf16.mxu0 0
      %2131 = vmatpush2.bf16.msra.mxu0 0
      %2132 = vmatprep.mubr.bf16.mxu0 0
      %2133 = vmatmul.mubr.bf16.gmra.mxu0 %v1521
      %v2134 = vpop.f32.mrf.mxu0
      %v2135 = vadd.f32 %v2094, %v2134
      %v2136 = vpop.f32.mrf.mxu0
      %v2137 = vpop.f32.mrf.mxu0
      %v2138 = vadd.f32 %v2097, %v2137
      %v2139 = vpop.f32.mrf.mxu0
      %2140 = vdwg.mxu0
      %v2141 = vtanh.pop %v2135
      %v2142 = vtanh.pop %v2138
      %v2143 = vld [vmem:[%s16] sm:$0x1f]
      %v2145 = vlaneseq
      %v2146 = vshrl.u32 %v2145, 7
      %v2147 = vsub.s32 0, %v2146
      %v2148 = vrot.slane %v2143, %v2147
      %v2149 = vlaneseq
      %v2150 = vshrl.u32 %v2149, 7
      %v2151 = vsub.s32 1, %v2150
      %v2152 = vrot.slane %v2143, %v2151
      %v2153 = vlaneseq
      %v2154 = vshrl.u32 %v2153, 7
      %v2155 = vsub.s32 2, %v2154
      %v2156 = vrot.slane %v2143, %v2155
      %v2157 = vlaneseq
      %v2158 = vshrl.u32 %v2157, 7
      %v2159 = vsub.s32 3, %v2158
      %v2160 = vrot.slane %v2143, %v2159
      %v2161 = vlaneseq
      %v2162 = vshrl.u32 %v2161, 7
      %v2163 = vsub.s32 4, %v2162
      %v2164 = vrot.slane %v2143, %v2163
      %v2170 = vmul.f32 %v2141, %v2148
      %v2171 = vmul.f32 %v680, %v2152
      %v2172 = vmul.f32 %v848, %v2156
      %v2173 = vmul.f32 %v909, %v2160
      %v2174 = vmul.f32 %v907, %v2164
      %v2175 = vmul.f32 %v2142, %v2148
      %v2176 = vmul.f32 %v681, %v2152
      %v2177 = vmul.f32 %v851, %v2156
      %v2178 = vmul.f32 %v910, %v2160
      %v2179 = vmul.f32 %v908, %v2164
      %v2180 = vadd.f32 %v2170, %v2171
      %v2181 = vadd.f32 %v2180, %v2172
      %v2182 = vadd.f32 %v2181, %v2173
      %v2183 = vadd.f32 %v2182, %v2174
      %2184 = vadd.xlane.f32.xlu0 %v2183
      %v2185 = vpop.xlane.xlu0 %2184
      %v2186 = vadd.f32 %v2175, %v2176
      %v2187 = vadd.f32 %v2186, %v2177
      %v2188 = vadd.f32 %v2187, %v2178
      %v2189 = vadd.f32 %v2188, %v2179
      %2190 = vadd.xlane.f32.xlu0 %v2189
      %v2191 = vpop.xlane.xlu0 %2190
      %v2192 = vld [vmem:[#allocation4] sm:$0x1]
      %v2194 = vlaneseq
      %v2195 = vshrl.u32 %v2194, 7
      %v2196 = vsub.s32 0, %v2195
      %v2197 = vrot.slane %v2192, %v2196
      %v2199 = vadd.f32 %v2185, %v2197
      %v2200 = vadd.f32 %v2191, %v2197
      %v2201 = vadd.f32 %v2199, %v856
      %v2202 = vadd.f32 %v2200, %v857
      %v2203 = vsel %vm860, %v2201, -inf
      %v2204 = vsel %vm860, %v2202, -inf
      %v2205 = vmax.f32 %v2203, %v2204
      %v2206 = vrot.slane %v2205, 4
      %v2207 = vmax.f32 %v2205, %v2206
      %v2208 = vrot.slane %v2207, 2
      %v2209 = vmax.f32 %v2207, %v2208
      %v2210 = vrot.slane %v2209, 1
      %v2211 = vmax.f32 %v2209, %v2210
      %v2212 = vsub.f32 %v2201, %v2211
      %v2213 = vsub.f32 %v2202, %v2211
      %v2214 = vmul.f32 %v2212, 1.442695
      %v2215 = vpow.pop %v2214
      %v2216 = vmul.f32 %v2213, 1.442695
      %v2217 = vpow.pop %v2216
      %v2218 = vsel %vm860, %v2215, 0.0
      %v2219 = vsel %vm860, %v2217, 0.0
      %v2220 = vadd.f32 %v2218, %v2219
      %v2221 = vrot.slane %v2220, 4
      %v2222 = vadd.f32 %v2220, %v2221
      %v2223 = vrot.slane %v2222, 2
      %v2224 = vadd.f32 %v2222, %v2223
      %v2225 = vrot.slane %v2224, 1
      %v2226 = vadd.f32 %v2224, %v2225
      %v2227 = vrcp.pop %v2226
      %v2228 = vmul.f32 %v2215, %v2227
      %v2229 = vmul.f32 %v2217, %v2227
      %2230 = vxpose.xlu0.b32.start [1/16] %v2228, 128
      %2231 = vxpose.xlu0.b32.cont [2/16] %v2229, 128
      %2232 = vxpose.xlu0.b32.cont [3/16] 0.0, 128
      %2233 = vxpose.xlu0.b32.cont [4/16] 0.0, 128
      %2234 = vxpose.xlu0.b32.cont [5/16] 0.0, 128
      %2235 = vxpose.xlu0.b32.cont [6/16] 0.0, 128
      %2236 = vxpose.xlu0.b32.cont [7/16] 0.0, 128
      %2237 = vxpose.xlu0.b32.cont [8/16] 0.0, 128
      %2238 = vxpose.xlu0.b32.cont [9/16] 0.0, 128
      %2239 = vxpose.xlu0.b32.cont [10/16] 0.0, 128
      %2240 = vxpose.xlu0.b32.cont [11/16] 0.0, 128
      %2241 = vxpose.xlu0.b32.cont [12/16] 0.0, 128
      %2242 = vxpose.xlu0.b32.cont [13/16] 0.0, 128
      %2243 = vxpose.xlu0.b32.cont [14/16] 0.0, 128
      %2244 = vxpose.xlu0.b32.cont [15/16] 0.0, 128
      %2245 = vxpose.xlu0.b32.end [16/16] 0.0, 128
      %v2246 = vpop.trf.xlu0
      %v2247 = vpop.trf.xlu0
      %v2248 = vpop.trf.xlu0
      %v2249 = vpop.trf.xlu0
      %v2250 = vpop.trf.xlu0
      %v2251 = vpop.trf.xlu0
      %v2252 = vpop.trf.xlu0
      %v2253 = vpop.trf.xlu0
      %v2254 = vpop.trf.xlu0
      %v2255 = vpop.trf.xlu0
      %v2256 = vpop.trf.xlu0
      %v2257 = vpop.trf.xlu0
      %v2258 = vpop.trf.xlu0
      %v2259 = vpop.trf.xlu0
      %v2260 = vpop.trf.xlu0
      %v2261 = vpop.trf.xlu0
      %2262 = vst.msk [vmem:[%s678] sm:$0x1] %vm1515, %v2246
      %p2263 = scmp.lt.s32.totalorder %s37, 1
      %s2264 = scalar_select %p2263, %s37, 1
      %s2265 = scalar_lea.vmem %s18, %s2264
      %p2266 = scmp.lt.s32.totalorder %s37, 1
      %s2267 = scalar_select %p2266, %s37, 1
      %s2268 = scalar_lea.vmem %s19, %s2267
      // Predicated region
      $region93: #{_lambda_.5} parent=91 // pred_check
        %p2269 = pneg %p458
      $region94: #{_lambda_.5} parent=91 // pred_check_branch
        %2271 = sbr.rel (%p2269) target = $region96
      $region95: #{_lambda_.5} parent=91 // pred_region
        _
      $region96: #{_lambda_.5} parent=91 // pred_fallthru
        _
      // Predicated region
      $region97: #{_lambda_.5} parent=91 // pred_check
        %p2272 = pneg %p484
      $region98: #{_lambda_.5} parent=91 // pred_check_branch
        %2274 = sbr.rel (%p2272) target = $region100
      $region99: #{_lambda_.5} parent=91 // pred_region
        _
      $region100: #{_lambda_.5} parent=91 // pred_fallthru
        _
    $region92: #{_lambda_.5} parent=5 // pred_fallthru
      _
    %p2275 = scmp.le.s32.totalorder 2, %s32
    // Predicated region
    $region101: #{_lambda_.5} parent=5 // pred_check
      %p2276 = pneg %p2275
    $region102: #{_lambda_.5} parent=5 // pred_check_branch
      %2278 = sbr.rel (%p2276) target = $region104
    $region103: #{_lambda_.5} parent=5 // pred_region
      %s2279 = ssub.s32 %s32, 2
      // Predicated region
      $region105: #{_lambda_.5} parent=103 // pred_check
        %p2280 = pneg %p464
      $region106: #{_lambda_.5} parent=103 // pred_check_branch
        %2282 = sbr.rel (%p2280) target = $region108
      $region107: #{_lambda_.5} parent=103 // pred_region
        %p2283 = scmp.lt.s32.totalorder %s38, 1
        %s2284 = scalar_select %p2283, %s38, 1
        %s2285 = scalar_lea.vmem %s18, %s2284
      $region108: #{_lambda_.5} parent=103 // pred_fallthru
        _
      // Predicated region
      $region109: #{_lambda_.5} parent=103 // pred_check
        %p2286 = pneg %p490
      $region110: #{_lambda_.5} parent=103 // pred_check_branch
        %2288 = sbr.rel (%p2286) target = $region112
      $region111: #{_lambda_.5} parent=103 // pred_region
        %p2289 = scmp.lt.s32.totalorder %s38, 1
        %s2290 = scalar_select %p2289, %s38, 1
        %s2291 = scalar_lea.vmem %s19, %s2290
      $region112: #{_lambda_.5} parent=103 // pred_fallthru
        _
    $region104: #{_lambda_.5} parent=5 // pred_fallthru
      _
  $region6: #{_lambda_.5} parent=0 // loop_footer
    %s36 = sadd.s32 1, %s32
  $region7: #{_lambda_.5} parent=0 // loop_footer_branch
    %31 = sbr.rel target = $region3
  $region8: #{_lambda_.5} parent=0 // loop_exit
    _

</llo_original>
